<compile_context>
chip_gen: v6e
topology: v6e:2x2x1
jax: 0.10.0
libtpu: 0.0.40
codegen_flags: <defaults>
</compile_context>

<pallas_src>
import jax
import jax.numpy as jnp
from jax import lax
from jax.experimental import pallas as pl
from jax.experimental.pallas import tpu as pltpu


# ---------------------------------------------------------------------------
# Helpers
# ---------------------------------------------------------------------------
def fold_bn(gamma, beta, mean, var, eps=1e-5):
    scale = gamma / jnp.sqrt(var + eps)
    bias = beta - mean * scale
    return scale, bias


def _pick_row_tile(H, W, Cin, Cmid, G, budget_bytes):
    """Largest divisor TH of H whose per-step VMEM working set fits the budget."""
    def est(th):
        bf, f4 = 2, 4
        x_in = 2 * (th * W * Cin * bf + 2 * W * Cin * bf)       # dbl-buffered x (+2 halo rows)
        out_b = 2 * (th * W * G * bf)                           # dbl-buffered output block
        wts = 2 * (Cin * Cmid * bf + Cmid * 9 * G * bf + 2 * Cin * f4 + Cmid * f4)
        win = (th + 2) * W * Cmid * bf                          # a2 window scratch
        z2 = (th + 2) * W * 9 * G * f4                          # kn2row matmul output
        tmp = th * W * Cmid * (f4 + bf) + 4 * th * W * G * f4   # z1/a2 + epilogue temps
        return x_in + out_b + wts + win + z2 + tmp

    for th in sorted((d for d in range(1, H + 1) if H % d == 0), reverse=True):
        if est(th) <= budget_bytes:
            return th
    return 1


# ---------------------------------------------------------------------------
# Fused kernel: BN1 + ReLU + Conv1x1 + (folded BN2) + ReLU + Conv3x3 (pad=1)
# ---------------------------------------------------------------------------
def _make_kernel(F, TH, RT, W, Cmid, G):
    def kernel(*args):
        in_refs = args[:6 * F + 2]
        o_ref = args[6 * F + 2]        # (1, TH, W, G) bf16
        a2win = args[6 * F + 3]        # (TH+2, W, Cmid) bf16 scratch
        b2_ref = in_refs[6 * F]        # (1, Cmid) f32
        w2_ref = in_refs[6 * F + 1]    # (Cmid, 9G) bf16, kx-major columns

        r = pl.program_id(1)

        def bottleneck(pick_rows, nrows):
            # BN1 + ReLU + 1x1 conv (BN2 scale pre-folded into w1), accumulated
            # over the separate prev_features; BN2 bias + ReLU at the end.
            z = None
            for i in range(F):
                base = 6 * i
                x = pick_rows(in_refs[base], in_refs[base + 1], in_refs[base + 2])
                s1 = in_refs[base + 3][...]          # (1, 1, Ci) f32
                b1 = in_refs[base + 4][...]          # (1, 1, Ci) f32
                w1 = in_refs[base + 5][...]          # (Ci, Cmid) bf16
                a1 = jnp.maximum(x.astype(jnp.float32) * s1 + b1, 0.0)
                a1 = a1.reshape(nrows * W, -1).astype(jnp.bfloat16)
                zi = jnp.dot(a1, w1, preferred_element_type=jnp.float32)
                z = zi if z is None else z + zi
            return jnp.maximum(z + b2_ref[...], 0.0)   # (nrows*W, Cmid) f32

        # ---- bottleneck activation for the TH interior rows of this tile.
        a2_mid = bottleneck(lambda m, t, b: m[0], TH)
        a2win[pl.ds(1, TH)] = a2_mid.astype(jnp.bfloat16).reshape(TH, W, Cmid)

        # ---- 1-row halos.  Clamped blocks are zeroed at the image border,
        #      which implements the 3x3 conv's zero padding in H.
        top_valid = (r > 0).astype(jnp.float32)
        a2_top = bottleneck(lambda m, t, b: t[0], 1) * top_valid
        a2win[pl.ds(0, 1)] = a2_top.astype(jnp.bfloat16).reshape(1, W, Cmid)

        bot_valid = (r < RT - 1).astype(jnp.float32)
        a2_bot = bottleneck(lambda m, t, b: b[0], 1) * bot_valid
        a2win[pl.ds(TH + 1, 1)] = a2_bot.astype(jnp.bfloat16).reshape(1, W, Cmid)

        # ---- 3x3 conv, kn2row: one wide MXU matmul over all 9 taps ...
        z2 = jnp.dot(a2win[...].reshape((TH + 2) * W, Cmid), w2_ref[...],
                     preferred_element_type=jnp.float32)
        z2 = z2.reshape(TH + 2, W, 9 * G)   # columns kx-major: (kx, ky, g)

        # ... then, per kx group, sum the 3 ky taps via free row-offset slices
        # and apply a single W-shift for the whole group (2 shifts total).
        zero_col = jnp.zeros((TH, 1, G), jnp.float32)
        acc = None
        for kx in range(3):
            c0 = kx * 3 * G
            t = (z2[0:TH, :, c0:c0 + G]
                 + z2[1:TH + 1, :, c0 + G:c0 + 2 * G]
                 + z2[2:TH + 2, :, c0 + 2 * G:c0 + 3 * G])     # (TH, W, G)
            if kx == 0:        # output col x reads source col x-1
                t = jnp.concatenate([zero_col, t[:, :W - 1, :]], axis=1)
            elif kx == 2:      # output col x reads source col x+1
                t = jnp.concatenate([t[:, 1:, :], zero_col], axis=1)
            acc = t if acc is None else acc + t
        o_ref[0] = acc.astype(o_ref.dtype)

    return kernel


# ---------------------------------------------------------------------------
# Host-side glue (NHWC-native; no per-layer transposes, no HBM channel concat)
# ---------------------------------------------------------------------------
def dense_layer_forward(features, params, *, vmem_budget_bytes=40 * 1024 * 1024):
    """Fused _DenseLayer forward.  `features`: NHWC array or list of NHWC arrays."""
    if not isinstance(features, (list, tuple)):
        features = [features]
    features = [jnp.asarray(f) for f in features]
    F = len(features)
    N, H, W, _ = features[0].shape
    chans = [int(f.shape[-1]) for f in features]
    Cin = sum(chans)

    s1, b1 = fold_bn(params["bn1_gamma"], params["bn1_beta"],
                     params["bn1_mean"], params["bn1_var"])
    s2, b2 = fold_bn(params["bn2_gamma"], params["bn2_beta"],
                     params["bn2_mean"], params["bn2_var"])

    # conv1 weight: torch (Cmid, Cin, 1, 1) -> (Cin, Cmid); BN2 scale folded in.
    w1 = jnp.transpose(params["conv1_w"][:, :, 0, 0], (1, 0)) * s2[None, :]
    Cmid = w1.shape[1]
    # conv2 weight: torch (G, Cmid, 3, 3) -> (Cmid, kx, ky, G) -> (Cmid, 9*G).
    G = params["conv2_w"].shape[0]
    w2 = jnp.transpose(params["conv2_w"], (1, 3, 2, 0)).reshape(Cmid, 9 * G)
    w2 = w2.astype(jnp.bfloat16)

    TH = _pick_row_tile(H, W, Cin, Cmid, G, vmem_budget_bytes)
    RT = H // TH
    # NOTE(v7x): keep N * RT >= 2 so both TensorCores get work; here N=2 covers it.

    inputs, in_specs = [], []
    off = 0
    for f, Ci in zip(features, chans):
        xb = f.astype(jnp.bfloat16)                       # bf16 activation I/O
        # interior rows of this row tile
        inputs.append(xb)
        in_specs.append(pl.BlockSpec((1, TH, W, Ci), lambda n, r: (n, r, 0, 0)))
        # 1-row top / bottom halo (clamped at the image border; the kernel zeroes
        # the corresponding a2 row there -> exact zero padding in H).
        inputs.append(xb)
        in_specs.append(pl.BlockSpec(
            (1, 1, W, Ci), lambda n, r: (n, jnp.maximum(r * TH - 1, 0), 0, 0)))
        inputs.append(xb)
        in_specs.append(pl.BlockSpec(
            (1, 1, W, Ci), lambda n, r: (n, jnp.minimum(r * TH + TH, H - 1), 0, 0)))
        # per-feature folded BN1 params and the matching w1 row slice
        inputs.append(s1[off:off + Ci].reshape(1, 1, Ci).astype(jnp.float32))
        in_specs.append(pl.BlockSpec((1, 1, Ci), lambda n, r: (0, 0, 0)))
        inputs.append(b1[off:off + Ci].reshape(1, 1, Ci).astype(jnp.float32))
        in_specs.append(pl.BlockSpec((1, 1, Ci), lambda n, r: (0, 0, 0)))
        inputs.append(w1[off:off + Ci].astype(jnp.bfloat16))
        in_specs.append(pl.BlockSpec((Ci, Cmid), lambda n, r: (0, 0)))
        off += Ci
    inputs.append(b2.reshape(1, Cmid).astype(jnp.float32))
    in_specs.append(pl.BlockSpec((1, Cmid), lambda n, r: (0, 0)))
    inputs.append(w2)
    in_specs.append(pl.BlockSpec((Cmid, 9 * G), lambda n, r: (0, 0)))

    flops = 2 * N * H * W * (Cin * Cmid + Cmid * 9 * G)
    bytes_accessed = (N * H * W * (Cin + G) * 2
                      + N * RT * (Cin * Cmid + Cmid * 9 * G) * 2)

    out = pl.pallas_call(
        _make_kernel(F, TH, RT, W, Cmid, G),
        out_shape=jax.ShapeDtypeStruct((N, H, W, G), jnp.bfloat16),
        grid=(N, RT),
        in_specs=in_specs,
        out_specs=pl.BlockSpec((1, TH, W, G), lambda n, r: (n, r, 0, 0)),
        scratch_shapes=[pltpu.VMEM((TH + 2, W, Cmid), jnp.bfloat16)],
        compiler_params=pltpu.CompilerParams(
            dimension_semantics=("parallel", "parallel"),
            vmem_limit_bytes=48 * 1024 * 1024),   # explicit; <= v7x's 64 MiB
        cost_estimate=pl.CostEstimate(flops=flops, transcendentals=0,
                                      bytes_accessed=bytes_accessed),
    )(*inputs)

    # drop_rate dropout: identity at inference.
    return out


# ---------------------------------------------------------------------------
# Pure-JAX f32 reference (PyTorch semantics, NCHW in/out) for correctness check
# ---------------------------------------------------------------------------
def dense_layer_reference(inputs_nchw, params):
    if not isinstance(inputs_nchw, (list, tuple)):
        inputs_nchw = [inputs_nchw]
    x = jnp.concatenate(inputs_nchw, axis=1)
    x = jnp.transpose(x, (0, 2, 3, 1))  # NHWC
    s1, b1 = fold_bn(params["bn1_gamma"], params["bn1_beta"],
                     params["bn1_mean"], params["bn1_var"])
    s2, b2 = fold_bn(params["bn2_gamma"], params["bn2_beta"],
                     params["bn2_mean"], params["bn2_var"])
    a1 = jnp.maximum(x * s1 + b1, 0.0)
    w1 = jnp.transpose(params["conv1_w"], (2, 3, 1, 0))  # HWIO
    z = lax.conv_general_dilated(a1, w1, (1, 1), "VALID",
                                 dimension_numbers=("NHWC", "HWIO", "NHWC"))
    a2 = jnp.maximum(z * s2 + b2, 0.0)
    w2 = jnp.transpose(params["conv2_w"], (2, 3, 1, 0))  # HWIO
    y = lax.conv_general_dilated(a2, w2, (1, 1), ((1, 1), (1, 1)),
                                 dimension_numbers=("NHWC", "HWIO", "NHWC"))
    return jnp.transpose(y, (0, 3, 1, 2))


if __name__ == "__main__":
    # Module hyper-parameters (small but DenseNet-like)
    num_input_features = 32
    growth_rate = 16
    bn_size = 4
    cmid = bn_size * growth_rate  # 64
    N, H, W = 2, 16, 16

    key = jax.random.PRNGKey(0)
    ks = jax.random.split(key, 10)

    # "prev_features" list (two tensors, NCHW, as the PyTorch module receives)
    x1 = jax.random.normal(ks[0], (N, num_input_features // 2, H, W), jnp.float32)
    x2 = jax.random.normal(ks[1], (N, num_input_features // 2, H, W), jnp.float32)
    inputs_nchw = [x1, x2]

    params = {
        # BatchNorm2d(num_input_features)
        "bn1_gamma": 1.0 + 0.1 * jax.random.normal(ks[2], (num_input_features,)),
        "bn1_beta": 0.05 * jax.random.normal(ks[3], (num_input_features,)),
        "bn1_mean": 0.1 * jax.random.normal(ks[4], (num_input_features,)),
        "bn1_var": 1.0 + 0.1 * jax.random.uniform(ks[5], (num_input_features,)),
        # Conv2d(num_input_features, bn_size*growth_rate, 1, bias=False)
        "conv1_w": 0.1 * jax.random.normal(ks[6], (cmid, num_input_features, 1, 1)),
        # BatchNorm2d(bn_size*growth_rate)
        "bn2_gamma": 1.0 + 0.1 * jax.random.normal(ks[7], (cmid,)),
        "bn2_beta": 0.05 * jax.random.normal(ks[8], (cmid,)),
        "bn2_mean": jnp.zeros((cmid,), jnp.float32),
        "bn2_var": jnp.ones((cmid,), jnp.float32),
        # Conv2d(bn_size*growth_rate, growth_rate, 3, padding=1, bias=False)
        "conv2_w": 0.1 * jax.random.normal(ks[9], (growth_rate, cmid, 3, 3)),
    }

    # One-time layout decision: the whole DenseNet should run NHWC so that no
    # per-layer transposes are needed; this demo converts once at the boundary.
    feats_nhwc = [jnp.transpose(t, (0, 2, 3, 1)) for t in inputs_nchw]

    out_nhwc = jax.block_until_ready(dense_layer_forward(feats_nhwc, params))
    assert out_nhwc.shape == (N, H, W, growth_rate), out_nhwc.shape
    assert out_nhwc.dtype == jnp.bfloat16, out_nhwc.dtype

    out_nchw = jnp.transpose(out_nhwc.astype(jnp.float32), (0, 3, 1, 2))
    ref = jax.block_until_ready(dense_layer_reference(inputs_nchw, params))

    err = jnp.abs(out_nchw - ref)
    # bf16 activation I/O + bf16 MXU operands (f32 accumulation) -> bf16-level tol.
    assert float(jnp.mean(err)) < 2.5e-2, float(jnp.mean(err))
    assert jnp.allclose(out_nchw, ref, atol=1e-1, rtol=1e-1), float(jnp.max(err))

    print("KERNEL_OK")
</pallas_src>

<mosaic_0001>
module attributes {stable_mosaic.version = 11 : i64} {
  func.func @kernel(%arg0: i32, %arg1: i32, %arg2: memref<1x16x16x16xbf16, #tpu.memory_space<vmem>>, %arg3: memref<1x1x16x16xbf16, #tpu.memory_space<vmem>>, %arg4: memref<1x1x16x16xbf16, #tpu.memory_space<vmem>>, %arg5: memref<1x1x16xf32, #tpu.memory_space<vmem>>, %arg6: memref<1x1x16xf32, #tpu.memory_space<vmem>>, %arg7: memref<16x64xbf16, #tpu.memory_space<vmem>>, %arg8: memref<1x16x16x16xbf16, #tpu.memory_space<vmem>>, %arg9: memref<1x1x16x16xbf16, #tpu.memory_space<vmem>>, %arg10: memref<1x1x16x16xbf16, #tpu.memory_space<vmem>>, %arg11: memref<1x1x16xf32, #tpu.memory_space<vmem>>, %arg12: memref<1x1x16xf32, #tpu.memory_space<vmem>>, %arg13: memref<16x64xbf16, #tpu.memory_space<vmem>>, %arg14: memref<1x64xf32, #tpu.memory_space<vmem>>, %arg15: memref<64x144xbf16, #tpu.memory_space<vmem>>, %arg16: memref<1x16x16x16xbf16, #tpu.memory_space<vmem>>, %arg17: memref<18x16x64xbf16, #tpu.memory_space<vmem>>) attributes {dimension_semantics = [#tpu.dimension_semantics<parallel>, #tpu.dimension_semantics<parallel>], iteration_bounds = array<i64: 2, 1>, scalar_prefetch = 0 : i64, scratch_operands = 1 : i64, tpu.core_type = #tpu.core_type<tc>, window_params = [{transform_indices = @transform_0, window_bounds = array<i64: 1, 16, 16, 16>}, {transform_indices = @transform_1, window_bounds = array<i64: 1, 1, 16, 16>}, {transform_indices = @transform_2, window_bounds = array<i64: 1, 1, 16, 16>}, {pipeline_mode = #tpu.pipeline_mode<synchronous>, transform_indices = @transform_3, window_bounds = array<i64: 1, 1, 16>}, {pipeline_mode = #tpu.pipeline_mode<synchronous>, transform_indices = @transform_4, window_bounds = array<i64: 1, 1, 16>}, {pipeline_mode = #tpu.pipeline_mode<synchronous>, transform_indices = @transform_5, window_bounds = array<i64: 16, 64>}, {transform_indices = @transform_6, window_bounds = array<i64: 1, 16, 16, 16>}, {transform_indices = @transform_7, window_bounds = array<i64: 1, 1, 16, 16>}, {transform_indices = @transform_8, window_bounds = array<i64: 1, 1, 16, 16>}, {pipeline_mode = #tpu.pipeline_mode<synchronous>, transform_indices = @transform_9, window_bounds = array<i64: 1, 1, 16>}, {pipeline_mode = #tpu.pipeline_mode<synchronous>, transform_indices = @transform_10, window_bounds = array<i64: 1, 1, 16>}, {pipeline_mode = #tpu.pipeline_mode<synchronous>, transform_indices = @transform_11, window_bounds = array<i64: 16, 64>}, {pipeline_mode = #tpu.pipeline_mode<synchronous>, transform_indices = @transform_12, window_bounds = array<i64: 1, 64>}, {pipeline_mode = #tpu.pipeline_mode<synchronous>, transform_indices = @transform_13, window_bounds = array<i64: 64, 144>}, {transform_indices = @transform_14, window_bounds = array<i64: 1, 16, 16, 16>}]} {
    %c0 = arith.constant 0 : index
    %c0_0 = arith.constant 0 : index
    %c0_1 = arith.constant 0 : index
    %c0_2 = arith.constant 0 : index
    %0 = vector.load %arg2[%c0, %c0_0, %c0_1, %c0_2] : memref<1x16x16x16xbf16, #tpu.memory_space<vmem>>, vector<1x16x16x16xbf16>
    %1 = vector.shape_cast %0 : vector<1x16x16x16xbf16> to vector<16x16x16xbf16>
    %c0_3 = arith.constant 0 : index
    %c0_4 = arith.constant 0 : index
    %c0_5 = arith.constant 0 : index
    %2 = vector.load %arg5[%c0_3, %c0_4, %c0_5] : memref<1x1x16xf32, #tpu.memory_space<vmem>>, vector<1x1x16xf32>
    %c0_6 = arith.constant 0 : index
    %c0_7 = arith.constant 0 : index
    %c0_8 = arith.constant 0 : index
    %3 = vector.load %arg6[%c0_6, %c0_7, %c0_8] : memref<1x1x16xf32, #tpu.memory_space<vmem>>, vector<1x1x16xf32>
    %c0_9 = arith.constant 0 : index
    %c0_10 = arith.constant 0 : index
    %4 = vector.load %arg7[%c0_9, %c0_10] : memref<16x64xbf16, #tpu.memory_space<vmem>>, vector<16x64xbf16>
    %5 = arith.extf %1 : vector<16x16x16xbf16> to vector<16x16x16xf32>
    %6 = vector.broadcast %2 : vector<1x1x16xf32> to vector<16x16x16xf32>
    %7 = arith.mulf %5, %6 : vector<16x16x16xf32>
    %8 = vector.broadcast %3 : vector<1x1x16xf32> to vector<16x16x16xf32>
    %9 = arith.addf %7, %8 : vector<16x16x16xf32>
    %cst = arith.constant 0.000000e+00 : f32
    %10 = vector.broadcast %cst : f32 to vector<16x16x16xf32>
    %11 = arith.maximumf %9, %10 : vector<16x16x16xf32>
    %12 = vector.shape_cast %11 : vector<16x16x16xf32> to vector<256x16xf32>
    %13 = arith.truncf %12 : vector<256x16xf32> to vector<256x16xbf16>
    %cst_11 = arith.constant dense<0.000000e+00> : vector<256x64xf32>
    %14 = tpu.matmul %13, %4, %cst_11 {dimension_numbers = #tpu.dot_dimension_numbers<[1], [0], [0], [1], [0, 0, 1, 1], [], []>} : vector<256x16xbf16>, vector<16x64xbf16>, vector<256x64xf32> -> vector<256x64xf32>
    %c0_12 = arith.constant 0 : index
    %c0_13 = arith.constant 0 : index
    %c0_14 = arith.constant 0 : index
    %c0_15 = arith.constant 0 : index
    %15 = vector.load %arg8[%c0_12, %c0_13, %c0_14, %c0_15] : memref<1x16x16x16xbf16, #tpu.memory_space<vmem>>, vector<1x16x16x16xbf16>
    %16 = vector.shape_cast %15 : vector<1x16x16x16xbf16> to vector<16x16x16xbf16>
    %c0_16 = arith.constant 0 : index
    %c0_17 = arith.constant 0 : index
    %c0_18 = arith.constant 0 : index
    %17 = vector.load %arg11[%c0_16, %c0_17, %c0_18] : memref<1x1x16xf32, #tpu.memory_space<vmem>>, vector<1x1x16xf32>
    %c0_19 = arith.constant 0 : index
    %c0_20 = arith.constant 0 : index
    %c0_21 = arith.constant 0 : index
    %18 = vector.load %arg12[%c0_19, %c0_20, %c0_21] : memref<1x1x16xf32, #tpu.memory_space<vmem>>, vector<1x1x16xf32>
    %c0_22 = arith.constant 0 : index
    %c0_23 = arith.constant 0 : index
    %19 = vector.load %arg13[%c0_22, %c0_23] : memref<16x64xbf16, #tpu.memory_space<vmem>>, vector<16x64xbf16>
    %20 = arith.extf %16 : vector<16x16x16xbf16> to vector<16x16x16xf32>
    %21 = vector.broadcast %17 : vector<1x1x16xf32> to vector<16x16x16xf32>
    %22 = arith.mulf %20, %21 : vector<16x16x16xf32>
    %23 = vector.broadcast %18 : vector<1x1x16xf32> to vector<16x16x16xf32>
    %24 = arith.addf %22, %23 : vector<16x16x16xf32>
    %cst_24 = arith.constant 0.000000e+00 : f32
    %25 = vector.broadcast %cst_24 : f32 to vector<16x16x16xf32>
    %26 = arith.maximumf %24, %25 : vector<16x16x16xf32>
    %27 = vector.shape_cast %26 : vector<16x16x16xf32> to vector<256x16xf32>
    %28 = arith.truncf %27 : vector<256x16xf32> to vector<256x16xbf16>
    %cst_25 = arith.constant dense<0.000000e+00> : vector<256x64xf32>
    %29 = tpu.matmul %28, %19, %cst_25 {dimension_numbers = #tpu.dot_dimension_numbers<[1], [0], [0], [1], [0, 0, 1, 1], [], []>} : vector<256x16xbf16>, vector<16x64xbf16>, vector<256x64xf32> -> vector<256x64xf32>
    %30 = arith.addf %14, %29 : vector<256x64xf32>
    %c0_26 = arith.constant 0 : index
    %c0_27 = arith.constant 0 : index
    %31 = vector.load %arg14[%c0_26, %c0_27] : memref<1x64xf32, #tpu.memory_space<vmem>>, vector<1x64xf32>
    %32 = vector.broadcast %31 : vector<1x64xf32> to vector<256x64xf32>
    %33 = arith.addf %30, %32 : vector<256x64xf32>
    %cst_28 = arith.constant 0.000000e+00 : f32
    %34 = vector.broadcast %cst_28 : f32 to vector<256x64xf32>
    %35 = arith.maximumf %33, %34 : vector<256x64xf32>
    %36 = arith.truncf %35 : vector<256x64xf32> to vector<256x64xbf16>
    %37 = vector.shape_cast %36 : vector<256x64xbf16> to vector<16x16x64xbf16>
    %c1 = arith.constant 1 : index
    %c0_29 = arith.constant 0 : index
    %c0_30 = arith.constant 0 : index
    %38 = vector.load %arg17[%c1, %c0_29, %c0_30] : memref<18x16x64xbf16, #tpu.memory_space<vmem>>, vector<16x16x64xbf16>
    tpu.vector_store %arg17[%c1, %c0_29, %c0_30], %37 {strides = array<i32>} : memref<18x16x64xbf16, #tpu.memory_space<vmem>>, vector<16x16x64xbf16>,
    %c0_i32 = arith.constant 0 : i32
    %39 = arith.cmpi sgt, %arg1, %c0_i32 : i32
    %40 = arith.extui %39 : i1 to i32
    %41 = arith.sitofp %40 : i32 to f32
    %c0_31 = arith.constant 0 : index
    %c0_32 = arith.constant 0 : index
    %c0_33 = arith.constant 0 : index
    %c0_34 = arith.constant 0 : index
    %42 = vector.load %arg3[%c0_31, %c0_32, %c0_33, %c0_34] : memref<1x1x16x16xbf16, #tpu.memory_space<vmem>>, vector<1x1x16x16xbf16>
    %43 = vector.shape_cast %42 : vector<1x1x16x16xbf16> to vector<1x16x16xbf16>
    %c0_35 = arith.constant 0 : index
    %c0_36 = arith.constant 0 : index
    %c0_37 = arith.constant 0 : index
    %44 = vector.load %arg5[%c0_35, %c0_36, %c0_37] : memref<1x1x16xf32, #tpu.memory_space<vmem>>, vector<1x1x16xf32>
    %c0_38 = arith.constant 0 : index
    %c0_39 = arith.constant 0 : index
    %c0_40 = arith.constant 0 : index
    %45 = vector.load %arg6[%c0_38, %c0_39, %c0_40] : memref<1x1x16xf32, #tpu.memory_space<vmem>>, vector<1x1x16xf32>
    %c0_41 = arith.constant 0 : index
    %c0_42 = arith.constant 0 : index
    %46 = vector.load %arg7[%c0_41, %c0_42] : memref<16x64xbf16, #tpu.memory_space<vmem>>, vector<16x64xbf16>
    %47 = arith.extf %43 : vector<1x16x16xbf16> to vector<1x16x16xf32>
    %48 = vector.broadcast %44 : vector<1x1x16xf32> to vector<1x16x16xf32>
    %49 = arith.mulf %47, %48 : vector<1x16x16xf32>
    %50 = vector.broadcast %45 : vector<1x1x16xf32> to vector<1x16x16xf32>
    %51 = arith.addf %49, %50 : vector<1x16x16xf32>
    %cst_43 = arith.constant 0.000000e+00 : f32
    %52 = vector.broadcast %cst_43 : f32 to vector<1x16x16xf32>
    %53 = arith.maximumf %51, %52 : vector<1x16x16xf32>
    %54 = vector.shape_cast %53 : vector<1x16x16xf32> to vector<16x16xf32>
    %55 = arith.truncf %54 : vector<16x16xf32> to vector<16x16xbf16>
    %cst_44 = arith.constant dense<0.000000e+00> : vector<16x64xf32>
    %56 = tpu.matmul %55, %46, %cst_44 {dimension_numbers = #tpu.dot_dimension_numbers<[1], [0], [0], [1], [0, 0, 1, 1], [], []>} : vector<16x16xbf16>, vector<16x64xbf16>, vector<16x64xf32> -> vector<16x64xf32>
    %c0_45 = arith.constant 0 : index
    %c0_46 = arith.constant 0 : index
    %c0_47 = arith.constant 0 : index
    %c0_48 = arith.constant 0 : index
    %57 = vector.load %arg9[%c0_45, %c0_46, %c0_47, %c0_48] : memref<1x1x16x16xbf16, #tpu.memory_space<vmem>>, vector<1x1x16x16xbf16>
    %58 = vector.shape_cast %57 : vector<1x1x16x16xbf16> to vector<1x16x16xbf16>
    %c0_49 = arith.constant 0 : index
    %c0_50 = arith.constant 0 : index
    %c0_51 = arith.constant 0 : index
    %59 = vector.load %arg11[%c0_49, %c0_50, %c0_51] : memref<1x1x16xf32, #tpu.memory_space<vmem>>, vector<1x1x16xf32>
    %c0_52 = arith.constant 0 : index
    %c0_53 = arith.constant 0 : index
    %c0_54 = arith.constant 0 : index
    %60 = vector.load %arg12[%c0_52, %c0_53, %c0_54] : memref<1x1x16xf32, #tpu.memory_space<vmem>>, vector<1x1x16xf32>
    %c0_55 = arith.constant 0 : index
    %c0_56 = arith.constant 0 : index
    %61 = vector.load %arg13[%c0_55, %c0_56] : memref<16x64xbf16, #tpu.memory_space<vmem>>, vector<16x64xbf16>
    %62 = arith.extf %58 : vector<1x16x16xbf16> to vector<1x16x16xf32>
    %63 = vector.broadcast %59 : vector<1x1x16xf32> to vector<1x16x16xf32>
    %64 = arith.mulf %62, %63 : vector<1x16x16xf32>
    %65 = vector.broadcast %60 : vector<1x1x16xf32> to vector<1x16x16xf32>
    %66 = arith.addf %64, %65 : vector<1x16x16xf32>
    %cst_57 = arith.constant 0.000000e+00 : f32
    %67 = vector.broadcast %cst_57 : f32 to vector<1x16x16xf32>
    %68 = arith.maximumf %66, %67 : vector<1x16x16xf32>
    %69 = vector.shape_cast %68 : vector<1x16x16xf32> to vector<16x16xf32>
    %70 = arith.truncf %69 : vector<16x16xf32> to vector<16x16xbf16>
    %cst_58 = arith.constant dense<0.000000e+00> : vector<16x64xf32>
    %71 = tpu.matmul %70, %61, %cst_58 {dimension_numbers = #tpu.dot_dimension_numbers<[1], [0], [0], [1], [0, 0, 1, 1], [], []>} : vector<16x16xbf16>, vector<16x64xbf16>, vector<16x64xf32> -> vector<16x64xf32>
    %72 = arith.addf %56, %71 : vector<16x64xf32>
    %c0_59 = arith.constant 0 : index
    %c0_60 = arith.constant 0 : index
    %73 = vector.load %arg14[%c0_59, %c0_60] : memref<1x64xf32, #tpu.memory_space<vmem>>, vector<1x64xf32>
    %74 = vector.broadcast %73 : vector<1x64xf32> to vector<16x64xf32>
    %75 = arith.addf %72, %74 : vector<16x64xf32>
    %cst_61 = arith.constant 0.000000e+00 : f32
    %76 = vector.broadcast %cst_61 : f32 to vector<16x64xf32>
    %77 = arith.maximumf %75, %76 : vector<16x64xf32>
    %78 = vector.broadcast %41 : f32 to vector<16x64xf32>
    %79 = arith.mulf %77, %78 : vector<16x64xf32>
    %80 = arith.truncf %79 : vector<16x64xf32> to vector<16x64xbf16>
    %81 = vector.shape_cast %80 : vector<16x64xbf16> to vector<1x16x64xbf16>
    %c0_62 = arith.constant 0 : index
    %c0_63 = arith.constant 0 : index
    %c0_64 = arith.constant 0 : index
    %82 = vector.load %arg17[%c0_62, %c0_63, %c0_64] : memref<18x16x64xbf16, #tpu.memory_space<vmem>>, vector<1x16x64xbf16>
    tpu.vector_store %arg17[%c0_62, %c0_63, %c0_64], %81 {strides = array<i32>} : memref<18x16x64xbf16, #tpu.memory_space<vmem>>, vector<1x16x64xbf16>,
    %c0_i32_65 = arith.constant 0 : i32
    %83 = arith.cmpi slt, %arg1, %c0_i32_65 : i32
    %84 = arith.extui %83 : i1 to i32
    %85 = arith.sitofp %84 : i32 to f32
    %c0_66 = arith.constant 0 : index
    %c0_67 = arith.constant 0 : index
    %c0_68 = arith.constant 0 : index
    %c0_69 = arith.constant 0 : index
    %86 = vector.load %arg4[%c0_66, %c0_67, %c0_68, %c0_69] : memref<1x1x16x16xbf16, #tpu.memory_space<vmem>>, vector<1x1x16x16xbf16>
    %87 = vector.shape_cast %86 : vector<1x1x16x16xbf16> to vector<1x16x16xbf16>
    %c0_70 = arith.constant 0 : index
    %c0_71 = arith.constant 0 : index
    %c0_72 = arith.constant 0 : index
    %88 = vector.load %arg5[%c0_70, %c0_71, %c0_72] : memref<1x1x16xf32, #tpu.memory_space<vmem>>, vector<1x1x16xf32>
    %c0_73 = arith.constant 0 : index
    %c0_74 = arith.constant 0 : index
    %c0_75 = arith.constant 0 : index
    %89 = vector.load %arg6[%c0_73, %c0_74, %c0_75] : memref<1x1x16xf32, #tpu.memory_space<vmem>>, vector<1x1x16xf32>
    %c0_76 = arith.constant 0 : index
    %c0_77 = arith.constant 0 : index
    %90 = vector.load %arg7[%c0_76, %c0_77] : memref<16x64xbf16, #tpu.memory_space<vmem>>, vector<16x64xbf16>
    %91 = arith.extf %87 : vector<1x16x16xbf16> to vector<1x16x16xf32>
    %92 = vector.broadcast %88 : vector<1x1x16xf32> to vector<1x16x16xf32>
    %93 = arith.mulf %91, %92 : vector<1x16x16xf32>
    %94 = vector.broadcast %89 : vector<1x1x16xf32> to vector<1x16x16xf32>
    %95 = arith.addf %93, %94 : vector<1x16x16xf32>
    %cst_78 = arith.constant 0.000000e+00 : f32
    %96 = vector.broadcast %cst_78 : f32 to vector<1x16x16xf32>
    %97 = arith.maximumf %95, %96 : vector<1x16x16xf32>
    %98 = vector.shape_cast %97 : vector<1x16x16xf32> to vector<16x16xf32>
    %99 = arith.truncf %98 : vector<16x16xf32> to vector<16x16xbf16>
    %cst_79 = arith.constant dense<0.000000e+00> : vector<16x64xf32>
    %100 = tpu.matmul %99, %90, %cst_79 {dimension_numbers = #tpu.dot_dimension_numbers<[1], [0], [0], [1], [0, 0, 1, 1], [], []>} : vector<16x16xbf16>, vector<16x64xbf16>, vector<16x64xf32> -> vector<16x64xf32>
    %c0_80 = arith.constant 0 : index
    %c0_81 = arith.constant 0 : index
    %c0_82 = arith.constant 0 : index
    %c0_83 = arith.constant 0 : index
    %101 = vector.load %arg10[%c0_80, %c0_81, %c0_82, %c0_83] : memref<1x1x16x16xbf16, #tpu.memory_space<vmem>>, vector<1x1x16x16xbf16>
    %102 = vector.shape_cast %101 : vector<1x1x16x16xbf16> to vector<1x16x16xbf16>
    %c0_84 = arith.constant 0 : index
    %c0_85 = arith.constant 0 : index
    %c0_86 = arith.constant 0 : index
    %103 = vector.load %arg11[%c0_84, %c0_85, %c0_86] : memref<1x1x16xf32, #tpu.memory_space<vmem>>, vector<1x1x16xf32>
    %c0_87 = arith.constant 0 : index
    %c0_88 = arith.constant 0 : index
    %c0_89 = arith.constant 0 : index
    %104 = vector.load %arg12[%c0_87, %c0_88, %c0_89] : memref<1x1x16xf32, #tpu.memory_space<vmem>>, vector<1x1x16xf32>
    %c0_90 = arith.constant 0 : index
    %c0_91 = arith.constant 0 : index
    %105 = vector.load %arg13[%c0_90, %c0_91] : memref<16x64xbf16, #tpu.memory_space<vmem>>, vector<16x64xbf16>
    %106 = arith.extf %102 : vector<1x16x16xbf16> to vector<1x16x16xf32>
    %107 = vector.broadcast %103 : vector<1x1x16xf32> to vector<1x16x16xf32>
    %108 = arith.mulf %106, %107 : vector<1x16x16xf32>
    %109 = vector.broadcast %104 : vector<1x1x16xf32> to vector<1x16x16xf32>
    %110 = arith.addf %108, %109 : vector<1x16x16xf32>
    %cst_92 = arith.constant 0.000000e+00 : f32
    %111 = vector.broadcast %cst_92 : f32 to vector<1x16x16xf32>
    %112 = arith.maximumf %110, %111 : vector<1x16x16xf32>
    %113 = vector.shape_cast %112 : vector<1x16x16xf32> to vector<16x16xf32>
    %114 = arith.truncf %113 : vector<16x16xf32> to vector<16x16xbf16>
    %cst_93 = arith.constant dense<0.000000e+00> : vector<16x64xf32>
    %115 = tpu.matmul %114, %105, %cst_93 {dimension_numbers = #tpu.dot_dimension_numbers<[1], [0], [0], [1], [0, 0, 1, 1], [], []>} : vector<16x16xbf16>, vector<16x64xbf16>, vector<16x64xf32> -> vector<16x64xf32>
    %116 = arith.addf %100, %115 : vector<16x64xf32>
    %c0_94 = arith.constant 0 : index
    %c0_95 = arith.constant 0 : index
    %117 = vector.load %arg14[%c0_94, %c0_95] : memref<1x64xf32, #tpu.memory_space<vmem>>, vector<1x64xf32>
    %118 = vector.broadcast %117 : vector<1x64xf32> to vector<16x64xf32>
    %119 = arith.addf %116, %118 : vector<16x64xf32>
    %cst_96 = arith.constant 0.000000e+00 : f32
    %120 = vector.broadcast %cst_96 : f32 to vector<16x64xf32>
    %121 = arith.maximumf %119, %120 : vector<16x64xf32>
    %122 = vector.broadcast %85 : f32 to vector<16x64xf32>
    %123 = arith.mulf %121, %122 : vector<16x64xf32>
    %124 = arith.truncf %123 : vector<16x64xf32> to vector<16x64xbf16>
    %125 = vector.shape_cast %124 : vector<16x64xbf16> to vector<1x16x64xbf16>
    %c17 = arith.constant 17 : index
    %c0_97 = arith.constant 0 : index
    %c0_98 = arith.constant 0 : index
    %126 = vector.load %arg17[%c17, %c0_97, %c0_98] : memref<18x16x64xbf16, #tpu.memory_space<vmem>>, vector<1x16x64xbf16>
    tpu.vector_store %arg17[%c17, %c0_97, %c0_98], %125 {strides = array<i32>} : memref<18x16x64xbf16, #tpu.memory_space<vmem>>, vector<1x16x64xbf16>,
    %c0_99 = arith.constant 0 : index
    %c0_100 = arith.constant 0 : index
    %c0_101 = arith.constant 0 : index
    %127 = vector.load %arg17[%c0_99, %c0_100, %c0_101] : memref<18x16x64xbf16, #tpu.memory_space<vmem>>, vector<18x16x64xbf16>
    %128 = vector.shape_cast %127 : vector<18x16x64xbf16> to vector<288x64xbf16>
    %c0_102 = arith.constant 0 : index
    %c0_103 = arith.constant 0 : index
    %129 = vector.load %arg15[%c0_102, %c0_103] : memref<64x144xbf16, #tpu.memory_space<vmem>>, vector<64x144xbf16>
    %cst_104 = arith.constant dense<0.000000e+00> : vector<288x144xf32>
    %130 = tpu.matmul %128, %129, %cst_104 {dimension_numbers = #tpu.dot_dimension_numbers<[1], [0], [0], [1], [0, 0, 1, 1], [], []>} : vector<288x64xbf16>, vector<64x144xbf16>, vector<288x144xf32> -> vector<288x144xf32>
    %131 = vector.shape_cast %130 : vector<288x144xf32> to vector<18x16x144xf32>
    %cst_105 = arith.constant 0.000000e+00 : f32
    %132 = vector.broadcast %cst_105 : f32 to vector<16x1x16xf32>
    %133 = vector.extract_strided_slice %131 {offsets = [0, 0, 0], sizes = [16, 16, 16], strides = [1, 1, 1]} : vector<18x16x144xf32> to vector<16x16x16xf32>
    %134 = vector.extract_strided_slice %131 {offsets = [1, 0, 16], sizes = [16, 16, 16], strides = [1, 1, 1]} : vector<18x16x144xf32> to vector<16x16x16xf32>
    %135 = arith.addf %133, %134 : vector<16x16x16xf32>
    %136 = vector.extract_strided_slice %131 {offsets = [2, 0, 32], sizes = [16, 16, 16], strides = [1, 1, 1]} : vector<18x16x144xf32> to vector<16x16x16xf32>
    %137 = arith.addf %135, %136 : vector<16x16x16xf32>
    %138 = vector.extract_strided_slice %137 {offsets = [0, 0, 0], sizes = [16, 15, 16], strides = [1, 1, 1]} : vector<16x16x16xf32> to vector<16x15x16xf32>
    %139 = tpu.concatenate %132, %138 in 1 : vector<16x1x16xf32>, vector<16x15x16xf32> -> vector<16x16x16xf32>
    %140 = vector.extract_strided_slice %131 {offsets = [0, 0, 48], sizes = [16, 16, 16], strides = [1, 1, 1]} : vector<18x16x144xf32> to vector<16x16x16xf32>
    %141 = vector.extract_strided_slice %131 {offsets = [1, 0, 64], sizes = [16, 16, 16], strides = [1, 1, 1]} : vector<18x16x144xf32> to vector<16x16x16xf32>
    %142 = arith.addf %140, %141 : vector<16x16x16xf32>
    %143 = vector.extract_strided_slice %131 {offsets = [2, 0, 80], sizes = [16, 16, 16], strides = [1, 1, 1]} : vector<18x16x144xf32> to vector<16x16x16xf32>
    %144 = arith.addf %142, %143 : vector<16x16x16xf32>
    %145 = arith.addf %139, %144 : vector<16x16x16xf32>
    %146 = vector.extract_strided_slice %131 {offsets = [0, 0, 96], sizes = [16, 16, 16], strides = [1, 1, 1]} : vector<18x16x144xf32> to vector<16x16x16xf32>
    %147 = vector.extract_strided_slice %131 {offsets = [1, 0, 112], sizes = [16, 16, 16], strides = [1, 1, 1]} : vector<18x16x144xf32> to vector<16x16x16xf32>
    %148 = arith.addf %146, %147 : vector<16x16x16xf32>
    %149 = vector.extract_strided_slice %131 {offsets = [2, 0, 128], sizes = [16, 16, 16], strides = [1, 1, 1]} : vector<18x16x144xf32> to vector<16x16x16xf32>
    %150 = arith.addf %148, %149 : vector<16x16x16xf32>
    %151 = vector.extract_strided_slice %150 {offsets = [0, 1, 0], sizes = [16, 15, 16], strides = [1, 1, 1]} : vector<16x16x16xf32> to vector<16x15x16xf32>
    %152 = tpu.concatenate %151, %132 in 1 : vector<16x15x16xf32>, vector<16x1x16xf32> -> vector<16x16x16xf32>
    %153 = arith.addf %145, %152 : vector<16x16x16xf32>
    %154 = arith.truncf %153 : vector<16x16x16xf32> to vector<16x16x16xbf16>
    %c0_106 = arith.constant 0 : index
    %c0_107 = arith.constant 0 : index
    %c0_108 = arith.constant 0 : index
    %c0_109 = arith.constant 0 : index
    %155 = vector.load %arg16[%c0_106, %c0_107, %c0_108, %c0_109] : memref<1x16x16x16xbf16, #tpu.memory_space<vmem>>, vector<1x16x16x16xbf16>
    %156 = vector.shape_cast %155 : vector<1x16x16x16xbf16> to vector<16x16x16xbf16>
    %157 = vector.shape_cast %154 : vector<16x16x16xbf16> to vector<1x16x16x16xbf16>
    tpu.vector_store %arg16[%c0_106, %c0_107, %c0_108, %c0_109], %157 {strides = array<i32>} : memref<1x16x16x16xbf16, #tpu.memory_space<vmem>>, vector<1x16x16x16xbf16>,
    return
  }
  func.func @transform_0(%arg0: i32, %arg1: i32) -> (i32, i32, i32, i32) {
    %c0_i32 = arith.constant 0 : i32
    %c0_i32_0 = arith.constant 0 : i32
    %c0_i32_1 = arith.constant 0 : i32
    return %arg0, %arg1, %c0_i32, %c0_i32_0 : i32, i32, i32, i32
  }
  func.func @transform_1(%arg0: i32, %arg1: i32) -> (i32, i32, i32, i32) {
    %c16_i32 = arith.constant 16 : i32
    %0 = arith.muli %arg1, %c16_i32 : i32
    %c1_i32 = arith.constant 1 : i32
    %1 = arith.subi %0, %c1_i32 : i32
    %c0_i32 = arith.constant 0 : i32
    %2 = arith.maxsi %1, %c0_i32 : i32
    %c0_i32_0 = arith.constant 0 : i32
    %c0_i32_1 = arith.constant 0 : i32
    %c0_i32_2 = arith.constant 0 : i32
    return %arg0, %2, %c0_i32_0, %c0_i32_1 : i32, i32, i32, i32
  }
  func.func @transform_2(%arg0: i32, %arg1: i32) -> (i32, i32, i32, i32) {
    %c16_i32 = arith.constant 16 : i32
    %0 = arith.muli %arg1, %c16_i32 : i32
    %c16_i32_0 = arith.constant 16 : i32
    %1 = arith.addi %0, %c16_i32_0 : i32
    %c15_i32 = arith.constant 15 : i32
    %2 = arith.minsi %1, %c15_i32 : i32
    %c0_i32 = arith.constant 0 : i32
    %c0_i32_1 = arith.constant 0 : i32
    %c0_i32_2 = arith.constant 0 : i32
    return %arg0, %2, %c0_i32, %c0_i32_1 : i32, i32, i32, i32
  }
  func.func @transform_3(%arg0: i32, %arg1: i32) -> (i32, i32, i32) {
    %c0_i32 = arith.constant 0 : i32
    %c0_i32_0 = arith.constant 0 : i32
    %c0_i32_1 = arith.constant 0 : i32
    %c0_i32_2 = arith.constant 0 : i32
    return %c0_i32, %c0_i32_0, %c0_i32_1 : i32, i32, i32
  }
  func.func @transform_4(%arg0: i32, %arg1: i32) -> (i32, i32, i32) {
    %c0_i32 = arith.constant 0 : i32
    %c0_i32_0 = arith.constant 0 : i32
    %c0_i32_1 = arith.constant 0 : i32
    %c0_i32_2 = arith.constant 0 : i32
    return %c0_i32, %c0_i32_0, %c0_i32_1 : i32, i32, i32
  }
  func.func @transform_5(%arg0: i32, %arg1: i32) -> (i32, i32) {
    %c0_i32 = arith.constant 0 : i32
    %c0_i32_0 = arith.constant 0 : i32
    %c0_i32_1 = arith.constant 0 : i32
    return %c0_i32, %c0_i32_0 : i32, i32
  }
  func.func @transform_6(%arg0: i32, %arg1: i32) -> (i32, i32, i32, i32) {
    %c0_i32 = arith.constant 0 : i32
    %c0_i32_0 = arith.constant 0 : i32
    %c0_i32_1 = arith.constant 0 : i32
    return %arg0, %arg1, %c0_i32, %c0_i32_0 : i32, i32, i32, i32
  }
  func.func @transform_7(%arg0: i32, %arg1: i32) -> (i32, i32, i32, i32) {
    %c16_i32 = arith.constant 16 : i32
    %0 = arith.muli %arg1, %c16_i32 : i32
    %c1_i32 = arith.constant 1 : i32
    %1 = arith.subi %0, %c1_i32 : i32
    %c0_i32 = arith.constant 0 : i32
    %2 = arith.maxsi %1, %c0_i32 : i32
    %c0_i32_0 = arith.constant 0 : i32
    %c0_i32_1 = arith.constant 0 : i32
    %c0_i32_2 = arith.constant 0 : i32
    return %arg0, %2, %c0_i32_0, %c0_i32_1 : i32, i32, i32, i32
  }
  func.func @transform_8(%arg0: i32, %arg1: i32) -> (i32, i32, i32, i32) {
    %c16_i32 = arith.constant 16 : i32
    %0 = arith.muli %arg1, %c16_i32 : i32
    %c16_i32_0 = arith.constant 16 : i32
    %1 = arith.addi %0, %c16_i32_0 : i32
    %c15_i32 = arith.constant 15 : i32
    %2 = arith.minsi %1, %c15_i32 : i32
    %c0_i32 = arith.constant 0 : i32
    %c0_i32_1 = arith.constant 0 : i32
    %c0_i32_2 = arith.constant 0 : i32
    return %arg0, %2, %c0_i32, %c0_i32_1 : i32, i32, i32, i32
  }
  func.func @transform_9(%arg0: i32, %arg1: i32) -> (i32, i32, i32) {
    %c0_i32 = arith.constant 0 : i32
    %c0_i32_0 = arith.constant 0 : i32
    %c0_i32_1 = arith.constant 0 : i32
    %c0_i32_2 = arith.constant 0 : i32
    return %c0_i32, %c0_i32_0, %c0_i32_1 : i32, i32, i32
  }
  func.func @transform_10(%arg0: i32, %arg1: i32) -> (i32, i32, i32) {
    %c0_i32 = arith.constant 0 : i32
    %c0_i32_0 = arith.constant 0 : i32
    %c0_i32_1 = arith.constant 0 : i32
    %c0_i32_2 = arith.constant 0 : i32
    return %c0_i32, %c0_i32_0, %c0_i32_1 : i32, i32, i32
  }
  func.func @transform_11(%arg0: i32, %arg1: i32) -> (i32, i32) {
    %c0_i32 = arith.constant 0 : i32
    %c0_i32_0 = arith.constant 0 : i32
    %c0_i32_1 = arith.constant 0 : i32
    return %c0_i32, %c0_i32_0 : i32, i32
  }
  func.func @transform_12(%arg0: i32, %arg1: i32) -> (i32, i32) {
    %c0_i32 = arith.constant 0 : i32
    %c0_i32_0 = arith.constant 0 : i32
    %c0_i32_1 = arith.constant 0 : i32
    return %c0_i32, %c0_i32_0 : i32, i32
  }
  func.func @transform_13(%arg0: i32, %arg1: i32) -> (i32, i32) {
    %c0_i32 = arith.constant 0 : i32
    %c0_i32_0 = arith.constant 0 : i32
    %c0_i32_1 = arith.constant 0 : i32
    return %c0_i32, %c0_i32_0 : i32, i32
  }
  func.func @transform_14(%arg0: i32, %arg1: i32) -> (i32, i32, i32, i32) {
    %c0_i32 = arith.constant 0 : i32
    %c0_i32_0 = arith.constant 0 : i32
    %c0_i32_1 = arith.constant 0 : i32
    return %arg0, %arg1, %c0_i32, %c0_i32_0 : i32, i32, i32, i32
  }
}

</mosaic_0001>

<llo_original>
// kernel: tpu_custom_call.1
$region0: #{tpu_custom_call.1}
  #allocation0 [shape = 'u32[]', space=smem, size = 0x4, offset = 0x4, fixed_abs, tag = 'smem constant byte address 0x4 - core index']
  #allocation1 [shape = 'u32[144,128]{1,0:T(1,128)}', space=vmem, size = 0x12000, scoped, tag = 'internal scratch']
  #allocation2 [shape = 'bf16[18,16,64]{2,1,0:T(8,128)(2,1)}', space=vmem, size = 0x12000, scoped, tag = 'scratch operand']
  %s0 = inlined_call_operand.hbm [shape: bf16[2,16,16,16], index: 0, kind: input, shape index: {}]
  %s1 = inlined_call_operand.hbm [shape: bf16[2,16,16,16], index: 1, kind: input, shape index: {}]
  %s2 = inlined_call_operand.hbm [shape: bf16[2,16,16,16], index: 2, kind: input, shape index: {}]
  %s3 = inlined_call_operand.hbm [shape: f32[1,1,16], index: 3, kind: input, shape index: {}]
  %s4 = inlined_call_operand.hbm [shape: f32[1,1,16], index: 4, kind: input, shape index: {}]
  %s5 = inlined_call_operand.vmem [shape: bf16[16,64], index: 5, kind: input, shape index: {}]
  %s6 = inlined_call_operand.hbm [shape: bf16[2,16,16,16], index: 6, kind: input, shape index: {}]
  %s7 = inlined_call_operand.hbm [shape: bf16[2,16,16,16], index: 7, kind: input, shape index: {}]
  %s8 = inlined_call_operand.hbm [shape: bf16[2,16,16,16], index: 8, kind: input, shape index: {}]
  %s9 = inlined_call_operand.hbm [shape: f32[1,1,16], index: 9, kind: input, shape index: {}]
  %s10 = inlined_call_operand.vmem [shape: f32[1,1,16], index: 10, kind: input, shape index: {}]
  %s11 = inlined_call_operand.vmem [shape: bf16[16,64], index: 11, kind: input, shape index: {}]
  %s12 = inlined_call_operand.vmem [shape: f32[1,64], index: 12, kind: input, shape index: {}]
  %s13 = inlined_call_operand.hbm [shape: bf16[64,144], index: 13, kind: input, shape index: {}]
  %s14 = inlined_call_operand.hbm [shape: bf16[2,16,16,16], index: 14, kind: output, shape index: {}]
  %s15 = sld [smem:[#allocation0]]
  $region129: #{tpu_custom_call.1} parent=0
    _
  %s17 = ssub.s32 1, %s15
  %s18 = scalar_select 0, %s17, %s15
  $region1: #{tpu_custom_call.1} parent=0
    #allocation3 [shape = 'u8[131072]{0}', space=vmem, size = 0x20000, scoped, tag = 'input window, operand 0']
    #allocation4 [shape = 's32[2]{0}', space=sflag, size = 0x8, scoped, tag = 'scoped memory for tpu_custom_call.1']
    #allocation5 [shape = 's32[2]{0}', space=sflag, size = 0x8, scoped, tag = 'scoped memory for tpu_custom_call.1']
    #allocation6 [shape = 'u8[8192]{0}', space=vmem, size = 0x2000, scoped, tag = 'input window, operand 1']
    #allocation7 [shape = 's32[2]{0}', space=sflag, size = 0x8, scoped, tag = 'scoped memory for tpu_custom_call.1']
    #allocation8 [shape = 'u8[8192]{0}', space=vmem, size = 0x2000, scoped, tag = 'input window, operand 2']
    #allocation9 [shape = 'u8[512]{0}', space=vmem, size = 0x400, scoped, tag = 'input window, operand 3, single buffered']
    #allocation10 [shape = 's32[1]{0}', space=sflag, size = 0x4, scoped, tag = 'scoped memory for tpu_custom_call.1']
    #allocation11 [shape = 'u8[512]{0}', space=vmem, size = 0x400, scoped, tag = 'input window, operand 4, single buffered']
    #allocation12 [shape = 'u8[131072]{0}', space=vmem, size = 0x20000, scoped, tag = 'input window, operand 6']
    #allocation13 [shape = 's32[2]{0}', space=sflag, size = 0x8, scoped, tag = 'scoped memory for tpu_custom_call.1']
    #allocation14 [shape = 'u8[8192]{0}', space=vmem, size = 0x2000, scoped, tag = 'input window, operand 7']
    #allocation15 [shape = 'u8[8192]{0}', space=vmem, size = 0x2000, scoped, tag = 'input window, operand 8']
    #allocation16 [shape = 's32[2]{0}', space=sflag, size = 0x8, scoped, tag = 'scoped memory for tpu_custom_call.1']
    #allocation17 [shape = 'u8[512]{0}', space=vmem, size = 0x400, scoped, tag = 'input window, operand 9, single buffered']
    #allocation18 [shape = 'u8[32768]{0}', space=vmem, size = 0x8000, scoped, tag = 'input window, operand 13, single buffered']
    #allocation19 [shape = 's32[1]{0}', space=sflag, size = 0x4, scoped, tag = 'scoped memory for tpu_custom_call.1']
    #allocation20 [shape = 'u8[131072]{0}', space=vmem, size = 0x20000, scoped, tag = 'output window, operand 0']
    %19 = vsyncpa [#allocation4], 0
    %s20 = scalar_lea.sflag [#allocation4], 1
    %21 = vsyncpa %s20, 0
    %22 = vsyncpa [#allocation7], 0
    %s23 = scalar_lea.sflag [#allocation7], 1
    %24 = vsyncpa %s23, 0
    %25 = vsyncpa [#allocation10], 0
    %26 = vsyncpa [#allocation13], 0
    %s27 = scalar_lea.sflag [#allocation13], 1
    %28 = vsyncpa %s27, 0
    %29 = vsyncpa [#allocation16], 0
    %s30 = scalar_lea.sflag [#allocation16], 1
    %31 = vsyncpa %s30, 0
    %32 = vsyncpa [#allocation19], 0
    %33 = vsyncpa [#allocation5], 0
    %s34 = scalar_lea.sflag [#allocation5], 1
    %35 = vsyncpa %s34, 0
    loop: start=0, step=1, limit=4
    $region2: #{tpu_custom_call.1} parent=1 // loop_pre_header
      _
    $region3: #{tpu_custom_call.1} parent=1 // loop_header
      %s37 = sphi 0, %s41
      %p38 = scmp.ge.s32.totalorder %s37, 4
      %s44 = sphi 0, %s56
      %s45 = sphi 0, %s52
      %s46 = sphi 0, %s44
      %s47 = sphi 0, %s45
      %s48 = sphi 0, %s46
      %s49 = sphi 0, %s47
      %s61 = sphi 0, %s63
      %s64 = sphi 0, %s61
      %s65 = sphi 0, %s64
      %s81 = sphi 0, %s65
      %s97 = sphi 0, %s99
      %s100 = sphi 0, %s97
      %s101 = sphi 0, %s100
      %s117 = sphi 0, %s101
      %s133 = sphi 0, %s135
      %s136 = sphi 0, %s133
      %s137 = sphi 0, %s136
      %s153 = sphi 0, %s137
      %s157 = sphi 0, %s157
      %s159 = sphi 0, %s157
      %s160 = sphi 0, %s159
      %s174 = sphi 0, %s160
      %s178 = sphi 0, %s178
      %s180 = sphi 0, %s178
      %s181 = sphi 0, %s180
      %s195 = sphi 0, %s181
      %s199 = sphi 0, %s199
      %s201 = sphi 0, %s199
      %s202 = sphi 0, %s201
      %s216 = sphi 0, %s202
      %s224 = sphi 0, %s226
      %s227 = sphi 0, %s224
      %s228 = sphi 0, %s227
      %s244 = sphi 0, %s228
      %s260 = sphi 0, %s262
      %s263 = sphi 0, %s260
      %s264 = sphi 0, %s263
      %s280 = sphi 0, %s264
      %s296 = sphi 0, %s298
      %s299 = sphi 0, %s296
      %s300 = sphi 0, %s299
      %s316 = sphi 0, %s300
      %s320 = sphi 0, %s320
      %s322 = sphi 0, %s320
      %s323 = sphi 0, %s322
      %s337 = sphi 0, %s323
      %s341 = sphi 0, %s341
      %s343 = sphi 0, %s341
      %s344 = sphi 0, %s343
      %s358 = sphi 0, %s344
      %s362 = sphi 0, %s362
      %s364 = sphi 0, %s362
      %s365 = sphi 0, %s364
      %s379 = sphi 0, %s365
      %s383 = sphi 0, %s383
      %s385 = sphi 0, %s383
      %s386 = sphi 0, %s385
      %s400 = sphi 0, %s386
      %s404 = sphi 0, %s404
      %s406 = sphi 0, %s404
      %s407 = sphi 0, %s406
      %s421 = sphi 0, %s407
      %s429 = sphi 0, %s431
      %s432 = sphi 0, %s429
      %s433 = sphi 0, %s432
      %s449 = sphi 0, %s433
    $region4: #{tpu_custom_call.1} parent=1 // loop_header_branch
      %40 = sbr.rel (%p38) target = $region8
    $region5: #{tpu_custom_call.1} parent=1 // loop_body
      %s42 = ssub.s32 %s37, 1
      %s43 = ssub.s32 %s37, 2
      %s50 = sadd.s32 1, %s45
      %p51 = scmp.ge.s32.totalorder %s50, 1
      %s52 = scalar_select %p51, 0, %s50
      %s53 = sadd.s32 1, %s44
      %s54 = scalar_select %p51, %s53, %s44
      %p55 = scmp.ge.s32.totalorder %s54, 2
      %s56 = scalar_select %p55, 0, %s54
      %s57 = ssub.s32 %s44, %s56
      %s58 = ssub.s32 %s45, %s52
      %s59 = sor.u32 %s57, %s58
      %p60 = scmp.eq.s32.totalorder %s59, 0
      %s62 = sadd.s32 %s61, 1
      %s63 = scalar_select %p60, %s61, %s62
      %p66 = pneg %p60
      %p67 = scmp.eq.s32.totalorder %s37, 1
      %p68 = por %p66, %p67
      %p69 = scmp.ne.s32.totalorder %s61, %s64
      %p70 = scmp.eq.s32.totalorder %s37, 0
      %p71 = por %p69, %p70
      %p72 = scmp.ne.s32.totalorder %s61, %s64
      %p73 = scmp.eq.s32.totalorder %s42, 1
      %p74 = por %p72, %p73
      %p75 = scmp.ne.s32.totalorder %s64, %s65
      %p76 = scmp.eq.s32.totalorder %s42, 0
      %p77 = por %p75, %p76
      %p78 = scmp.ne.s32.totalorder %s64, %s65
      %p79 = scmp.eq.s32.totalorder %s43, 1
      %p80 = por %p78, %p79
      %p82 = scmp.ne.s32.totalorder %s65, %s81
      %p83 = scmp.eq.s32.totalorder %s43, 0
      %p84 = por %p82, %p83
      %s85 = smul.u32 %s45, 16
      %s86 = ssub.s32 %s85, 1
      %p87 = scmp.gt.s32.totalorder %s86, 0
      %s88 = scalar_select %p87, %s86, 0
      %s89 = smul.u32 %s52, 16
      %s90 = ssub.s32 %s89, 1
      %p91 = scmp.gt.s32.totalorder %s90, 0
      %s92 = scalar_select %p91, %s90, 0
      %s93 = ssub.s32 %s44, %s56
      %s94 = ssub.s32 %s88, %s92
      %s95 = sor.u32 %s93, %s94
      %p96 = scmp.eq.s32.totalorder %s95, 0
      %s98 = sadd.s32 %s97, 1
      %s99 = scalar_select %p96, %s97, %s98
      %p102 = pneg %p96
      %p103 = scmp.eq.s32.totalorder %s37, 1
      %p104 = por %p102, %p103
      %p105 = scmp.ne.s32.totalorder %s97, %s100
      %p106 = scmp.eq.s32.totalorder %s37, 0
      %p107 = por %p105, %p106
      %p108 = scmp.ne.s32.totalorder %s97, %s100
      %p109 = scmp.eq.s32.totalorder %s42, 1
      %p110 = por %p108, %p109
      %p111 = scmp.ne.s32.totalorder %s100, %s101
      %p112 = scmp.eq.s32.totalorder %s42, 0
      %p113 = por %p111, %p112
      %p114 = scmp.ne.s32.totalorder %s100, %s101
      %p115 = scmp.eq.s32.totalorder %s43, 1
      %p116 = por %p114, %p115
      %p118 = scmp.ne.s32.totalorder %s101, %s117
      %p119 = scmp.eq.s32.totalorder %s43, 0
      %p120 = por %p118, %p119
      %s121 = smul.u32 %s45, 16
      %s122 = sadd.s32 %s121, 16
      %p123 = scmp.lt.s32.totalorder %s122, 15
      %s124 = scalar_select %p123, %s122, 15
      %s125 = smul.u32 %s52, 16
      %s126 = sadd.s32 %s125, 16
      %p127 = scmp.lt.s32.totalorder %s126, 15
      %s128 = scalar_select %p127, %s126, 15
      %s129 = ssub.s32 %s44, %s56
      %s130 = ssub.s32 %s124, %s128
      %s131 = sor.u32 %s129, %s130
      %p132 = scmp.eq.s32.totalorder %s131, 0
      %s134 = sadd.s32 %s133, 1
      %s135 = scalar_select %p132, %s133, %s134
      %p138 = pneg %p132
      %p139 = scmp.eq.s32.totalorder %s37, 1
      %p140 = por %p138, %p139
      %p141 = scmp.ne.s32.totalorder %s133, %s136
      %p142 = scmp.eq.s32.totalorder %s37, 0
      %p143 = por %p141, %p142
      %p144 = scmp.ne.s32.totalorder %s133, %s136
      %p145 = scmp.eq.s32.totalorder %s42, 1
      %p146 = por %p144, %p145
      %p147 = scmp.ne.s32.totalorder %s136, %s137
      %p148 = scmp.eq.s32.totalorder %s42, 0
      %p149 = por %p147, %p148
      %p150 = scmp.ne.s32.totalorder %s136, %s137
      %p151 = scmp.eq.s32.totalorder %s43, 1
      %p152 = por %p150, %p151
      %p154 = scmp.ne.s32.totalorder %s137, %s153
      %p155 = scmp.eq.s32.totalorder %s43, 0
      %p156 = por %p154, %p155
      %s158 = sadd.s32 %s157, 1
      %p161 = scmp.eq.s32.totalorder %s37, 1
      %p162 = scmp.ne.s32.totalorder %s157, %s159
      %p163 = scmp.eq.s32.totalorder %s37, 0
      %p164 = por %p162, %p163
      %p165 = scmp.ne.s32.totalorder %s157, %s159
      %p166 = scmp.eq.s32.totalorder %s42, 1
      %p167 = por %p165, %p166
      %p168 = scmp.ne.s32.totalorder %s159, %s160
      %p169 = scmp.eq.s32.totalorder %s42, 0
      %p170 = por %p168, %p169
      %p171 = scmp.ne.s32.totalorder %s159, %s160
      %p172 = scmp.eq.s32.totalorder %s43, 1
      %p173 = por %p171, %p172
      %p175 = scmp.ne.s32.totalorder %s160, %s174
      %p176 = scmp.eq.s32.totalorder %s43, 0
      %p177 = por %p175, %p176
      %s179 = sadd.s32 %s178, 1
      %p182 = scmp.eq.s32.totalorder %s37, 1
      %p183 = scmp.ne.s32.totalorder %s178, %s180
      %p184 = scmp.eq.s32.totalorder %s37, 0
      %p185 = por %p183, %p184
      %p186 = scmp.ne.s32.totalorder %s178, %s180
      %p187 = scmp.eq.s32.totalorder %s42, 1
      %p188 = por %p186, %p187
      %p189 = scmp.ne.s32.totalorder %s180, %s181
      %p190 = scmp.eq.s32.totalorder %s42, 0
      %p191 = por %p189, %p190
      %p192 = scmp.ne.s32.totalorder %s180, %s181
      %p193 = scmp.eq.s32.totalorder %s43, 1
      %p194 = por %p192, %p193
      %p196 = scmp.ne.s32.totalorder %s181, %s195
      %p197 = scmp.eq.s32.totalorder %s43, 0
      %p198 = por %p196, %p197
      %s200 = sadd.s32 %s199, 1
      %p203 = scmp.eq.s32.totalorder %s37, 1
      %p204 = scmp.ne.s32.totalorder %s199, %s201
      %p205 = scmp.eq.s32.totalorder %s37, 0
      %p206 = por %p204, %p205
      %p207 = scmp.ne.s32.totalorder %s199, %s201
      %p208 = scmp.eq.s32.totalorder %s42, 1
      %p209 = por %p207, %p208
      %p210 = scmp.ne.s32.totalorder %s201, %s202
      %p211 = scmp.eq.s32.totalorder %s42, 0
      %p212 = por %p210, %p211
      %p213 = scmp.ne.s32.totalorder %s201, %s202
      %p214 = scmp.eq.s32.totalorder %s43, 1
      %p215 = por %p213, %p214
      %p217 = scmp.ne.s32.totalorder %s202, %s216
      %p218 = scmp.eq.s32.totalorder %s43, 0
      %p219 = por %p217, %p218
      %s220 = ssub.s32 %s44, %s56
      %s221 = ssub.s32 %s45, %s52
      %s222 = sor.u32 %s220, %s221
      %p223 = scmp.eq.s32.totalorder %s222, 0
      %s225 = sadd.s32 %s224, 1
      %s226 = scalar_select %p223, %s224, %s225
      %p229 = pneg %p223
      %p230 = scmp.eq.s32.totalorder %s37, 1
      %p231 = por %p229, %p230
      %p232 = scmp.ne.s32.totalorder %s224, %s227
      %p233 = scmp.eq.s32.totalorder %s37, 0
      %p234 = por %p232, %p233
      %p235 = scmp.ne.s32.totalorder %s224, %s227
      %p236 = scmp.eq.s32.totalorder %s42, 1
      %p237 = por %p235, %p236
      %p238 = scmp.ne.s32.totalorder %s227, %s228
      %p239 = scmp.eq.s32.totalorder %s42, 0
      %p240 = por %p238, %p239
      %p241 = scmp.ne.s32.totalorder %s227, %s228
      %p242 = scmp.eq.s32.totalorder %s43, 1
      %p243 = por %p241, %p242
      %p245 = scmp.ne.s32.totalorder %s228, %s244
      %p246 = scmp.eq.s32.totalorder %s43, 0
      %p247 = por %p245, %p246
      %s248 = smul.u32 %s45, 16
      %s249 = ssub.s32 %s248, 1
      %p250 = scmp.gt.s32.totalorder %s249, 0
      %s251 = scalar_select %p250, %s249, 0
      %s252 = smul.u32 %s52, 16
      %s253 = ssub.s32 %s252, 1
      %p254 = scmp.gt.s32.totalorder %s253, 0
      %s255 = scalar_select %p254, %s253, 0
      %s256 = ssub.s32 %s44, %s56
      %s257 = ssub.s32 %s251, %s255
      %s258 = sor.u32 %s256, %s257
      %p259 = scmp.eq.s32.totalorder %s258, 0
      %s261 = sadd.s32 %s260, 1
      %s262 = scalar_select %p259, %s260, %s261
      %p265 = pneg %p259
      %p266 = scmp.eq.s32.totalorder %s37, 1
      %p267 = por %p265, %p266
      %p268 = scmp.ne.s32.totalorder %s260, %s263
      %p269 = scmp.eq.s32.totalorder %s37, 0
      %p270 = por %p268, %p269
      %p271 = scmp.ne.s32.totalorder %s260, %s263
      %p272 = scmp.eq.s32.totalorder %s42, 1
      %p273 = por %p271, %p272
      %p274 = scmp.ne.s32.totalorder %s263, %s264
      %p275 = scmp.eq.s32.totalorder %s42, 0
      %p276 = por %p274, %p275
      %p277 = scmp.ne.s32.totalorder %s263, %s264
      %p278 = scmp.eq.s32.totalorder %s43, 1
      %p279 = por %p277, %p278
      %p281 = scmp.ne.s32.totalorder %s264, %s280
      %p282 = scmp.eq.s32.totalorder %s43, 0
      %p283 = por %p281, %p282
      %s284 = smul.u32 %s45, 16
      %s285 = sadd.s32 %s284, 16
      %p286 = scmp.lt.s32.totalorder %s285, 15
      %s287 = scalar_select %p286, %s285, 15
      %s288 = smul.u32 %s52, 16
      %s289 = sadd.s32 %s288, 16
      %p290 = scmp.lt.s32.totalorder %s289, 15
      %s291 = scalar_select %p290, %s289, 15
      %s292 = ssub.s32 %s44, %s56
      %s293 = ssub.s32 %s287, %s291
      %s294 = sor.u32 %s292, %s293
      %p295 = scmp.eq.s32.totalorder %s294, 0
      %s297 = sadd.s32 %s296, 1
      %s298 = scalar_select %p295, %s296, %s297
      %p301 = pneg %p295
      %p302 = scmp.eq.s32.totalorder %s37, 1
      %p303 = por %p301, %p302
      %p304 = scmp.ne.s32.totalorder %s296, %s299
      %p305 = scmp.eq.s32.totalorder %s37, 0
      %p306 = por %p304, %p305
      %p307 = scmp.ne.s32.totalorder %s296, %s299
      %p308 = scmp.eq.s32.totalorder %s42, 1
      %p309 = por %p307, %p308
      %p310 = scmp.ne.s32.totalorder %s299, %s300
      %p311 = scmp.eq.s32.totalorder %s42, 0
      %p312 = por %p310, %p311
      %p313 = scmp.ne.s32.totalorder %s299, %s300
      %p314 = scmp.eq.s32.totalorder %s43, 1
      %p315 = por %p313, %p314
      %p317 = scmp.ne.s32.totalorder %s300, %s316
      %p318 = scmp.eq.s32.totalorder %s43, 0
      %p319 = por %p317, %p318
      %s321 = sadd.s32 %s320, 1
      %p324 = scmp.eq.s32.totalorder %s37, 1
      %p325 = scmp.ne.s32.totalorder %s320, %s322
      %p326 = scmp.eq.s32.totalorder %s37, 0
      %p327 = por %p325, %p326
      %p328 = scmp.ne.s32.totalorder %s320, %s322
      %p329 = scmp.eq.s32.totalorder %s42, 1
      %p330 = por %p328, %p329
      %p331 = scmp.ne.s32.totalorder %s322, %s323
      %p332 = scmp.eq.s32.totalorder %s42, 0
      %p333 = por %p331, %p332
      %p334 = scmp.ne.s32.totalorder %s322, %s323
      %p335 = scmp.eq.s32.totalorder %s43, 1
      %p336 = por %p334, %p335
      %p338 = scmp.ne.s32.totalorder %s323, %s337
      %p339 = scmp.eq.s32.totalorder %s43, 0
      %p340 = por %p338, %p339
      %s342 = sadd.s32 %s341, 1
      %p345 = scmp.eq.s32.totalorder %s37, 1
      %p346 = scmp.ne.s32.totalorder %s341, %s343
      %p347 = scmp.eq.s32.totalorder %s37, 0
      %p348 = por %p346, %p347
      %p349 = scmp.ne.s32.totalorder %s341, %s343
      %p350 = scmp.eq.s32.totalorder %s42, 1
      %p351 = por %p349, %p350
      %p352 = scmp.ne.s32.totalorder %s343, %s344
      %p353 = scmp.eq.s32.totalorder %s42, 0
      %p354 = por %p352, %p353
      %p355 = scmp.ne.s32.totalorder %s343, %s344
      %p356 = scmp.eq.s32.totalorder %s43, 1
      %p357 = por %p355, %p356
      %p359 = scmp.ne.s32.totalorder %s344, %s358
      %p360 = scmp.eq.s32.totalorder %s43, 0
      %p361 = por %p359, %p360
      %s363 = sadd.s32 %s362, 1
      %p366 = scmp.eq.s32.totalorder %s37, 1
      %p367 = scmp.ne.s32.totalorder %s362, %s364
      %p368 = scmp.eq.s32.totalorder %s37, 0
      %p369 = por %p367, %p368
      %p370 = scmp.ne.s32.totalorder %s362, %s364
      %p371 = scmp.eq.s32.totalorder %s42, 1
      %p372 = por %p370, %p371
      %p373 = scmp.ne.s32.totalorder %s364, %s365
      %p374 = scmp.eq.s32.totalorder %s42, 0
      %p375 = por %p373, %p374
      %p376 = scmp.ne.s32.totalorder %s364, %s365
      %p377 = scmp.eq.s32.totalorder %s43, 1
      %p378 = por %p376, %p377
      %p380 = scmp.ne.s32.totalorder %s365, %s379
      %p381 = scmp.eq.s32.totalorder %s43, 0
      %p382 = por %p380, %p381
      %s384 = sadd.s32 %s383, 1
      %p387 = scmp.eq.s32.totalorder %s37, 1
      %p388 = scmp.ne.s32.totalorder %s383, %s385
      %p389 = scmp.eq.s32.totalorder %s37, 0
      %p390 = por %p388, %p389
      %p391 = scmp.ne.s32.totalorder %s383, %s385
      %p392 = scmp.eq.s32.totalorder %s42, 1
      %p393 = por %p391, %p392
      %p394 = scmp.ne.s32.totalorder %s385, %s386
      %p395 = scmp.eq.s32.totalorder %s42, 0
      %p396 = por %p394, %p395
      %p397 = scmp.ne.s32.totalorder %s385, %s386
      %p398 = scmp.eq.s32.totalorder %s43, 1
      %p399 = por %p397, %p398
      %p401 = scmp.ne.s32.totalorder %s386, %s400
      %p402 = scmp.eq.s32.totalorder %s43, 0
      %p403 = por %p401, %p402
      %s405 = sadd.s32 %s404, 1
      %p408 = scmp.eq.s32.totalorder %s37, 1
      %p409 = scmp.ne.s32.totalorder %s404, %s406
      %p410 = scmp.eq.s32.totalorder %s37, 0
      %p411 = por %p409, %p410
      %p412 = scmp.ne.s32.totalorder %s404, %s406
      %p413 = scmp.eq.s32.totalorder %s42, 1
      %p414 = por %p412, %p413
      %p415 = scmp.ne.s32.totalorder %s406, %s407
      %p416 = scmp.eq.s32.totalorder %s42, 0
      %p417 = por %p415, %p416
      %p418 = scmp.ne.s32.totalorder %s406, %s407
      %p419 = scmp.eq.s32.totalorder %s43, 1
      %p420 = por %p418, %p419
      %p422 = scmp.ne.s32.totalorder %s407, %s421
      %p423 = scmp.eq.s32.totalorder %s43, 0
      %p424 = por %p422, %p423
      %s425 = ssub.s32 %s44, %s56
      %s426 = ssub.s32 %s45, %s52
      %s427 = sor.u32 %s425, %s426
      %p428 = scmp.eq.s32.totalorder %s427, 0
      %s430 = sadd.s32 %s429, 1
      %s431 = scalar_select %p428, %s429, %s430
      %p434 = pneg %p428
      %p435 = scmp.eq.s32.totalorder %s37, 1
      %p436 = por %p434, %p435
      %p437 = scmp.ne.s32.totalorder %s429, %s432
      %p438 = scmp.eq.s32.totalorder %s37, 0
      %p439 = por %p437, %p438
      %p440 = scmp.ne.s32.totalorder %s429, %s432
      %p441 = scmp.eq.s32.totalorder %s42, 1
      %p442 = por %p440, %p441
      %p443 = scmp.ne.s32.totalorder %s432, %s433
      %p444 = scmp.eq.s32.totalorder %s42, 0
      %p445 = por %p443, %p444
      %p446 = scmp.ne.s32.totalorder %s432, %s433
      %p447 = scmp.eq.s32.totalorder %s43, 1
      %p448 = por %p446, %p447
      %p450 = scmp.ne.s32.totalorder %s433, %s449
      %p451 = scmp.eq.s32.totalorder %s43, 0
      %p452 = por %p450, %p451
      %p453 = scmp.le.s32.totalorder 1, %s37
      %p454 = scmp.lt.s32.totalorder %s37, 3
      %p455 = pnand %p453, %p454
      %p456 = pneg %p455
      // Predicated region
      $region9: #{tpu_custom_call.1} parent=5 // pred_check
        _
      $region10: #{tpu_custom_call.1} parent=5 // pred_check_branch
        %458 = sbr.rel (%p455) target = $region12
      $region11: #{tpu_custom_call.1} parent=5 // pred_region
        %s459 = ssub.s32 %s37, 1
        // Predicated region
        $region13: #{tpu_custom_call.1} parent=11 // pred_check
          %p460 = pneg %p170
        $region14: #{tpu_custom_call.1} parent=11 // pred_check_branch
          %462 = sbr.rel (%p460) target = $region16
        $region15: #{tpu_custom_call.1} parent=11 // pred_region
          %s464 = ssub.s32 16, 16
          %465 = vsyncadd [#allocation10], %s464
          %s467 = sshll.u32 [#allocation9], 4
          %s468 = int_to_ptr.vmem [resolvable:$true] %s467
          %470 = dma.hbm_to_vmem [thread:$0]  %s3, 16, %s468, [#allocation10]
        $region16: #{tpu_custom_call.1} parent=11 // pred_fallthru
          _
        // Predicated region
        $region17: #{tpu_custom_call.1} parent=11 // pred_check
          %p471 = pneg %p191
        $region18: #{tpu_custom_call.1} parent=11 // pred_check_branch
          %473 = sbr.rel (%p471) target = $region20
        $region19: #{tpu_custom_call.1} parent=11 // pred_region
          %s475 = ssub.s32 16, 16
          %476 = vsyncadd [#allocation10], %s475
          %s478 = sshll.u32 [#allocation11], 4
          %s479 = int_to_ptr.vmem [resolvable:$true] %s478
          %481 = dma.hbm_to_vmem [thread:$0]  %s4, 16, %s479, [#allocation10]
        $region20: #{tpu_custom_call.1} parent=11 // pred_fallthru
          _
        // Predicated region
        $region21: #{tpu_custom_call.1} parent=11 // pred_check
          %p482 = pneg %p212
        $region22: #{tpu_custom_call.1} parent=11 // pred_check_branch
          %484 = sbr.rel (%p482) target = $region24
        $region23: #{tpu_custom_call.1} parent=11 // pred_region
          _
        $region24: #{tpu_custom_call.1} parent=11 // pred_fallthru
          _
        // Predicated region
        $region25: #{tpu_custom_call.1} parent=11 // pred_check
          %p485 = pneg %p333
        $region26: #{tpu_custom_call.1} parent=11 // pred_check_branch
          %487 = sbr.rel (%p485) target = $region28
        $region27: #{tpu_custom_call.1} parent=11 // pred_region
          %s489 = ssub.s32 16, 16
          %490 = vsyncadd [#allocation16], %s489
          %s492 = sshll.u32 [#allocation17], 4
          %s493 = int_to_ptr.vmem [resolvable:$true] %s492
          %495 = dma.hbm_to_vmem [thread:$0]  %s9, 16, %s493, [#allocation16]
        $region28: #{tpu_custom_call.1} parent=11 // pred_fallthru
          _
        // Predicated region
        $region29: #{tpu_custom_call.1} parent=11 // pred_check
          %p496 = pneg %p354
        $region30: #{tpu_custom_call.1} parent=11 // pred_check_branch
          %498 = sbr.rel (%p496) target = $region32
        $region31: #{tpu_custom_call.1} parent=11 // pred_region
          _
        $region32: #{tpu_custom_call.1} parent=11 // pred_fallthru
          _
        // Predicated region
        $region33: #{tpu_custom_call.1} parent=11 // pred_check
          %p499 = pneg %p375
        $region34: #{tpu_custom_call.1} parent=11 // pred_check_branch
          %501 = sbr.rel (%p499) target = $region36
        $region35: #{tpu_custom_call.1} parent=11 // pred_region
          _
        $region36: #{tpu_custom_call.1} parent=11 // pred_fallthru
          _
        // Predicated region
        $region37: #{tpu_custom_call.1} parent=11 // pred_check
          %p502 = pneg %p396
        $region38: #{tpu_custom_call.1} parent=11 // pred_check_branch
          %504 = sbr.rel (%p502) target = $region40
        $region39: #{tpu_custom_call.1} parent=11 // pred_region
          _
        $region40: #{tpu_custom_call.1} parent=11 // pred_fallthru
          _
        // Predicated region
        $region41: #{tpu_custom_call.1} parent=11 // pred_check
          %p505 = pneg %p417
        $region42: #{tpu_custom_call.1} parent=11 // pred_check_branch
          %507 = sbr.rel (%p505) target = $region44
        $region43: #{tpu_custom_call.1} parent=11 // pred_region
          %s509 = ssub.s32 1024, 1024
          %510 = vsyncadd [#allocation19], %s509
          %s511 = sshll.u32 [#allocation18], 4
          %s512 = int_to_ptr.vmem [resolvable:$true] %s511
          %517 = dma.hbm_to_vmem [thread:$0]  %s13, 1024, %s512, [#allocation19], 128, 128, 8
        $region44: #{tpu_custom_call.1} parent=11 // pred_fallthru
          _
      $region12: #{tpu_custom_call.1} parent=5 // pred_fallthru
        _
      %p518 = scmp.lt.s32.totalorder %s37, 2
      // Predicated region
      $region45: #{tpu_custom_call.1} parent=5 // pred_check
        %p519 = pneg %p518
      $region46: #{tpu_custom_call.1} parent=5 // pred_check_branch
        %521 = sbr.rel (%p519) target = $region48
      $region47: #{tpu_custom_call.1} parent=5 // pred_region
        // Predicated region
        $region49: #{tpu_custom_call.1} parent=47 // pred_check
          %p522 = pneg %p71
        $region50: #{tpu_custom_call.1} parent=47 // pred_check_branch
          %524 = sbr.rel (%p522) target = $region52
        $region51: #{tpu_custom_call.1} parent=47 // pred_region
          %s525 = sand.u32 %s61, 1
          %s526 = scalar_lea.sflag [#allocation4], %s525
          %s527 = sand.u32 %s61, 1
          %s528 = smul.addr %s527, 128
          %s529 = scalar_lea.vmem [#allocation3], %s528
          %s530 = smul.u32 16, %s45
          %s532 = ssub.s32 2048, 2048
          %533 = vsyncadd %s526, %s532
          %s534 = smul.addr %s530, 2
          %s535 = smul.addr %s44, 32
          %s536 = sadd.s32 %s534, %s535
          %s537 = smul.addr %s536, 64
          %s538 = scalar_lea.hbm %s0, %s537
          %s539 = sshll.u32 %s529, 4
          %s540 = int_to_ptr.vmem [resolvable:$true] %s539
          %545 = dma.hbm_to_vmem [thread:$0]  %s538, 2048, %s540, %s526, 64, 64, 4
        $region52: #{tpu_custom_call.1} parent=47 // pred_fallthru
          _
        // Predicated region
        $region53: #{tpu_custom_call.1} parent=47 // pred_check
          %p546 = pneg %p107
        $region54: #{tpu_custom_call.1} parent=47 // pred_check_branch
          %548 = sbr.rel (%p546) target = $region56
        $region55: #{tpu_custom_call.1} parent=47 // pred_region
          %s549 = sand.u32 %s37, 1
          %s550 = scalar_lea.sflag [#allocation7], %s549
          %s551 = sand.u32 %s97, 1
          %s552 = smul.addr %s551, 8
          %s553 = scalar_lea.vmem [#allocation6], %s552
          %s554 = smul.u32 %s45, 16
          %s555 = ssub.s32 %s554, 1
          %p556 = scmp.gt.s32.totalorder %s555, 0
          %s557 = scalar_select %p556, %s555, 0
          %s559 = ssub.s32 128, 128
          %560 = vsyncadd %s550, %s559
          %s561 = smul.addr %s557, 2
          %s562 = smul.addr %s44, 32
          %s563 = sadd.s32 %s561, %s562
          %s564 = smul.addr %s563, 64
          %s565 = scalar_lea.hbm %s1, %s564
          %s566 = sshll.u32 %s553, 4
          %s567 = int_to_ptr.vmem [resolvable:$true] %s566
          %572 = dma.hbm_to_vmem [thread:$0]  %s565, 128, %s567, %s550, 64, 64, 4
        $region56: #{tpu_custom_call.1} parent=47 // pred_fallthru
          _
        // Predicated region
        $region57: #{tpu_custom_call.1} parent=47 // pred_check
          %p573 = pneg %p143
        $region58: #{tpu_custom_call.1} parent=47 // pred_check_branch
          %575 = sbr.rel (%p573) target = $region60
        $region59: #{tpu_custom_call.1} parent=47 // pred_region
          %s576 = sand.u32 %s37, 1
          %s577 = scalar_lea.sflag [#allocation7], %s576
          %s578 = sand.u32 %s133, 1
          %s579 = smul.addr %s578, 8
          %s580 = scalar_lea.vmem [#allocation8], %s579
          %s581 = smul.u32 %s45, 16
          %s582 = sadd.s32 %s581, 16
          %p583 = scmp.lt.s32.totalorder %s582, 15
          %s584 = scalar_select %p583, %s582, 15
          %s586 = ssub.s32 128, 128
          %587 = vsyncadd %s577, %s586
          %s588 = smul.addr %s584, 2
          %s589 = smul.addr %s44, 32
          %s590 = sadd.s32 %s588, %s589
          %s591 = smul.addr %s590, 64
          %s592 = scalar_lea.hbm %s2, %s591
          %s593 = sshll.u32 %s580, 4
          %s594 = int_to_ptr.vmem [resolvable:$true] %s593
          %599 = dma.hbm_to_vmem [thread:$0]  %s592, 128, %s594, %s577, 64, 64, 4
        $region60: #{tpu_custom_call.1} parent=47 // pred_fallthru
          _
        // Predicated region
        $region61: #{tpu_custom_call.1} parent=47 // pred_check
          %p600 = pneg %p234
        $region62: #{tpu_custom_call.1} parent=47 // pred_check_branch
          %602 = sbr.rel (%p600) target = $region64
        $region63: #{tpu_custom_call.1} parent=47 // pred_region
          %s603 = sand.u32 %s37, 1
          %s604 = scalar_lea.sflag [#allocation13], %s603
          %s605 = sand.u32 %s224, 1
          %s606 = smul.addr %s605, 128
          %s607 = scalar_lea.vmem [#allocation12], %s606
          %s608 = smul.u32 16, %s45
          %s610 = ssub.s32 2048, 2048
          %611 = vsyncadd %s604, %s610
          %s612 = smul.addr %s608, 2
          %s613 = smul.addr %s44, 32
          %s614 = sadd.s32 %s612, %s613
          %s615 = smul.addr %s614, 64
          %s616 = scalar_lea.hbm %s6, %s615
          %s617 = sshll.u32 %s607, 4
          %s618 = int_to_ptr.vmem [resolvable:$true] %s617
          %623 = dma.hbm_to_vmem [thread:$0]  %s616, 2048, %s618, %s604, 64, 64, 4
        $region64: #{tpu_custom_call.1} parent=47 // pred_fallthru
          _
        // Predicated region
        $region65: #{tpu_custom_call.1} parent=47 // pred_check
          %p624 = pneg %p270
        $region66: #{tpu_custom_call.1} parent=47 // pred_check_branch
          %626 = sbr.rel (%p624) target = $region68
        $region67: #{tpu_custom_call.1} parent=47 // pred_region
          %s627 = sand.u32 %s37, 1
          %s628 = scalar_lea.sflag [#allocation13], %s627
          %s629 = sand.u32 %s260, 1
          %s630 = smul.addr %s629, 8
          %s631 = scalar_lea.vmem [#allocation14], %s630
          %s632 = smul.u32 %s45, 16
          %s633 = ssub.s32 %s632, 1
          %p634 = scmp.gt.s32.totalorder %s633, 0
          %s635 = scalar_select %p634, %s633, 0
          %s637 = ssub.s32 128, 128
          %638 = vsyncadd %s628, %s637
          %s639 = smul.addr %s635, 2
          %s640 = smul.addr %s44, 32
          %s641 = sadd.s32 %s639, %s640
          %s642 = smul.addr %s641, 64
          %s643 = scalar_lea.hbm %s7, %s642
          %s644 = sshll.u32 %s631, 4
          %s645 = int_to_ptr.vmem [resolvable:$true] %s644
          %650 = dma.hbm_to_vmem [thread:$0]  %s643, 128, %s645, %s628, 64, 64, 4
        $region68: #{tpu_custom_call.1} parent=47 // pred_fallthru
          _
        // Predicated region
        $region69: #{tpu_custom_call.1} parent=47 // pred_check
          %p651 = pneg %p306
        $region70: #{tpu_custom_call.1} parent=47 // pred_check_branch
          %653 = sbr.rel (%p651) target = $region72
        $region71: #{tpu_custom_call.1} parent=47 // pred_region
          %s654 = sand.u32 %s37, 1
          %s655 = scalar_lea.sflag [#allocation16], %s654
          %s656 = sand.u32 %s296, 1
          %s657 = smul.addr %s656, 8
          %s658 = scalar_lea.vmem [#allocation15], %s657
          %s659 = smul.u32 %s45, 16
          %s660 = sadd.s32 %s659, 16
          %p661 = scmp.lt.s32.totalorder %s660, 15
          %s662 = scalar_select %p661, %s660, 15
          %s664 = ssub.s32 128, 128
          %665 = vsyncadd %s655, %s664
          %s666 = smul.addr %s662, 2
          %s667 = smul.addr %s44, 32
          %s668 = sadd.s32 %s666, %s667
          %s669 = smul.addr %s668, 64
          %s670 = scalar_lea.hbm %s8, %s669
          %s671 = sshll.u32 %s658, 4
          %s672 = int_to_ptr.vmem [resolvable:$true] %s671
          %677 = dma.hbm_to_vmem [thread:$0]  %s670, 128, %s672, %s655, 64, 64, 4
        $region72: #{tpu_custom_call.1} parent=47 // pred_fallthru
          _
      $region48: #{tpu_custom_call.1} parent=5 // pred_fallthru
        _
      %p678 = scmp.le.s32.totalorder 1, %s37
      %p679 = scmp.lt.s32.totalorder %s37, 3
      %p680 = pnand %p678, %p679
      %p681 = pneg %p680
      // Predicated region
      $region73: #{tpu_custom_call.1} parent=5 // pred_check
        _
      $region74: #{tpu_custom_call.1} parent=5 // pred_check_branch
        %683 = sbr.rel (%p680) target = $region76
      $region75: #{tpu_custom_call.1} parent=5 // pred_region
        %s684 = ssub.s32 %s37, 1
        %s685 = sand.u32 %s64, 1
        %s686 = scalar_lea.sflag [#allocation4], %s685
        %s687 = sand.u32 %s64, 1
        %s688 = smul.addr %s687, 128
        %s689 = scalar_lea.vmem [#allocation3], %s688
        // Predicated region
        $region77: #{tpu_custom_call.1} parent=75 // pred_check
          %p690 = pneg %p77
        $region78: #{tpu_custom_call.1} parent=75 // pred_check_branch
          %692 = sbr.rel (%p690) target = $region80
        $region79: #{tpu_custom_call.1} parent=75 // pred_region
          %693 = dma.done %s686, 2048
        $region80: #{tpu_custom_call.1} parent=75 // pred_fallthru
          _
        %s694 = sand.u32 %s42, 1
        %s695 = scalar_lea.sflag [#allocation7], %s694
        %s696 = sand.u32 %s100, 1
        %s697 = smul.addr %s696, 8
        %s698 = scalar_lea.vmem [#allocation6], %s697
        // Predicated region
        $region81: #{tpu_custom_call.1} parent=75 // pred_check
          %p699 = pneg %p113
        $region82: #{tpu_custom_call.1} parent=75 // pred_check_branch
          %701 = sbr.rel (%p699) target = $region84
        $region83: #{tpu_custom_call.1} parent=75 // pred_region
          %702 = dma.done %s695, 128
        $region84: #{tpu_custom_call.1} parent=75 // pred_fallthru
          _
        %s703 = sand.u32 %s42, 1
        %s704 = scalar_lea.sflag [#allocation7], %s703
        %s705 = sand.u32 %s136, 1
        %s706 = smul.addr %s705, 8
        %s707 = scalar_lea.vmem [#allocation8], %s706
        // Predicated region
        $region85: #{tpu_custom_call.1} parent=75 // pred_check
          %p708 = pneg %p149
        $region86: #{tpu_custom_call.1} parent=75 // pred_check_branch
          %710 = sbr.rel (%p708) target = $region88
        $region87: #{tpu_custom_call.1} parent=75 // pred_region
          %711 = dma.done %s704, 128
        $region88: #{tpu_custom_call.1} parent=75 // pred_fallthru
          _
        // Predicated region
        $region89: #{tpu_custom_call.1} parent=75 // pred_check
          %p712 = pneg %p170
        $region90: #{tpu_custom_call.1} parent=75 // pred_check_branch
          %714 = sbr.rel (%p712) target = $region92
        $region91: #{tpu_custom_call.1} parent=75 // pred_region
          %715 = dma.done [#allocation10], 16
        $region92: #{tpu_custom_call.1} parent=75 // pred_fallthru
          _
        // Predicated region
        $region93: #{tpu_custom_call.1} parent=75 // pred_check
          %p716 = pneg %p191
        $region94: #{tpu_custom_call.1} parent=75 // pred_check_branch
          %718 = sbr.rel (%p716) target = $region96
        $region95: #{tpu_custom_call.1} parent=75 // pred_region
          %719 = dma.done [#allocation10], 16
        $region96: #{tpu_custom_call.1} parent=75 // pred_fallthru
          _
        %s720 = sand.u32 %s42, 1
        %s721 = scalar_lea.sflag [#allocation13], %s720
        %s722 = sand.u32 %s227, 1
        %s723 = smul.addr %s722, 128
        %s724 = scalar_lea.vmem [#allocation12], %s723
        // Predicated region
        $region97: #{tpu_custom_call.1} parent=75 // pred_check
          %p725 = pneg %p240
        $region98: #{tpu_custom_call.1} parent=75 // pred_check_branch
          %727 = sbr.rel (%p725) target = $region100
        $region99: #{tpu_custom_call.1} parent=75 // pred_region
          %728 = dma.done %s721, 2048
        $region100: #{tpu_custom_call.1} parent=75 // pred_fallthru
          _
        %s729 = sand.u32 %s42, 1
        %s730 = scalar_lea.sflag [#allocation13], %s729
        %s731 = sand.u32 %s263, 1
        %s732 = smul.addr %s731, 8
        %s733 = scalar_lea.vmem [#allocation14], %s732
        // Predicated region
        $region101: #{tpu_custom_call.1} parent=75 // pred_check
          %p734 = pneg %p276
        $region102: #{tpu_custom_call.1} parent=75 // pred_check_branch
          %736 = sbr.rel (%p734) target = $region104
        $region103: #{tpu_custom_call.1} parent=75 // pred_region
          %737 = dma.done %s730, 128
        $region104: #{tpu_custom_call.1} parent=75 // pred_fallthru
          _
        %s738 = sand.u32 %s42, 1
        %s739 = scalar_lea.sflag [#allocation16], %s738
        %s740 = sand.u32 %s299, 1
        %s741 = smul.addr %s740, 8
        %s742 = scalar_lea.vmem [#allocation15], %s741
        // Predicated region
        $region105: #{tpu_custom_call.1} parent=75 // pred_check
          %p743 = pneg %p312
        $region106: #{tpu_custom_call.1} parent=75 // pred_check_branch
          %745 = sbr.rel (%p743) target = $region108
        $region107: #{tpu_custom_call.1} parent=75 // pred_region
          %746 = dma.done %s739, 128
        $region108: #{tpu_custom_call.1} parent=75 // pred_fallthru
          _
        // Predicated region
        $region109: #{tpu_custom_call.1} parent=75 // pred_check
          %p747 = pneg %p333
        $region110: #{tpu_custom_call.1} parent=75 // pred_check_branch
          %749 = sbr.rel (%p747) target = $region112
        $region111: #{tpu_custom_call.1} parent=75 // pred_region
          %750 = dma.done [#allocation16], 16
        $region112: #{tpu_custom_call.1} parent=75 // pred_fallthru
          _
        // Predicated region
        $region113: #{tpu_custom_call.1} parent=75 // pred_check
          %p751 = pneg %p417
        $region114: #{tpu_custom_call.1} parent=75 // pred_check_branch
          %753 = sbr.rel (%p751) target = $region116
        $region115: #{tpu_custom_call.1} parent=75 // pred_region
          %754 = dma.done [#allocation19], 1024
        $region116: #{tpu_custom_call.1} parent=75 // pred_fallthru
          _
        %s755 = sand.u32 %s64, 1
        %s756 = scalar_lea.sflag [#allocation4], %s755
        %s757 = sand.u32 %s64, 1
        %s758 = smul.addr %s757, 128
        %s759 = scalar_lea.vmem [#allocation3], %s758
        %p760 = pneg %p77
        %p761 = pneg %p74
        %s762 = sand.u32 %s42, 1
        %s763 = scalar_lea.sflag [#allocation7], %s762
        %s764 = sand.u32 %s100, 1
        %s765 = smul.addr %s764, 8
        %s766 = scalar_lea.vmem [#allocation6], %s765
        %p767 = pneg %p113
        %p768 = pneg %p110
        %s769 = sand.u32 %s42, 1
        %s770 = scalar_lea.sflag [#allocation7], %s769
        %s771 = sand.u32 %s136, 1
        %s772 = smul.addr %s771, 8
        %s773 = scalar_lea.vmem [#allocation8], %s772
        %p774 = pneg %p149
        %p775 = pneg %p146
        %p776 = pneg %p170
        %p777 = pneg %p167
        %p778 = pneg %p191
        %p779 = pneg %p188
        %p780 = pneg %p212
        %p781 = pneg %p209
        %s782 = sand.u32 %s42, 1
        %s783 = scalar_lea.sflag [#allocation13], %s782
        %s784 = sand.u32 %s227, 1
        %s785 = smul.addr %s784, 128
        %s786 = scalar_lea.vmem [#allocation12], %s785
        %p787 = pneg %p240
        %p788 = pneg %p237
        %s789 = sand.u32 %s42, 1
        %s790 = scalar_lea.sflag [#allocation13], %s789
        %s791 = sand.u32 %s263, 1
        %s792 = smul.addr %s791, 8
        %s793 = scalar_lea.vmem [#allocation14], %s792
        %p794 = pneg %p276
        %p795 = pneg %p273
        %s796 = sand.u32 %s42, 1
        %s797 = scalar_lea.sflag [#allocation16], %s796
        %s798 = sand.u32 %s299, 1
        %s799 = smul.addr %s798, 8
        %s800 = scalar_lea.vmem [#allocation15], %s799
        %p801 = pneg %p312
        %p802 = pneg %p309
        %p803 = pneg %p333
        %p804 = pneg %p330
        %p805 = pneg %p354
        %p806 = pneg %p351
        %p807 = pneg %p375
        %p808 = pneg %p372
        %p809 = pneg %p396
        %p810 = pneg %p393
        %p811 = pneg %p417
        %p812 = pneg %p414
        %p813 = pneg %p445
        %p814 = pneg %p442
        %s815 = sand.u32 %s432, 1
        %s816 = scalar_lea.sflag [#allocation5], %s815
        %s817 = sand.u32 %s432, 1
        %s818 = smul.addr %s817, 128
        %s819 = scalar_lea.vmem [#allocation20], %s818
        %s820 = smul.u32 16, %s47
        %s821 = smul.u32 %s47, 16
        %s822 = ssub.s32 %s821, 1
        %p823 = scmp.gt.s32.totalorder %s822, 0
        %s824 = scalar_select %p823, %s822, 0
        %s825 = smul.u32 %s47, 16
        %s826 = sadd.s32 %s825, 16
        %p827 = scmp.lt.s32.totalorder %s826, 15
        %s828 = scalar_select %p827, %s826, 15
        %s829 = smul.u32 16, %s47
        %s830 = smul.u32 %s47, 16
        %s831 = ssub.s32 %s830, 1
        %p832 = scmp.gt.s32.totalorder %s831, 0
        %s833 = scalar_select %p832, %s831, 0
        %s834 = smul.u32 %s47, 16
        %s835 = sadd.s32 %s834, 16
        %p836 = scmp.lt.s32.totalorder %s835, 15
        %s837 = scalar_select %p836, %s835, 15
        %s838 = smul.u32 16, %s47
        %v840 = vld [vmem:[%s689] sm:$0xf]
        %v841 = vld [vmem:[%s689 + $0x4] sm:$0xf]
        %v842 = vld [vmem:[%s689 + $0x8] sm:$0xf]
        %v843 = vld [vmem:[%s689 + $0xc] sm:$0xf]
        %v844 = vld [vmem:[%s689 + $0x10] sm:$0xf]
        %v845 = vld [vmem:[%s689 + $0x14] sm:$0xf]
        %v846 = vld [vmem:[%s689 + $0x18] sm:$0xf]
        %v847 = vld [vmem:[%s689 + $0x1c] sm:$0xf]
        %v848 = vld [vmem:[%s689 + $0x20] sm:$0xf]
        %v849 = vld [vmem:[%s689 + $0x24] sm:$0xf]
        %v850 = vld [vmem:[%s689 + $0x28] sm:$0xf]
        %v851 = vld [vmem:[%s689 + $0x2c] sm:$0xf]
        %v852 = vld [vmem:[%s689 + $0x30] sm:$0xf]
        %v853 = vld [vmem:[%s689 + $0x34] sm:$0xf]
        %v854 = vld [vmem:[%s689 + $0x38] sm:$0xf]
        %v855 = vld [vmem:[%s689 + $0x3c] sm:$0xf]
        %v856 = vld [vmem:[%s689 + $0x40] sm:$0xf]
        %v857 = vld [vmem:[%s689 + $0x44] sm:$0xf]
        %v858 = vld [vmem:[%s689 + $0x48] sm:$0xf]
        %v859 = vld [vmem:[%s689 + $0x4c] sm:$0xf]
        %v860 = vld [vmem:[%s689 + $0x50] sm:$0xf]
        %v861 = vld [vmem:[%s689 + $0x54] sm:$0xf]
        %v862 = vld [vmem:[%s689 + $0x58] sm:$0xf]
        %v863 = vld [vmem:[%s689 + $0x5c] sm:$0xf]
        %v864 = vld [vmem:[%s689 + $0x60] sm:$0xf]
        %v865 = vld [vmem:[%s689 + $0x64] sm:$0xf]
        %v866 = vld [vmem:[%s689 + $0x68] sm:$0xf]
        %v867 = vld [vmem:[%s689 + $0x6c] sm:$0xf]
        %v868 = vld [vmem:[%s689 + $0x70] sm:$0xf]
        %v869 = vld [vmem:[%s689 + $0x74] sm:$0xf]
        %v870 = vld [vmem:[%s689 + $0x78] sm:$0xf]
        %v871 = vld [vmem:[%s689 + $0x7c] sm:$0xf]
        %v872 = vld [vmem:[#allocation9] sm:$0x1]
        %v873 = vld [vmem:[#allocation11] sm:$0x1]
        %v874 = vld [vmem:[%s5] sm:$0xf]
        %v875 = vld [vmem:[%s5 + $0x4] sm:$0xf]
        %v876 = vunpack.c.l.bf16 %v840
        %v877 = vunpack.c.l.bf16 %v841
        %v878 = vunpack.c.l.bf16 %v842
        %v879 = vunpack.c.l.bf16 %v843
        %v880 = vunpack.c.l.bf16 %v844
        %v881 = vunpack.c.l.bf16 %v845
        %v882 = vunpack.c.l.bf16 %v846
        %v883 = vunpack.c.l.bf16 %v847
        %v884 = vunpack.c.l.bf16 %v848
        %v885 = vunpack.c.l.bf16 %v849
        %v886 = vunpack.c.l.bf16 %v850
        %v887 = vunpack.c.l.bf16 %v851
        %v888 = vunpack.c.l.bf16 %v852
        %v889 = vunpack.c.l.bf16 %v853
        %v890 = vunpack.c.l.bf16 %v854
        %v891 = vunpack.c.l.bf16 %v855
        %v892 = vunpack.c.l.bf16 %v856
        %v893 = vunpack.c.l.bf16 %v857
        %v894 = vunpack.c.l.bf16 %v858
        %v895 = vunpack.c.l.bf16 %v859
        %v896 = vunpack.c.l.bf16 %v860
        %v897 = vunpack.c.l.bf16 %v861
        %v898 = vunpack.c.l.bf16 %v862
        %v899 = vunpack.c.l.bf16 %v863
        %v900 = vunpack.c.l.bf16 %v864
        %v901 = vunpack.c.l.bf16 %v865
        %v902 = vunpack.c.l.bf16 %v866
        %v903 = vunpack.c.l.bf16 %v867
        %v904 = vunpack.c.l.bf16 %v868
        %v905 = vunpack.c.l.bf16 %v869
        %v906 = vunpack.c.l.bf16 %v870
        %v907 = vunpack.c.l.bf16 %v871
        %v909 = vlaneseq
        %v910 = vshrl.u32 %v909, 7
        %v911 = vsub.s32 0, %v910
        %v912 = vrot.slane %v872, %v911
        %v914 = vmul.f32 %v876, %v912
        %v915 = vmul.f32 %v877, %v912
        %v916 = vmul.f32 %v878, %v912
        %v917 = vmul.f32 %v879, %v912
        %v918 = vmul.f32 %v880, %v912
        %v919 = vmul.f32 %v881, %v912
        %v920 = vmul.f32 %v882, %v912
        %v921 = vmul.f32 %v883, %v912
        %v922 = vmul.f32 %v884, %v912
        %v923 = vmul.f32 %v885, %v912
        %v924 = vmul.f32 %v886, %v912
        %v925 = vmul.f32 %v887, %v912
        %v926 = vmul.f32 %v888, %v912
        %v927 = vmul.f32 %v889, %v912
        %v928 = vmul.f32 %v890, %v912
        %v929 = vmul.f32 %v891, %v912
        %v930 = vmul.f32 %v892, %v912
        %v931 = vmul.f32 %v893, %v912
        %v932 = vmul.f32 %v894, %v912
        %v933 = vmul.f32 %v895, %v912
        %v934 = vmul.f32 %v896, %v912
        %v935 = vmul.f32 %v897, %v912
        %v936 = vmul.f32 %v898, %v912
        %v937 = vmul.f32 %v899, %v912
        %v938 = vmul.f32 %v900, %v912
        %v939 = vmul.f32 %v901, %v912
        %v940 = vmul.f32 %v902, %v912
        %v941 = vmul.f32 %v903, %v912
        %v942 = vmul.f32 %v904, %v912
        %v943 = vmul.f32 %v905, %v912
        %v944 = vmul.f32 %v906, %v912
        %v945 = vmul.f32 %v907, %v912
        %v947 = vlaneseq
        %v948 = vshrl.u32 %v947, 7
        %v949 = vsub.s32 0, %v948
        %v950 = vrot.slane %v873, %v949
        %v952 = vadd.f32 %v914, %v950
        %v953 = vadd.f32 %v915, %v950
        %v954 = vadd.f32 %v916, %v950
        %v955 = vadd.f32 %v917, %v950
        %v956 = vadd.f32 %v918, %v950
        %v957 = vadd.f32 %v919, %v950
        %v958 = vadd.f32 %v920, %v950
        %v959 = vadd.f32 %v921, %v950
        %v960 = vadd.f32 %v922, %v950
        %v961 = vadd.f32 %v923, %v950
        %v962 = vadd.f32 %v924, %v950
        %v963 = vadd.f32 %v925, %v950
        %v964 = vadd.f32 %v926, %v950
        %v965 = vadd.f32 %v927, %v950
        %v966 = vadd.f32 %v928, %v950
        %v967 = vadd.f32 %v929, %v950
        %v968 = vadd.f32 %v930, %v950
        %v969 = vadd.f32 %v931, %v950
        %v970 = vadd.f32 %v932, %v950
        %v971 = vadd.f32 %v933, %v950
        %v972 = vadd.f32 %v934, %v950
        %v973 = vadd.f32 %v935, %v950
        %v974 = vadd.f32 %v936, %v950
        %v975 = vadd.f32 %v937, %v950
        %v976 = vadd.f32 %v938, %v950
        %v977 = vadd.f32 %v939, %v950
        %v978 = vadd.f32 %v940, %v950
        %v979 = vadd.f32 %v941, %v950
        %v980 = vadd.f32 %v942, %v950
        %v981 = vadd.f32 %v943, %v950
        %v982 = vadd.f32 %v944, %v950
        %v983 = vadd.f32 %v945, %v950
        %v984 = vmax.f32 %v952, 0.0
        %v985 = vmax.f32 %v953, 0.0
        %v986 = vmax.f32 %v954, 0.0
        %v987 = vmax.f32 %v955, 0.0
        %v988 = vmax.f32 %v956, 0.0
        %v989 = vmax.f32 %v957, 0.0
        %v990 = vmax.f32 %v958, 0.0
        %v991 = vmax.f32 %v959, 0.0
        %v992 = vmax.f32 %v960, 0.0
        %v993 = vmax.f32 %v961, 0.0
        %v994 = vmax.f32 %v962, 0.0
        %v995 = vmax.f32 %v963, 0.0
        %v996 = vmax.f32 %v964, 0.0
        %v997 = vmax.f32 %v965, 0.0
        %v998 = vmax.f32 %v966, 0.0
        %v999 = vmax.f32 %v967, 0.0
        %v1000 = vmax.f32 %v968, 0.0
        %v1001 = vmax.f32 %v969, 0.0
        %v1002 = vmax.f32 %v970, 0.0
        %v1003 = vmax.f32 %v971, 0.0
        %v1004 = vmax.f32 %v972, 0.0
        %v1005 = vmax.f32 %v973, 0.0
        %v1006 = vmax.f32 %v974, 0.0
        %v1007 = vmax.f32 %v975, 0.0
        %v1008 = vmax.f32 %v976, 0.0
        %v1009 = vmax.f32 %v977, 0.0
        %v1010 = vmax.f32 %v978, 0.0
        %v1011 = vmax.f32 %v979, 0.0
        %v1012 = vmax.f32 %v980, 0.0
        %v1013 = vmax.f32 %v981, 0.0
        %v1014 = vmax.f32 %v982, 0.0
        %v1015 = vmax.f32 %v983, 0.0
        %v1016 = vpack.c.bf16 %v985, %v984
        %v1017 = vpack.c.bf16 %v987, %v986
        %v1018 = vpack.c.bf16 %v989, %v988
        %v1019 = vpack.c.bf16 %v991, %v990
        %v1020 = vpack.c.bf16 %v993, %v992
        %v1021 = vpack.c.bf16 %v995, %v994
        %v1022 = vpack.c.bf16 %v997, %v996
        %v1023 = vpack.c.bf16 %v999, %v998
        %v1024 = vpack.c.bf16 %v1001, %v1000
        %v1025 = vpack.c.bf16 %v1003, %v1002
        %v1026 = vpack.c.bf16 %v1005, %v1004
        %v1027 = vpack.c.bf16 %v1007, %v1006
        %v1028 = vpack.c.bf16 %v1009, %v1008
        %v1029 = vpack.c.bf16 %v1011, %v1010
        %v1030 = vpack.c.bf16 %v1013, %v1012
        %v1031 = vpack.c.bf16 %v1015, %v1014
        %v1032 = vld [vmem:[%s724] sm:$0xf]
        %v1033 = vld [vmem:[%s724 + $0x4] sm:$0xf]
        %v1034 = vld [vmem:[%s724 + $0x8] sm:$0xf]
        %v1035 = vld [vmem:[%s724 + $0xc] sm:$0xf]
        %v1036 = vld [vmem:[%s724 + $0x10] sm:$0xf]
        %v1037 = vld [vmem:[%s724 + $0x14] sm:$0xf]
        %v1038 = vld [vmem:[%s724 + $0x18] sm:$0xf]
        %v1039 = vld [vmem:[%s724 + $0x1c] sm:$0xf]
        %v1040 = vld [vmem:[%s724 + $0x20] sm:$0xf]
        %v1041 = vld [vmem:[%s724 + $0x24] sm:$0xf]
        %v1042 = vld [vmem:[%s724 + $0x28] sm:$0xf]
        %v1043 = vld [vmem:[%s724 + $0x2c] sm:$0xf]
        %v1044 = vld [vmem:[%s724 + $0x30] sm:$0xf]
        %v1045 = vld [vmem:[%s724 + $0x34] sm:$0xf]
        %v1046 = vld [vmem:[%s724 + $0x38] sm:$0xf]
        %v1047 = vld [vmem:[%s724 + $0x3c] sm:$0xf]
        %v1048 = vld [vmem:[%s724 + $0x40] sm:$0xf]
        %v1049 = vld [vmem:[%s724 + $0x44] sm:$0xf]
        %v1050 = vld [vmem:[%s724 + $0x48] sm:$0xf]
        %v1051 = vld [vmem:[%s724 + $0x4c] sm:$0xf]
        %v1052 = vld [vmem:[%s724 + $0x50] sm:$0xf]
        %v1053 = vld [vmem:[%s724 + $0x54] sm:$0xf]
        %v1054 = vld [vmem:[%s724 + $0x58] sm:$0xf]
        %v1055 = vld [vmem:[%s724 + $0x5c] sm:$0xf]
        %v1056 = vld [vmem:[%s724 + $0x60] sm:$0xf]
        %v1057 = vld [vmem:[%s724 + $0x64] sm:$0xf]
        %v1058 = vld [vmem:[%s724 + $0x68] sm:$0xf]
        %v1059 = vld [vmem:[%s724 + $0x6c] sm:$0xf]
        %v1060 = vld [vmem:[%s724 + $0x70] sm:$0xf]
        %v1061 = vld [vmem:[%s724 + $0x74] sm:$0xf]
        %v1062 = vld [vmem:[%s724 + $0x78] sm:$0xf]
        %v1063 = vld [vmem:[%s724 + $0x7c] sm:$0xf]
        %v1064 = vld [vmem:[#allocation17] sm:$0x1]
        %v1065 = vld [vmem:[%s10] sm:$0x1]
        %v1066 = vld [vmem:[%s11] sm:$0xf]
        %v1067 = vld [vmem:[%s11 + $0x4] sm:$0xf]
        %v1068 = vunpack.c.l.bf16 %v1032
        %v1069 = vunpack.c.l.bf16 %v1033
        %v1070 = vunpack.c.l.bf16 %v1034
        %v1071 = vunpack.c.l.bf16 %v1035
        %v1072 = vunpack.c.l.bf16 %v1036
        %v1073 = vunpack.c.l.bf16 %v1037
        %v1074 = vunpack.c.l.bf16 %v1038
        %v1075 = vunpack.c.l.bf16 %v1039
        %v1076 = vunpack.c.l.bf16 %v1040
        %v1077 = vunpack.c.l.bf16 %v1041
        %v1078 = vunpack.c.l.bf16 %v1042
        %v1079 = vunpack.c.l.bf16 %v1043
        %v1080 = vunpack.c.l.bf16 %v1044
        %v1081 = vunpack.c.l.bf16 %v1045
        %v1082 = vunpack.c.l.bf16 %v1046
        %v1083 = vunpack.c.l.bf16 %v1047
        %v1084 = vunpack.c.l.bf16 %v1048
        %v1085 = vunpack.c.l.bf16 %v1049
        %v1086 = vunpack.c.l.bf16 %v1050
        %v1087 = vunpack.c.l.bf16 %v1051
        %v1088 = vunpack.c.l.bf16 %v1052
        %v1089 = vunpack.c.l.bf16 %v1053
        %v1090 = vunpack.c.l.bf16 %v1054
        %v1091 = vunpack.c.l.bf16 %v1055
        %v1092 = vunpack.c.l.bf16 %v1056
        %v1093 = vunpack.c.l.bf16 %v1057
        %v1094 = vunpack.c.l.bf16 %v1058
        %v1095 = vunpack.c.l.bf16 %v1059
        %v1096 = vunpack.c.l.bf16 %v1060
        %v1097 = vunpack.c.l.bf16 %v1061
        %v1098 = vunpack.c.l.bf16 %v1062
        %v1099 = vunpack.c.l.bf16 %v1063
        %v1101 = vlaneseq
        %v1102 = vshrl.u32 %v1101, 7
        %v1103 = vsub.s32 0, %v1102
        %v1104 = vrot.slane %v1064, %v1103
        %v1106 = vmul.f32 %v1068, %v1104
        %v1107 = vmul.f32 %v1069, %v1104
        %v1108 = vmul.f32 %v1070, %v1104
        %v1109 = vmul.f32 %v1071, %v1104
        %v1110 = vmul.f32 %v1072, %v1104
        %v1111 = vmul.f32 %v1073, %v1104
        %v1112 = vmul.f32 %v1074, %v1104
        %v1113 = vmul.f32 %v1075, %v1104
        %v1114 = vmul.f32 %v1076, %v1104
        %v1115 = vmul.f32 %v1077, %v1104
        %v1116 = vmul.f32 %v1078, %v1104
        %v1117 = vmul.f32 %v1079, %v1104
        %v1118 = vmul.f32 %v1080, %v1104
        %v1119 = vmul.f32 %v1081, %v1104
        %v1120 = vmul.f32 %v1082, %v1104
        %v1121 = vmul.f32 %v1083, %v1104
        %v1122 = vmul.f32 %v1084, %v1104
        %v1123 = vmul.f32 %v1085, %v1104
        %v1124 = vmul.f32 %v1086, %v1104
        %v1125 = vmul.f32 %v1087, %v1104
        %v1126 = vmul.f32 %v1088, %v1104
        %v1127 = vmul.f32 %v1089, %v1104
        %v1128 = vmul.f32 %v1090, %v1104
        %v1129 = vmul.f32 %v1091, %v1104
        %v1130 = vmul.f32 %v1092, %v1104
        %v1131 = vmul.f32 %v1093, %v1104
        %v1132 = vmul.f32 %v1094, %v1104
        %v1133 = vmul.f32 %v1095, %v1104
        %v1134 = vmul.f32 %v1096, %v1104
        %v1135 = vmul.f32 %v1097, %v1104
        %v1136 = vmul.f32 %v1098, %v1104
        %v1137 = vmul.f32 %v1099, %v1104
        %v1139 = vlaneseq
        %v1140 = vshrl.u32 %v1139, 7
        %v1141 = vsub.s32 0, %v1140
        %v1142 = vrot.slane %v1065, %v1141
        %v1144 = vadd.f32 %v1106, %v1142
        %v1145 = vadd.f32 %v1107, %v1142
        %v1146 = vadd.f32 %v1108, %v1142
        %v1147 = vadd.f32 %v1109, %v1142
        %v1148 = vadd.f32 %v1110, %v1142
        %v1149 = vadd.f32 %v1111, %v1142
        %v1150 = vadd.f32 %v1112, %v1142
        %v1151 = vadd.f32 %v1113, %v1142
        %v1152 = vadd.f32 %v1114, %v1142
        %v1153 = vadd.f32 %v1115, %v1142
        %v1154 = vadd.f32 %v1116, %v1142
        %v1155 = vadd.f32 %v1117, %v1142
        %v1156 = vadd.f32 %v1118, %v1142
        %v1157 = vadd.f32 %v1119, %v1142
        %v1158 = vadd.f32 %v1120, %v1142
        %v1159 = vadd.f32 %v1121, %v1142
        %v1160 = vadd.f32 %v1122, %v1142
        %v1161 = vadd.f32 %v1123, %v1142
        %v1162 = vadd.f32 %v1124, %v1142
        %v1163 = vadd.f32 %v1125, %v1142
        %v1164 = vadd.f32 %v1126, %v1142
        %v1165 = vadd.f32 %v1127, %v1142
        %v1166 = vadd.f32 %v1128, %v1142
        %v1167 = vadd.f32 %v1129, %v1142
        %v1168 = vadd.f32 %v1130, %v1142
        %v1169 = vadd.f32 %v1131, %v1142
        %v1170 = vadd.f32 %v1132, %v1142
        %v1171 = vadd.f32 %v1133, %v1142
        %v1172 = vadd.f32 %v1134, %v1142
        %v1173 = vadd.f32 %v1135, %v1142
        %v1174 = vadd.f32 %v1136, %v1142
        %v1175 = vadd.f32 %v1137, %v1142
        %v1176 = vmax.f32 %v1144, 0.0
        %v1177 = vmax.f32 %v1145, 0.0
        %v1178 = vmax.f32 %v1146, 0.0
        %v1179 = vmax.f32 %v1147, 0.0
        %v1180 = vmax.f32 %v1148, 0.0
        %v1181 = vmax.f32 %v1149, 0.0
        %v1182 = vmax.f32 %v1150, 0.0
        %v1183 = vmax.f32 %v1151, 0.0
        %v1184 = vmax.f32 %v1152, 0.0
        %v1185 = vmax.f32 %v1153, 0.0
        %v1186 = vmax.f32 %v1154, 0.0
        %v1187 = vmax.f32 %v1155, 0.0
        %v1188 = vmax.f32 %v1156, 0.0
        %v1189 = vmax.f32 %v1157, 0.0
        %v1190 = vmax.f32 %v1158, 0.0
        %v1191 = vmax.f32 %v1159, 0.0
        %v1192 = vmax.f32 %v1160, 0.0
        %v1193 = vmax.f32 %v1161, 0.0
        %v1194 = vmax.f32 %v1162, 0.0
        %v1195 = vmax.f32 %v1163, 0.0
        %v1196 = vmax.f32 %v1164, 0.0
        %v1197 = vmax.f32 %v1165, 0.0
        %v1198 = vmax.f32 %v1166, 0.0
        %v1199 = vmax.f32 %v1167, 0.0
        %v1200 = vmax.f32 %v1168, 0.0
        %v1201 = vmax.f32 %v1169, 0.0
        %v1202 = vmax.f32 %v1170, 0.0
        %v1203 = vmax.f32 %v1171, 0.0
        %v1204 = vmax.f32 %v1172, 0.0
        %v1205 = vmax.f32 %v1173, 0.0
        %v1206 = vmax.f32 %v1174, 0.0
        %v1207 = vmax.f32 %v1175, 0.0
        %v1208 = vpack.c.bf16 %v1177, %v1176
        %v1209 = vpack.c.bf16 %v1179, %v1178
        %v1210 = vpack.c.bf16 %v1181, %v1180
        %v1211 = vpack.c.bf16 %v1183, %v1182
        %v1212 = vpack.c.bf16 %v1185, %v1184
        %v1213 = vpack.c.bf16 %v1187, %v1186
        %v1214 = vpack.c.bf16 %v1189, %v1188
        %v1215 = vpack.c.bf16 %v1191, %v1190
        %v1216 = vpack.c.bf16 %v1193, %v1192
        %v1217 = vpack.c.bf16 %v1195, %v1194
        %v1218 = vpack.c.bf16 %v1197, %v1196
        %v1219 = vpack.c.bf16 %v1199, %v1198
        %v1220 = vpack.c.bf16 %v1201, %v1200
        %v1221 = vpack.c.bf16 %v1203, %v1202
        %v1222 = vpack.c.bf16 %v1205, %v1204
        %v1223 = vpack.c.bf16 %v1207, %v1206
        %v1226 = vunpack.c.l.b16 %v1066
        %v1227 = vunpack.c.l.b16 %v1067
        %v1228 = vpack.c.b16 %v1227, %v1226
        %vm1230 = vcmask 130048
        %v1232 = vsel %vm1230, %v1208, 0
        %v1235 = vsel %vm1230, %v1209, 0
        %v1238 = vsel %vm1230, %v1210, 0
        %v1241 = vsel %vm1230, %v1211, 0
        %v1244 = vsel %vm1230, %v1212, 0
        %v1247 = vsel %vm1230, %v1213, 0
        %v1250 = vsel %vm1230, %v1214, 0
        %v1253 = vsel %vm1230, %v1215, 0
        %v1256 = vsel %vm1230, %v1216, 0
        %v1259 = vsel %vm1230, %v1217, 0
        %v1262 = vsel %vm1230, %v1218, 0
        %v1265 = vsel %vm1230, %v1219, 0
        %v1268 = vsel %vm1230, %v1220, 0
        %v1271 = vsel %vm1230, %v1221, 0
        %v1274 = vsel %vm1230, %v1222, 0
        %v1277 = vsel %vm1230, %v1223, 0
        %1279 = vmatprep.subr.bf16.mxu0 0
        %1280 = vmatpush1.bf16.msra.mxu0 0
        %1281 = vmatprep.subr.bf16.mxu0 0
        %1282 = vmatpush1.bf16.msra.mxu0 0
        %1283 = vmatprep.subr.bf16.mxu0 0
        %1284 = vmatpush1.bf16.msra.mxu0 0
        %1285 = vmatprep.subr.bf16.mxu0 0
        %1286 = vmatpush1.bf16.msra.mxu0 0
        %1287 = vmatprep.subr.bf16.mxu0 0
        %1288 = vmatpush1.bf16.msra.mxu0 0
        %1289 = vmatprep.subr.bf16.mxu0 0
        %1290 = vmatpush1.bf16.msra.mxu0 0
        %1291 = vmatprep.subr.bf16.mxu0 0
        %1292 = vmatpush1.bf16.msra.mxu0 0
        %1293 = vmatprep.subr.bf16.mxu0 0
        %1294 = vmatpush1.bf16.msra.mxu0 %v1228
        %1295 = vmatprep.subr.bf16.mxu0 0
        %1296 = vmatpush2.bf16.msra.mxu0 0
        %1297 = vmatprep.subr.bf16.mxu0 0
        %1298 = vmatpush2.bf16.msra.mxu0 0
        %1299 = vmatprep.subr.bf16.mxu0 0
        %1300 = vmatpush2.bf16.msra.mxu0 0
        %1301 = vmatprep.subr.bf16.mxu0 0
        %1302 = vmatpush2.bf16.msra.mxu0 0
        %1303 = vmatprep.subr.bf16.mxu0 0
        %1304 = vmatpush2.bf16.msra.mxu0 0
        %1305 = vmatprep.subr.bf16.mxu0 0
        %1306 = vmatpush2.bf16.msra.mxu0 0
        %1307 = vmatprep.subr.bf16.mxu0 0
        %1308 = vmatpush2.bf16.msra.mxu0 0
        %1309 = vmatprep.subr.bf16.mxu0 0
        %1310 = vmatpush2.bf16.msra.mxu0 0
        %1311 = vmatprep.mubr.bf16.mxu0 0
        %1312 = vmatmul.mubr.bf16.gmra.mxu0 %v1232
        %v1313 = vpop.f32.mrf.mxu0
        %v1314 = vadd.f32 0.0, %v1313
        %v1315 = vpop.f32.mrf.mxu0
        %v1316 = vpop.f32.mrf.mxu0
        %v1317 = vadd.f32 0.0, %v1316
        %v1318 = vpop.f32.mrf.mxu0
        %1319 = vmatprep.mubr.bf16.mxu0 0
        %1320 = vmatmul.mubr.bf16.gmra.mxu0 %v1235
        %v1321 = vpop.f32.mrf.mxu0
        %v1322 = vadd.f32 0.0, %v1321
        %v1323 = vpop.f32.mrf.mxu0
        %v1324 = vpop.f32.mrf.mxu0
        %v1325 = vadd.f32 0.0, %v1324
        %v1326 = vpop.f32.mrf.mxu0
        %1327 = vmatprep.mubr.bf16.mxu0 0
        %1328 = vmatmul.mubr.bf16.gmra.mxu0 %v1238
        %v1329 = vpop.f32.mrf.mxu0
        %v1330 = vadd.f32 0.0, %v1329
        %v1331 = vpop.f32.mrf.mxu0
        %v1332 = vpop.f32.mrf.mxu0
        %v1333 = vadd.f32 0.0, %v1332
        %v1334 = vpop.f32.mrf.mxu0
        %1335 = vmatprep.mubr.bf16.mxu0 0
        %1336 = vmatmul.mubr.bf16.gmra.mxu0 %v1241
        %v1337 = vpop.f32.mrf.mxu0
        %v1338 = vadd.f32 0.0, %v1337
        %v1339 = vpop.f32.mrf.mxu0
        %v1340 = vpop.f32.mrf.mxu0
        %v1341 = vadd.f32 0.0, %v1340
        %v1342 = vpop.f32.mrf.mxu0
        %1343 = vmatprep.mubr.bf16.mxu0 0
        %1344 = vmatmul.mubr.bf16.gmra.mxu0 %v1244
        %v1345 = vpop.f32.mrf.mxu0
        %v1346 = vadd.f32 0.0, %v1345
        %v1347 = vpop.f32.mrf.mxu0
        %v1348 = vpop.f32.mrf.mxu0
        %v1349 = vadd.f32 0.0, %v1348
        %v1350 = vpop.f32.mrf.mxu0
        %1351 = vmatprep.mubr.bf16.mxu0 0
        %1352 = vmatmul.mubr.bf16.gmra.mxu0 %v1247
        %v1353 = vpop.f32.mrf.mxu0
        %v1354 = vadd.f32 0.0, %v1353
        %v1355 = vpop.f32.mrf.mxu0
        %v1356 = vpop.f32.mrf.mxu0
        %v1357 = vadd.f32 0.0, %v1356
        %v1358 = vpop.f32.mrf.mxu0
        %1359 = vmatprep.mubr.bf16.mxu0 0
        %1360 = vmatmul.mubr.bf16.gmra.mxu0 %v1250
        %v1361 = vpop.f32.mrf.mxu0
        %v1362 = vadd.f32 0.0, %v1361
        %v1363 = vpop.f32.mrf.mxu0
        %v1364 = vpop.f32.mrf.mxu0
        %v1365 = vadd.f32 0.0, %v1364
        %v1366 = vpop.f32.mrf.mxu0
        %1367 = vmatprep.mubr.bf16.mxu0 0
        %1368 = vmatmul.mubr.bf16.gmra.mxu0 %v1253
        %v1369 = vpop.f32.mrf.mxu0
        %v1370 = vadd.f32 0.0, %v1369
        %v1371 = vpop.f32.mrf.mxu0
        %v1372 = vpop.f32.mrf.mxu0
        %v1373 = vadd.f32 0.0, %v1372
        %v1374 = vpop.f32.mrf.mxu0
        %1375 = vmatprep.mubr.bf16.mxu0 0
        %1376 = vmatmul.mubr.bf16.gmra.mxu0 %v1256
        %v1377 = vpop.f32.mrf.mxu0
        %v1378 = vadd.f32 0.0, %v1377
        %v1379 = vpop.f32.mrf.mxu0
        %v1380 = vpop.f32.mrf.mxu0
        %v1381 = vadd.f32 0.0, %v1380
        %v1382 = vpop.f32.mrf.mxu0
        %1383 = vmatprep.mubr.bf16.mxu0 0
        %1384 = vmatmul.mubr.bf16.gmra.mxu0 %v1259
        %v1385 = vpop.f32.mrf.mxu0
        %v1386 = vadd.f32 0.0, %v1385
        %v1387 = vpop.f32.mrf.mxu0
        %v1388 = vpop.f32.mrf.mxu0
        %v1389 = vadd.f32 0.0, %v1388
        %v1390 = vpop.f32.mrf.mxu0
        %1391 = vmatprep.mubr.bf16.mxu0 0
        %1392 = vmatmul.mubr.bf16.gmra.mxu0 %v1262
        %v1393 = vpop.f32.mrf.mxu0
        %v1394 = vadd.f32 0.0, %v1393
        %v1395 = vpop.f32.mrf.mxu0
        %v1396 = vpop.f32.mrf.mxu0
        %v1397 = vadd.f32 0.0, %v1396
        %v1398 = vpop.f32.mrf.mxu0
        %1399 = vmatprep.mubr.bf16.mxu0 0
        %1400 = vmatmul.mubr.bf16.gmra.mxu0 %v1265
        %v1401 = vpop.f32.mrf.mxu0
        %v1402 = vadd.f32 0.0, %v1401
        %v1403 = vpop.f32.mrf.mxu0
        %v1404 = vpop.f32.mrf.mxu0
        %v1405 = vadd.f32 0.0, %v1404
        %v1406 = vpop.f32.mrf.mxu0
        %1407 = vmatprep.mubr.bf16.mxu0 0
        %1408 = vmatmul.mubr.bf16.gmra.mxu0 %v1268
        %v1409 = vpop.f32.mrf.mxu0
        %v1410 = vadd.f32 0.0, %v1409
        %v1411 = vpop.f32.mrf.mxu0
        %v1412 = vpop.f32.mrf.mxu0
        %v1413 = vadd.f32 0.0, %v1412
        %v1414 = vpop.f32.mrf.mxu0
        %1415 = vmatprep.mubr.bf16.mxu0 0
        %1416 = vmatmul.mubr.bf16.gmra.mxu0 %v1271
        %v1417 = vpop.f32.mrf.mxu0
        %v1418 = vadd.f32 0.0, %v1417
        %v1419 = vpop.f32.mrf.mxu0
        %v1420 = vpop.f32.mrf.mxu0
        %v1421 = vadd.f32 0.0, %v1420
        %v1422 = vpop.f32.mrf.mxu0
        %1423 = vmatprep.mubr.bf16.mxu0 0
        %1424 = vmatmul.mubr.bf16.gmra.mxu0 %v1274
        %v1425 = vpop.f32.mrf.mxu0
        %v1426 = vadd.f32 0.0, %v1425
        %v1427 = vpop.f32.mrf.mxu0
        %v1428 = vpop.f32.mrf.mxu0
        %v1429 = vadd.f32 0.0, %v1428
        %v1430 = vpop.f32.mrf.mxu0
        %1431 = vmatprep.mubr.bf16.mxu0 0
        %1432 = vmatmul.mubr.bf16.gmra.mxu0 %v1277
        %v1433 = vpop.f32.mrf.mxu0
        %v1434 = vadd.f32 0.0, %v1433
        %v1435 = vpop.f32.mrf.mxu0
        %v1436 = vpop.f32.mrf.mxu0
        %v1437 = vadd.f32 0.0, %v1436
        %v1438 = vpop.f32.mrf.mxu0
        %1439 = vdwg.mxu0
        %v1442 = vunpack.c.l.b16 %v874
        %v1443 = vunpack.c.l.b16 %v875
        %v1444 = vpack.c.b16 %v1443, %v1442
        %v1447 = vsel %vm1230, %v1016, 0
        %v1450 = vsel %vm1230, %v1017, 0
        %v1453 = vsel %vm1230, %v1018, 0
        %v1456 = vsel %vm1230, %v1019, 0
        %v1459 = vsel %vm1230, %v1020, 0
        %v1462 = vsel %vm1230, %v1021, 0
        %v1465 = vsel %vm1230, %v1022, 0
        %v1468 = vsel %vm1230, %v1023, 0
        %v1471 = vsel %vm1230, %v1024, 0
        %v1474 = vsel %vm1230, %v1025, 0
        %v1477 = vsel %vm1230, %v1026, 0
        %v1480 = vsel %vm1230, %v1027, 0
        %v1483 = vsel %vm1230, %v1028, 0
        %v1486 = vsel %vm1230, %v1029, 0
        %v1489 = vsel %vm1230, %v1030, 0
        %v1492 = vsel %vm1230, %v1031, 0
        %1494 = vmatprep.subr.bf16.mxu0 0
        %1495 = vmatpush1.bf16.msra.mxu0 0
        %1496 = vmatprep.subr.bf16.mxu0 0
        %1497 = vmatpush1.bf16.msra.mxu0 0
        %1498 = vmatprep.subr.bf16.mxu0 0
        %1499 = vmatpush1.bf16.msra.mxu0 0
        %1500 = vmatprep.subr.bf16.mxu0 0
        %1501 = vmatpush1.bf16.msra.mxu0 0
        %1502 = vmatprep.subr.bf16.mxu0 0
        %1503 = vmatpush1.bf16.msra.mxu0 0
        %1504 = vmatprep.subr.bf16.mxu0 0
        %1505 = vmatpush1.bf16.msra.mxu0 0
        %1506 = vmatprep.subr.bf16.mxu0 0
        %1507 = vmatpush1.bf16.msra.mxu0 0
        %1508 = vmatprep.subr.bf16.mxu0 0
        %1509 = vmatpush1.bf16.msra.mxu0 %v1444
        %1510 = vmatprep.subr.bf16.mxu0 0
        %1511 = vmatpush2.bf16.msra.mxu0 0
        %1512 = vmatprep.subr.bf16.mxu0 0
        %1513 = vmatpush2.bf16.msra.mxu0 0
        %1514 = vmatprep.subr.bf16.mxu0 0
        %1515 = vmatpush2.bf16.msra.mxu0 0
        %1516 = vmatprep.subr.bf16.mxu0 0
        %1517 = vmatpush2.bf16.msra.mxu0 0
        %1518 = vmatprep.subr.bf16.mxu0 0
        %1519 = vmatpush2.bf16.msra.mxu0 0
        %1520 = vmatprep.subr.bf16.mxu0 0
        %1521 = vmatpush2.bf16.msra.mxu0 0
        %1522 = vmatprep.subr.bf16.mxu0 0
        %1523 = vmatpush2.bf16.msra.mxu0 0
        %1524 = vmatprep.subr.bf16.mxu0 0
        %1525 = vmatpush2.bf16.msra.mxu0 0
        %1526 = vmatprep.mubr.bf16.mxu0 0
        %1527 = vmatmul.mubr.bf16.gmra.mxu0 %v1447
        %v1528 = vpop.f32.mrf.mxu0
        %v1529 = vadd.f32 %v1314, %v1528
        %v1530 = vpop.f32.mrf.mxu0
        %v1531 = vpop.f32.mrf.mxu0
        %v1532 = vadd.f32 %v1317, %v1531
        %v1533 = vpop.f32.mrf.mxu0
        %1534 = vmatprep.mubr.bf16.mxu0 0
        %1535 = vmatmul.mubr.bf16.gmra.mxu0 %v1450
        %v1536 = vpop.f32.mrf.mxu0
        %v1537 = vadd.f32 %v1322, %v1536
        %v1538 = vpop.f32.mrf.mxu0
        %v1539 = vpop.f32.mrf.mxu0
        %v1540 = vadd.f32 %v1325, %v1539
        %v1541 = vpop.f32.mrf.mxu0
        %1542 = vmatprep.mubr.bf16.mxu0 0
        %1543 = vmatmul.mubr.bf16.gmra.mxu0 %v1453
        %v1544 = vpop.f32.mrf.mxu0
        %v1545 = vadd.f32 %v1330, %v1544
        %v1546 = vpop.f32.mrf.mxu0
        %v1547 = vpop.f32.mrf.mxu0
        %v1548 = vadd.f32 %v1333, %v1547
        %v1549 = vpop.f32.mrf.mxu0
        %1550 = vmatprep.mubr.bf16.mxu0 0
        %1551 = vmatmul.mubr.bf16.gmra.mxu0 %v1456
        %v1552 = vpop.f32.mrf.mxu0
        %v1553 = vadd.f32 %v1338, %v1552
        %v1554 = vpop.f32.mrf.mxu0
        %v1555 = vpop.f32.mrf.mxu0
        %v1556 = vadd.f32 %v1341, %v1555
        %v1557 = vpop.f32.mrf.mxu0
        %1558 = vmatprep.mubr.bf16.mxu0 0
        %1559 = vmatmul.mubr.bf16.gmra.mxu0 %v1459
        %v1560 = vpop.f32.mrf.mxu0
        %v1561 = vadd.f32 %v1346, %v1560
        %v1562 = vpop.f32.mrf.mxu0
        %v1563 = vpop.f32.mrf.mxu0
        %v1564 = vadd.f32 %v1349, %v1563
        %v1565 = vpop.f32.mrf.mxu0
        %1566 = vmatprep.mubr.bf16.mxu0 0
        %1567 = vmatmul.mubr.bf16.gmra.mxu0 %v1462
        %v1568 = vpop.f32.mrf.mxu0
        %v1569 = vadd.f32 %v1354, %v1568
        %v1570 = vpop.f32.mrf.mxu0
        %v1571 = vpop.f32.mrf.mxu0
        %v1572 = vadd.f32 %v1357, %v1571
        %v1573 = vpop.f32.mrf.mxu0
        %1574 = vmatprep.mubr.bf16.mxu0 0
        %1575 = vmatmul.mubr.bf16.gmra.mxu0 %v1465
        %v1576 = vpop.f32.mrf.mxu0
        %v1577 = vadd.f32 %v1362, %v1576
        %v1578 = vpop.f32.mrf.mxu0
        %v1579 = vpop.f32.mrf.mxu0
        %v1580 = vadd.f32 %v1365, %v1579
        %v1581 = vpop.f32.mrf.mxu0
        %1582 = vmatprep.mubr.bf16.mxu0 0
        %1583 = vmatmul.mubr.bf16.gmra.mxu0 %v1468
        %v1584 = vpop.f32.mrf.mxu0
        %v1585 = vadd.f32 %v1370, %v1584
        %v1586 = vpop.f32.mrf.mxu0
        %v1587 = vpop.f32.mrf.mxu0
        %v1588 = vadd.f32 %v1373, %v1587
        %v1589 = vpop.f32.mrf.mxu0
        %1590 = vmatprep.mubr.bf16.mxu0 0
        %1591 = vmatmul.mubr.bf16.gmra.mxu0 %v1471
        %v1592 = vpop.f32.mrf.mxu0
        %v1593 = vadd.f32 %v1378, %v1592
        %v1594 = vpop.f32.mrf.mxu0
        %v1595 = vpop.f32.mrf.mxu0
        %v1596 = vadd.f32 %v1381, %v1595
        %v1597 = vpop.f32.mrf.mxu0
        %1598 = vmatprep.mubr.bf16.mxu0 0
        %1599 = vmatmul.mubr.bf16.gmra.mxu0 %v1474
        %v1600 = vpop.f32.mrf.mxu0
        %v1601 = vadd.f32 %v1386, %v1600
        %v1602 = vpop.f32.mrf.mxu0
        %v1603 = vpop.f32.mrf.mxu0
        %v1604 = vadd.f32 %v1389, %v1603
        %v1605 = vpop.f32.mrf.mxu0
        %1606 = vmatprep.mubr.bf16.mxu0 0
        %1607 = vmatmul.mubr.bf16.gmra.mxu0 %v1477
        %v1608 = vpop.f32.mrf.mxu0
        %v1609 = vadd.f32 %v1394, %v1608
        %v1610 = vpop.f32.mrf.mxu0
        %v1611 = vpop.f32.mrf.mxu0
        %v1612 = vadd.f32 %v1397, %v1611
        %v1613 = vpop.f32.mrf.mxu0
        %1614 = vmatprep.mubr.bf16.mxu0 0
        %1615 = vmatmul.mubr.bf16.gmra.mxu0 %v1480
        %v1616 = vpop.f32.mrf.mxu0
        %v1617 = vadd.f32 %v1402, %v1616
        %v1618 = vpop.f32.mrf.mxu0
        %v1619 = vpop.f32.mrf.mxu0
        %v1620 = vadd.f32 %v1405, %v1619
        %v1621 = vpop.f32.mrf.mxu0
        %1622 = vmatprep.mubr.bf16.mxu0 0
        %1623 = vmatmul.mubr.bf16.gmra.mxu0 %v1483
        %v1624 = vpop.f32.mrf.mxu0
        %v1625 = vadd.f32 %v1410, %v1624
        %v1626 = vpop.f32.mrf.mxu0
        %v1627 = vpop.f32.mrf.mxu0
        %v1628 = vadd.f32 %v1413, %v1627
        %v1629 = vpop.f32.mrf.mxu0
        %1630 = vmatprep.mubr.bf16.mxu0 0
        %1631 = vmatmul.mubr.bf16.gmra.mxu0 %v1486
        %v1632 = vpop.f32.mrf.mxu0
        %v1633 = vadd.f32 %v1418, %v1632
        %v1634 = vpop.f32.mrf.mxu0
        %v1635 = vpop.f32.mrf.mxu0
        %v1636 = vadd.f32 %v1421, %v1635
        %v1637 = vpop.f32.mrf.mxu0
        %1638 = vmatprep.mubr.bf16.mxu0 0
        %1639 = vmatmul.mubr.bf16.gmra.mxu0 %v1489
        %v1640 = vpop.f32.mrf.mxu0
        %v1641 = vadd.f32 %v1426, %v1640
        %v1642 = vpop.f32.mrf.mxu0
        %v1643 = vpop.f32.mrf.mxu0
        %v1644 = vadd.f32 %v1429, %v1643
        %v1645 = vpop.f32.mrf.mxu0
        %1646 = vmatprep.mubr.bf16.mxu0 0
        %1647 = vmatmul.mubr.bf16.gmra.mxu0 %v1492
        %v1648 = vpop.f32.mrf.mxu0
        %v1649 = vadd.f32 %v1434, %v1648
        %v1650 = vpop.f32.mrf.mxu0
        %v1651 = vpop.f32.mrf.mxu0
        %v1652 = vadd.f32 %v1437, %v1651
        %v1653 = vpop.f32.mrf.mxu0
        %1654 = vdwg.mxu0
        %v1655 = vld [vmem:[%s12] sm:$0x1]
        %v1657 = vlaneseq
        %v1658 = vshrl.u32 %v1657, 7
        %v1659 = vsub.s32 0, %v1658
        %v1660 = vrot.slane %v1655, %v1659
        %v1662 = vadd.f32 %v1529, %v1660
        %v1663 = vadd.f32 %v1532, %v1660
        %v1664 = vadd.f32 %v1537, %v1660
        %v1665 = vadd.f32 %v1540, %v1660
        %v1666 = vadd.f32 %v1545, %v1660
        %v1667 = vadd.f32 %v1548, %v1660
        %v1668 = vadd.f32 %v1553, %v1660
        %v1669 = vadd.f32 %v1556, %v1660
        %v1670 = vadd.f32 %v1561, %v1660
        %v1671 = vadd.f32 %v1564, %v1660
        %v1672 = vadd.f32 %v1569, %v1660
        %v1673 = vadd.f32 %v1572, %v1660
        %v1674 = vadd.f32 %v1577, %v1660
        %v1675 = vadd.f32 %v1580, %v1660
        %v1676 = vadd.f32 %v1585, %v1660
        %v1677 = vadd.f32 %v1588, %v1660
        %v1678 = vadd.f32 %v1593, %v1660
        %v1679 = vadd.f32 %v1596, %v1660
        %v1680 = vadd.f32 %v1601, %v1660
        %v1681 = vadd.f32 %v1604, %v1660
        %v1682 = vadd.f32 %v1609, %v1660
        %v1683 = vadd.f32 %v1612, %v1660
        %v1684 = vadd.f32 %v1617, %v1660
        %v1685 = vadd.f32 %v1620, %v1660
        %v1686 = vadd.f32 %v1625, %v1660
        %v1687 = vadd.f32 %v1628, %v1660
        %v1688 = vadd.f32 %v1633, %v1660
        %v1689 = vadd.f32 %v1636, %v1660
        %v1690 = vadd.f32 %v1641, %v1660
        %v1691 = vadd.f32 %v1644, %v1660
        %v1692 = vadd.f32 %v1649, %v1660
        %v1693 = vadd.f32 %v1652, %v1660
        %v1694 = vmax.f32 %v1662, 0.0
        %v1695 = vmax.f32 %v1663, 0.0
        %v1696 = vmax.f32 %v1664, 0.0
        %v1697 = vmax.f32 %v1665, 0.0
        %v1698 = vmax.f32 %v1666, 0.0
        %v1699 = vmax.f32 %v1667, 0.0
        %v1700 = vmax.f32 %v1668, 0.0
        %v1701 = vmax.f32 %v1669, 0.0
        %v1702 = vmax.f32 %v1670, 0.0
        %v1703 = vmax.f32 %v1671, 0.0
        %v1704 = vmax.f32 %v1672, 0.0
        %v1705 = vmax.f32 %v1673, 0.0
        %v1706 = vmax.f32 %v1674, 0.0
        %v1707 = vmax.f32 %v1675, 0.0
        %v1708 = vmax.f32 %v1676, 0.0
        %v1709 = vmax.f32 %v1677, 0.0
        %v1710 = vmax.f32 %v1678, 0.0
        %v1711 = vmax.f32 %v1679, 0.0
        %v1712 = vmax.f32 %v1680, 0.0
        %v1713 = vmax.f32 %v1681, 0.0
        %v1714 = vmax.f32 %v1682, 0.0
        %v1715 = vmax.f32 %v1683, 0.0
        %v1716 = vmax.f32 %v1684, 0.0
        %v1717 = vmax.f32 %v1685, 0.0
        %v1718 = vmax.f32 %v1686, 0.0
        %v1719 = vmax.f32 %v1687, 0.0
        %v1720 = vmax.f32 %v1688, 0.0
        %v1721 = vmax.f32 %v1689, 0.0
        %v1722 = vmax.f32 %v1690, 0.0
        %v1723 = vmax.f32 %v1691, 0.0
        %v1724 = vmax.f32 %v1692, 0.0
        %v1725 = vmax.f32 %v1693, 0.0
        %v1726 = vpack.c.bf16 %v1695, %v1694
        %v1727 = vpack.c.bf16 %v1697, %v1696
        %v1728 = vpack.c.bf16 %v1699, %v1698
        %v1729 = vpack.c.bf16 %v1701, %v1700
        %v1730 = vpack.c.bf16 %v1703, %v1702
        %v1731 = vpack.c.bf16 %v1705, %v1704
        %v1732 = vpack.c.bf16 %v1707, %v1706
        %v1733 = vpack.c.bf16 %v1709, %v1708
        %v1734 = vpack.c.bf16 %v1711, %v1710
        %v1735 = vpack.c.bf16 %v1713, %v1712
        %v1736 = vpack.c.bf16 %v1715, %v1714
        %v1737 = vpack.c.bf16 %v1717, %v1716
        %v1738 = vpack.c.bf16 %v1719, %v1718
        %v1739 = vpack.c.bf16 %v1721, %v1720
        %v1740 = vpack.c.bf16 %v1723, %v1722
        %v1741 = vpack.c.bf16 %v1725, %v1724
        %v1758 = vunpack.c.l.b16 %v1726
        %v1759 = vunpack.c.h.b16 %v1726
        %v1760 = vunpack.c.l.b16 %v1727
        %v1761 = vunpack.c.h.b16 %v1727
        %v1762 = vunpack.c.l.b16 %v1728
        %v1763 = vunpack.c.h.b16 %v1728
        %v1764 = vunpack.c.l.b16 %v1729
        %v1765 = vunpack.c.h.b16 %v1729
        %v1766 = vunpack.c.l.b16 %v1730
        %v1767 = vunpack.c.h.b16 %v1730
        %v1768 = vunpack.c.l.b16 %v1731
        %v1769 = vunpack.c.h.b16 %v1731
        %v1770 = vunpack.c.l.b16 %v1732
        %v1771 = vunpack.c.h.b16 %v1732
        %v1772 = vunpack.c.l.b16 %v1733
        %v1773 = vunpack.c.h.b16 %v1733
        %v1774 = vunpack.c.l.b16 %v1734
        %v1775 = vunpack.c.h.b16 %v1734
        %v1776 = vunpack.c.l.b16 %v1735
        %v1777 = vunpack.c.h.b16 %v1735
        %v1778 = vunpack.c.l.b16 %v1736
        %v1779 = vunpack.c.h.b16 %v1736
        %v1780 = vunpack.c.l.b16 %v1737
        %v1781 = vunpack.c.h.b16 %v1737
        %v1782 = vunpack.c.l.b16 %v1738
        %v1783 = vunpack.c.h.b16 %v1738
        %v1784 = vunpack.c.l.b16 %v1739
        %v1785 = vunpack.c.h.b16 %v1739
        %v1786 = vunpack.c.l.b16 %v1740
        %v1787 = vunpack.c.h.b16 %v1740
        %v1788 = vunpack.c.l.b16 %v1741
        %v1789 = vunpack.c.h.b16 %v1741
        %v1790 = vpack.c.b16 %v1758, %v1758
        %v1791 = vpack.c.b16 %v1759, %v1759
        %v1792 = vpack.c.b16 %v1760, %v1760
        %v1793 = vpack.c.b16 %v1761, %v1761
        %v1794 = vpack.c.b16 %v1762, %v1762
        %v1795 = vpack.c.b16 %v1763, %v1763
        %v1796 = vpack.c.b16 %v1764, %v1764
        %v1797 = vpack.c.b16 %v1765, %v1765
        %v1798 = vpack.c.b16 %v1766, %v1766
        %v1799 = vpack.c.b16 %v1767, %v1767
        %v1800 = vpack.c.b16 %v1768, %v1768
        %v1801 = vpack.c.b16 %v1769, %v1769
        %v1802 = vpack.c.b16 %v1770, %v1770
        %v1803 = vpack.c.b16 %v1771, %v1771
        %v1804 = vpack.c.b16 %v1772, %v1772
        %v1805 = vpack.c.b16 %v1773, %v1773
        %v1806 = vpack.c.b16 %v1774, %v1774
        %v1807 = vpack.c.b16 %v1775, %v1775
        %v1808 = vpack.c.b16 %v1776, %v1776
        %v1809 = vpack.c.b16 %v1777, %v1777
        %v1810 = vpack.c.b16 %v1778, %v1778
        %v1811 = vpack.c.b16 %v1779, %v1779
        %v1812 = vpack.c.b16 %v1780, %v1780
        %v1813 = vpack.c.b16 %v1781, %v1781
        %v1814 = vpack.c.b16 %v1782, %v1782
        %v1815 = vpack.c.b16 %v1783, %v1783
        %v1816 = vpack.c.b16 %v1784, %v1784
        %v1817 = vpack.c.b16 %v1785, %v1785
        %v1818 = vpack.c.b16 %v1786, %v1786
        %v1819 = vpack.c.b16 %v1787, %v1787
        %v1820 = vpack.c.b16 %v1788, %v1788
        %v1821 = vpack.c.b16 %v1789, %v1789
        %s1854 = scalar_lea.vmem [#allocation2], 8
        %vm1855 = vcmask 519168
        %1856 = vst.msk [vmem:[%s1854] sm:$0xf] %vm1855, %v1790
        %1857 = vst.msk [vmem:[%s1854 + $0x4] sm:$0xf] %vm1855, %v1791
        %1858 = vst.msk [vmem:[%s1854 + $0x8] sm:$0xf] %vm1855, %v1792
        %1859 = vst.msk [vmem:[%s1854 + $0xc] sm:$0xf] %vm1855, %v1793
        %1860 = vst.msk [vmem:[%s1854 + $0x10] sm:$0xf] %vm1855, %v1794
        %1861 = vst.msk [vmem:[%s1854 + $0x14] sm:$0xf] %vm1855, %v1795
        %1862 = vst.msk [vmem:[%s1854 + $0x18] sm:$0xf] %vm1855, %v1796
        %1863 = vst.msk [vmem:[%s1854 + $0x1c] sm:$0xf] %vm1855, %v1797
        %1864 = vst.msk [vmem:[%s1854 + $0x20] sm:$0xf] %vm1855, %v1798
        %1865 = vst.msk [vmem:[%s1854 + $0x24] sm:$0xf] %vm1855, %v1799
        %1866 = vst.msk [vmem:[%s1854 + $0x28] sm:$0xf] %vm1855, %v1800
        %1867 = vst.msk [vmem:[%s1854 + $0x2c] sm:$0xf] %vm1855, %v1801
        %1868 = vst.msk [vmem:[%s1854 + $0x30] sm:$0xf] %vm1855, %v1802
        %1869 = vst.msk [vmem:[%s1854 + $0x34] sm:$0xf] %vm1855, %v1803
        %1870 = vst.msk [vmem:[%s1854 + $0x38] sm:$0xf] %vm1855, %v1804
        %1871 = vst.msk [vmem:[%s1854 + $0x3c] sm:$0xf] %vm1855, %v1805
        %1872 = vst.msk [vmem:[%s1854 + $0x40] sm:$0xf] %vm1855, %v1806
        %1873 = vst.msk [vmem:[%s1854 + $0x44] sm:$0xf] %vm1855, %v1807
        %1874 = vst.msk [vmem:[%s1854 + $0x48] sm:$0xf] %vm1855, %v1808
        %1875 = vst.msk [vmem:[%s1854 + $0x4c] sm:$0xf] %vm1855, %v1809
        %1876 = vst.msk [vmem:[%s1854 + $0x50] sm:$0xf] %vm1855, %v1810
        %1877 = vst.msk [vmem:[%s1854 + $0x54] sm:$0xf] %vm1855, %v1811
        %1878 = vst.msk [vmem:[%s1854 + $0x58] sm:$0xf] %vm1855, %v1812
        %1879 = vst.msk [vmem:[%s1854 + $0x5c] sm:$0xf] %vm1855, %v1813
        %1880 = vst.msk [vmem:[%s1854 + $0x60] sm:$0xf] %vm1855, %v1814
        %1881 = vst.msk [vmem:[%s1854 + $0x64] sm:$0xf] %vm1855, %v1815
        %1882 = vst.msk [vmem:[%s1854 + $0x68] sm:$0xf] %vm1855, %v1816
        %1883 = vst.msk [vmem:[%s1854 + $0x6c] sm:$0xf] %vm1855, %v1817
        %1884 = vst.msk [vmem:[%s1854 + $0x70] sm:$0xf] %vm1855, %v1818
        %1885 = vst.msk [vmem:[%s1854 + $0x74] sm:$0xf] %vm1855, %v1819
        %1886 = vst.msk [vmem:[%s1854 + $0x78] sm:$0xf] %vm1855, %v1820
        %1887 = vst.msk [vmem:[%s1854 + $0x7c] sm:$0xf] %vm1855, %v1821
        %p1888 = scmp.gt.s32.totalorder %s47, 0
        %s1889 = scalar_select %p1888, 1, 0
        %s1890 = scvt.s32.f32 %s1889
        %v1891 = vld [vmem:[%s698] sm:$0xf]
        %v1892 = vld [vmem:[%s698 + $0x4] sm:$0xf]
        %v1893 = vld [vmem:[#allocation9] sm:$0x1]
        %v1894 = vld [vmem:[#allocation11] sm:$0x1]
        %v1895 = vld [vmem:[%s5] sm:$0xf]
        %v1896 = vld [vmem:[%s5 + $0x4] sm:$0xf]
        %v1897 = vunpack.c.l.bf16 %v1891
        %v1898 = vunpack.c.l.bf16 %v1892
        %v1900 = vlaneseq
        %v1901 = vshrl.u32 %v1900, 7
        %v1902 = vsub.s32 0, %v1901
        %v1903 = vrot.slane %v1893, %v1902
        %v1905 = vmul.f32 %v1897, %v1903
        %v1906 = vmul.f32 %v1898, %v1903
        %v1908 = vlaneseq
        %v1909 = vshrl.u32 %v1908, 7
        %v1910 = vsub.s32 0, %v1909
        %v1911 = vrot.slane %v1894, %v1910
        %v1913 = vadd.f32 %v1905, %v1911
        %v1914 = vadd.f32 %v1906, %v1911
        %v1915 = vmax.f32 %v1913, 0.0
        %v1916 = vmax.f32 %v1914, 0.0
        %v1917 = vpack.c.bf16 %v1916, %v1915
        %v1918 = vld [vmem:[%s733] sm:$0xf]
        %v1919 = vld [vmem:[%s733 + $0x4] sm:$0xf]
        %v1920 = vld [vmem:[#allocation17] sm:$0x1]
        %v1921 = vld [vmem:[%s10] sm:$0x1]
        %v1922 = vld [vmem:[%s11] sm:$0xf]
        %v1923 = vld [vmem:[%s11 + $0x4] sm:$0xf]
        %v1924 = vunpack.c.l.bf16 %v1918
        %v1925 = vunpack.c.l.bf16 %v1919
        %v1927 = vlaneseq
        %v1928 = vshrl.u32 %v1927, 7
        %v1929 = vsub.s32 0, %v1928
        %v1930 = vrot.slane %v1920, %v1929
        %v1932 = vmul.f32 %v1924, %v1930
        %v1933 = vmul.f32 %v1925, %v1930
        %v1935 = vlaneseq
        %v1936 = vshrl.u32 %v1935, 7
        %v1937 = vsub.s32 0, %v1936
        %v1938 = vrot.slane %v1921, %v1937
        %v1940 = vadd.f32 %v1932, %v1938
        %v1941 = vadd.f32 %v1933, %v1938
        %v1942 = vmax.f32 %v1940, 0.0
        %v1943 = vmax.f32 %v1941, 0.0
        %v1944 = vpack.c.bf16 %v1943, %v1942
        %v1947 = vunpack.c.l.b16 %v1922
        %v1948 = vunpack.c.l.b16 %v1923
        %v1949 = vpack.c.b16 %v1948, %v1947
        %v1952 = vsel %vm1230, %v1944, 0
        %1954 = vmatprep.subr.bf16.mxu0 0
        %1955 = vmatpush1.bf16.msra.mxu0 0
        %1956 = vmatprep.subr.bf16.mxu0 0
        %1957 = vmatpush1.bf16.msra.mxu0 0
        %1958 = vmatprep.subr.bf16.mxu0 0
        %1959 = vmatpush1.bf16.msra.mxu0 0
        %1960 = vmatprep.subr.bf16.mxu0 0
        %1961 = vmatpush1.bf16.msra.mxu0 0
        %1962 = vmatprep.subr.bf16.mxu0 0
        %1963 = vmatpush1.bf16.msra.mxu0 0
        %1964 = vmatprep.subr.bf16.mxu0 0
        %1965 = vmatpush1.bf16.msra.mxu0 0
        %1966 = vmatprep.subr.bf16.mxu0 0
        %1967 = vmatpush1.bf16.msra.mxu0 0
        %1968 = vmatprep.subr.bf16.mxu0 0
        %1969 = vmatpush1.bf16.msra.mxu0 %v1949
        %1970 = vmatprep.subr.bf16.mxu0 0
        %1971 = vmatpush2.bf16.msra.mxu0 0
        %1972 = vmatprep.subr.bf16.mxu0 0
        %1973 = vmatpush2.bf16.msra.mxu0 0
        %1974 = vmatprep.subr.bf16.mxu0 0
        %1975 = vmatpush2.bf16.msra.mxu0 0
        %1976 = vmatprep.subr.bf16.mxu0 0
        %1977 = vmatpush2.bf16.msra.mxu0 0
        %1978 = vmatprep.subr.bf16.mxu0 0
        %1979 = vmatpush2.bf16.msra.mxu0 0
        %1980 = vmatprep.subr.bf16.mxu0 0
        %1981 = vmatpush2.bf16.msra.mxu0 0
        %1982 = vmatprep.subr.bf16.mxu0 0
        %1983 = vmatpush2.bf16.msra.mxu0 0
        %1984 = vmatprep.subr.bf16.mxu0 0
        %1985 = vmatpush2.bf16.msra.mxu0 0
        %1986 = vmatprep.mubr.bf16.mxu0 0
        %1987 = vmatmul.mubr.bf16.gmra.mxu0 %v1952
        %v1988 = vpop.f32.mrf.mxu0
        %v1989 = vadd.f32 0.0, %v1988
        %v1990 = vpop.f32.mrf.mxu0
        %v1991 = vpop.f32.mrf.mxu0
        %v1992 = vadd.f32 0.0, %v1991
        %v1993 = vpop.f32.mrf.mxu0
        %1994 = vdwg.mxu0
        %v1997 = vunpack.c.l.b16 %v1895
        %v1998 = vunpack.c.l.b16 %v1896
        %v1999 = vpack.c.b16 %v1998, %v1997
        %v2002 = vsel %vm1230, %v1917, 0
        %2004 = vmatprep.subr.bf16.mxu0 0
        %2005 = vmatpush1.bf16.msra.mxu0 0
        %2006 = vmatprep.subr.bf16.mxu0 0
        %2007 = vmatpush1.bf16.msra.mxu0 0
        %2008 = vmatprep.subr.bf16.mxu0 0
        %2009 = vmatpush1.bf16.msra.mxu0 0
        %2010 = vmatprep.subr.bf16.mxu0 0
        %2011 = vmatpush1.bf16.msra.mxu0 0
        %2012 = vmatprep.subr.bf16.mxu0 0
        %2013 = vmatpush1.bf16.msra.mxu0 0
        %2014 = vmatprep.subr.bf16.mxu0 0
        %2015 = vmatpush1.bf16.msra.mxu0 0
        %2016 = vmatprep.subr.bf16.mxu0 0
        %2017 = vmatpush1.bf16.msra.mxu0 0
        %2018 = vmatprep.subr.bf16.mxu0 0
        %2019 = vmatpush1.bf16.msra.mxu0 %v1999
        %2020 = vmatprep.subr.bf16.mxu0 0
        %2021 = vmatpush2.bf16.msra.mxu0 0
        %2022 = vmatprep.subr.bf16.mxu0 0
        %2023 = vmatpush2.bf16.msra.mxu0 0
        %2024 = vmatprep.subr.bf16.mxu0 0
        %2025 = vmatpush2.bf16.msra.mxu0 0
        %2026 = vmatprep.subr.bf16.mxu0 0
        %2027 = vmatpush2.bf16.msra.mxu0 0
        %2028 = vmatprep.subr.bf16.mxu0 0
        %2029 = vmatpush2.bf16.msra.mxu0 0
        %2030 = vmatprep.subr.bf16.mxu0 0
        %2031 = vmatpush2.bf16.msra.mxu0 0
        %2032 = vmatprep.subr.bf16.mxu0 0
        %2033 = vmatpush2.bf16.msra.mxu0 0
        %2034 = vmatprep.subr.bf16.mxu0 0
        %2035 = vmatpush2.bf16.msra.mxu0 0
        %2036 = vmatprep.mubr.bf16.mxu0 0
        %2037 = vmatmul.mubr.bf16.gmra.mxu0 %v2002
        %v2038 = vpop.f32.mrf.mxu0
        %v2039 = vadd.f32 %v1989, %v2038
        %v2040 = vpop.f32.mrf.mxu0
        %v2041 = vpop.f32.mrf.mxu0
        %v2042 = vadd.f32 %v1992, %v2041
        %v2043 = vpop.f32.mrf.mxu0
        %2044 = vdwg.mxu0
        %v2045 = vld [vmem:[%s12] sm:$0x1]
        %v2047 = vlaneseq
        %v2048 = vshrl.u32 %v2047, 7
        %v2049 = vsub.s32 0, %v2048
        %v2050 = vrot.slane %v2045, %v2049
        %v2052 = vadd.f32 %v2039, %v2050
        %v2053 = vadd.f32 %v2042, %v2050
        %v2054 = vmax.f32 %v2052, 0.0
        %v2055 = vmax.f32 %v2053, 0.0
        %v2056 = vstv %s1890
        %v2057 = vmul.f32 %v2054, %v2056
        %v2058 = vmul.f32 %v2055, %v2056
        %v2059 = vpack.c.bf16 %v2058, %v2057
        %v2061 = vunpack.c.l.b16 %v2059
        %v2062 = vunpack.c.h.b16 %v2059
        %v2063 = vpack.c.b16 %v2061, %v2061
        %v2064 = vpack.c.b16 %v2062, %v2062
        %2067 = vst.msk [vmem:[#allocation2] sm:$0xf] %vm1855, %v2063
        %2068 = vst.msk [vmem:[#allocation2 + $0x4] sm:$0xf] %vm1855, %v2064
        %p2069 = scmp.lt.s32.totalorder %s47, 0
        %s2070 = scalar_select %p2069, 1, 0
        %s2071 = scvt.s32.f32 %s2070
        %v2072 = vld [vmem:[%s707] sm:$0xf]
        %v2073 = vld [vmem:[%s707 + $0x4] sm:$0xf]
        %v2074 = vld [vmem:[#allocation9] sm:$0x1]
        %v2075 = vld [vmem:[#allocation11] sm:$0x1]
        %v2076 = vld [vmem:[%s5] sm:$0xf]
        %v2077 = vld [vmem:[%s5 + $0x4] sm:$0xf]
        %v2078 = vunpack.c.l.bf16 %v2072
        %v2079 = vunpack.c.l.bf16 %v2073
        %v2081 = vlaneseq
        %v2082 = vshrl.u32 %v2081, 7
        %v2083 = vsub.s32 0, %v2082
        %v2084 = vrot.slane %v2074, %v2083
        %v2086 = vmul.f32 %v2078, %v2084
        %v2087 = vmul.f32 %v2079, %v2084
        %v2089 = vlaneseq
        %v2090 = vshrl.u32 %v2089, 7
        %v2091 = vsub.s32 0, %v2090
        %v2092 = vrot.slane %v2075, %v2091
        %v2094 = vadd.f32 %v2086, %v2092
        %v2095 = vadd.f32 %v2087, %v2092
        %v2096 = vmax.f32 %v2094, 0.0
        %v2097 = vmax.f32 %v2095, 0.0
        %v2098 = vpack.c.bf16 %v2097, %v2096
        %v2099 = vld [vmem:[%s742] sm:$0xf]
        %v2100 = vld [vmem:[%s742 + $0x4] sm:$0xf]
        %v2101 = vld [vmem:[#allocation17] sm:$0x1]
        %v2102 = vld [vmem:[%s10] sm:$0x1]
        %v2103 = vld [vmem:[%s11] sm:$0xf]
        %v2104 = vld [vmem:[%s11 + $0x4] sm:$0xf]
        %v2105 = vunpack.c.l.bf16 %v2099
        %v2106 = vunpack.c.l.bf16 %v2100
        %v2108 = vlaneseq
        %v2109 = vshrl.u32 %v2108, 7
        %v2110 = vsub.s32 0, %v2109
        %v2111 = vrot.slane %v2101, %v2110
        %v2113 = vmul.f32 %v2105, %v2111
        %v2114 = vmul.f32 %v2106, %v2111
        %v2116 = vlaneseq
        %v2117 = vshrl.u32 %v2116, 7
        %v2118 = vsub.s32 0, %v2117
        %v2119 = vrot.slane %v2102, %v2118
        %v2121 = vadd.f32 %v2113, %v2119
        %v2122 = vadd.f32 %v2114, %v2119
        %v2123 = vmax.f32 %v2121, 0.0
        %v2124 = vmax.f32 %v2122, 0.0
        %v2125 = vpack.c.bf16 %v2124, %v2123
        %v2128 = vunpack.c.l.b16 %v2103
        %v2129 = vunpack.c.l.b16 %v2104
        %v2130 = vpack.c.b16 %v2129, %v2128
        %v2133 = vsel %vm1230, %v2125, 0
        %2135 = vmatprep.subr.bf16.mxu0 0
        %2136 = vmatpush1.bf16.msra.mxu0 0
        %2137 = vmatprep.subr.bf16.mxu0 0
        %2138 = vmatpush1.bf16.msra.mxu0 0
        %2139 = vmatprep.subr.bf16.mxu0 0
        %2140 = vmatpush1.bf16.msra.mxu0 0
        %2141 = vmatprep.subr.bf16.mxu0 0
        %2142 = vmatpush1.bf16.msra.mxu0 0
        %2143 = vmatprep.subr.bf16.mxu0 0
        %2144 = vmatpush1.bf16.msra.mxu0 0
        %2145 = vmatprep.subr.bf16.mxu0 0
        %2146 = vmatpush1.bf16.msra.mxu0 0
        %2147 = vmatprep.subr.bf16.mxu0 0
        %2148 = vmatpush1.bf16.msra.mxu0 0
        %2149 = vmatprep.subr.bf16.mxu0 0
        %2150 = vmatpush1.bf16.msra.mxu0 %v2130
        %2151 = vmatprep.subr.bf16.mxu0 0
        %2152 = vmatpush2.bf16.msra.mxu0 0
        %2153 = vmatprep.subr.bf16.mxu0 0
        %2154 = vmatpush2.bf16.msra.mxu0 0
        %2155 = vmatprep.subr.bf16.mxu0 0
        %2156 = vmatpush2.bf16.msra.mxu0 0
        %2157 = vmatprep.subr.bf16.mxu0 0
        %2158 = vmatpush2.bf16.msra.mxu0 0
        %2159 = vmatprep.subr.bf16.mxu0 0
        %2160 = vmatpush2.bf16.msra.mxu0 0
        %2161 = vmatprep.subr.bf16.mxu0 0
        %2162 = vmatpush2.bf16.msra.mxu0 0
        %2163 = vmatprep.subr.bf16.mxu0 0
        %2164 = vmatpush2.bf16.msra.mxu0 0
        %2165 = vmatprep.subr.bf16.mxu0 0
        %2166 = vmatpush2.bf16.msra.mxu0 0
        %2167 = vmatprep.mubr.bf16.mxu0 0
        %2168 = vmatmul.mubr.bf16.gmra.mxu0 %v2133
        %v2169 = vpop.f32.mrf.mxu0
        %v2170 = vadd.f32 0.0, %v2169
        %v2171 = vpop.f32.mrf.mxu0
        %v2172 = vpop.f32.mrf.mxu0
        %v2173 = vadd.f32 0.0, %v2172
        %v2174 = vpop.f32.mrf.mxu0
        %2175 = vdwg.mxu0
        %v2178 = vunpack.c.l.b16 %v2076
        %v2179 = vunpack.c.l.b16 %v2077
        %v2180 = vpack.c.b16 %v2179, %v2178
        %v2183 = vsel %vm1230, %v2098, 0
        %2185 = vmatprep.subr.bf16.mxu0 0
        %2186 = vmatpush1.bf16.msra.mxu0 0
        %2187 = vmatprep.subr.bf16.mxu0 0
        %2188 = vmatpush1.bf16.msra.mxu0 0
        %2189 = vmatprep.subr.bf16.mxu0 0
        %2190 = vmatpush1.bf16.msra.mxu0 0
        %2191 = vmatprep.subr.bf16.mxu0 0
        %2192 = vmatpush1.bf16.msra.mxu0 0
        %2193 = vmatprep.subr.bf16.mxu0 0
        %2194 = vmatpush1.bf16.msra.mxu0 0
        %2195 = vmatprep.subr.bf16.mxu0 0
        %2196 = vmatpush1.bf16.msra.mxu0 0
        %2197 = vmatprep.subr.bf16.mxu0 0
        %2198 = vmatpush1.bf16.msra.mxu0 0
        %2199 = vmatprep.subr.bf16.mxu0 0
        %2200 = vmatpush1.bf16.msra.mxu0 %v2180
        %2201 = vmatprep.subr.bf16.mxu0 0
        %2202 = vmatpush2.bf16.msra.mxu0 0
        %2203 = vmatprep.subr.bf16.mxu0 0
        %2204 = vmatpush2.bf16.msra.mxu0 0
        %2205 = vmatprep.subr.bf16.mxu0 0
        %2206 = vmatpush2.bf16.msra.mxu0 0
        %2207 = vmatprep.subr.bf16.mxu0 0
        %2208 = vmatpush2.bf16.msra.mxu0 0
        %2209 = vmatprep.subr.bf16.mxu0 0
        %2210 = vmatpush2.bf16.msra.mxu0 0
        %2211 = vmatprep.subr.bf16.mxu0 0
        %2212 = vmatpush2.bf16.msra.mxu0 0
        %2213 = vmatprep.subr.bf16.mxu0 0
        %2214 = vmatpush2.bf16.msra.mxu0 0
        %2215 = vmatprep.subr.bf16.mxu0 0
        %2216 = vmatpush2.bf16.msra.mxu0 0
        %2217 = vmatprep.mubr.bf16.mxu0 0
        %2218 = vmatmul.mubr.bf16.gmra.mxu0 %v2183
        %v2219 = vpop.f32.mrf.mxu0
        %v2220 = vadd.f32 %v2170, %v2219
        %v2221 = vpop.f32.mrf.mxu0
        %v2222 = vpop.f32.mrf.mxu0
        %v2223 = vadd.f32 %v2173, %v2222
        %v2224 = vpop.f32.mrf.mxu0
        %2225 = vdwg.mxu0
        %v2226 = vld [vmem:[%s12] sm:$0x1]
        %v2228 = vlaneseq
        %v2229 = vshrl.u32 %v2228, 7
        %v2230 = vsub.s32 0, %v2229
        %v2231 = vrot.slane %v2226, %v2230
        %v2233 = vadd.f32 %v2220, %v2231
        %v2234 = vadd.f32 %v2223, %v2231
        %v2235 = vmax.f32 %v2233, 0.0
        %v2236 = vmax.f32 %v2234, 0.0
        %v2237 = vstv %s2071
        %v2238 = vmul.f32 %v2235, %v2237
        %v2239 = vmul.f32 %v2236, %v2237
        %v2240 = vpack.c.bf16 %v2239, %v2238
        %v2242 = vunpack.c.l.b16 %v2240
        %v2243 = vunpack.c.h.b16 %v2240
        %v2244 = vpack.c.b16 %v2242, %v2242
        %v2245 = vpack.c.b16 %v2243, %v2243
        %s2248 = scalar_lea.vmem [#allocation2], 136
        %2249 = vst.msk [vmem:[%s2248] sm:$0xf] %vm1855, %v2244
        %2250 = vst.msk [vmem:[%s2248 + $0x4] sm:$0xf] %vm1855, %v2245
        %v2251 = vld [vmem:[#allocation2] sm:$0xf]
        %v2252 = vld [vmem:[#allocation2 + $0x4] sm:$0xf]
        %v2253 = vld [vmem:[#allocation2 + $0x8] sm:$0xf]
        %v2254 = vld [vmem:[#allocation2 + $0xc] sm:$0xf]
        %v2255 = vld [vmem:[#allocation2 + $0x10] sm:$0xf]
        %v2256 = vld [vmem:[#allocation2 + $0x14] sm:$0xf]
        %v2257 = vld [vmem:[#allocation2 + $0x18] sm:$0xf]
        %v2258 = vld [vmem:[#allocation2 + $0x1c] sm:$0xf]
        %v2259 = vld [vmem:[#allocation2 + $0x20] sm:$0xf]
        %v2260 = vld [vmem:[#allocation2 + $0x24] sm:$0xf]
        %v2261 = vld [vmem:[#allocation2 + $0x28] sm:$0xf]
        %v2262 = vld [vmem:[#allocation2 + $0x2c] sm:$0xf]
        %v2263 = vld [vmem:[#allocation2 + $0x30] sm:$0xf]
        %v2264 = vld [vmem:[#allocation2 + $0x34] sm:$0xf]
        %v2265 = vld [vmem:[#allocation2 + $0x38] sm:$0xf]
        %v2266 = vld [vmem:[#allocation2 + $0x3c] sm:$0xf]
        %v2267 = vld [vmem:[#allocation2 + $0x40] sm:$0xf]
        %v2268 = vld [vmem:[#allocation2 + $0x44] sm:$0xf]
        %v2269 = vld [vmem:[#allocation2 + $0x48] sm:$0xf]
        %v2270 = vld [vmem:[#allocation2 + $0x4c] sm:$0xf]
        %v2271 = vld [vmem:[#allocation2 + $0x50] sm:$0xf]
        %v2272 = vld [vmem:[#allocation2 + $0x54] sm:$0xf]
        %v2273 = vld [vmem:[#allocation2 + $0x58] sm:$0xf]
        %v2274 = vld [vmem:[#allocation2 + $0x5c] sm:$0xf]
        %v2275 = vld [vmem:[#allocation2 + $0x60] sm:$0xf]
        %v2276 = vld [vmem:[#allocation2 + $0x64] sm:$0xf]
        %v2277 = vld [vmem:[#allocation2 + $0x68] sm:$0xf]
        %v2278 = vld [vmem:[#allocation2 + $0x6c] sm:$0xf]
        %v2279 = vld [vmem:[#allocation2 + $0x70] sm:$0xf]
        %v2280 = vld [vmem:[#allocation2 + $0x74] sm:$0xf]
        %v2281 = vld [vmem:[#allocation2 + $0x78] sm:$0xf]
        %v2282 = vld [vmem:[#allocation2 + $0x7c] sm:$0xf]
        %v2283 = vld [vmem:[#allocation2 + $0x80] sm:$0xf]
        %v2284 = vld [vmem:[#allocation2 + $0x84] sm:$0xf]
        %v2285 = vld [vmem:[#allocation2 + $0x88] sm:$0xf]
        %v2286 = vld [vmem:[#allocation2 + $0x8c] sm:$0xf]
        %v2287 = vld [vmem:[#allocation18] sm:$0xff]
        %v2288 = vld [vmem:[#allocation18 + $0x8] sm:$0xff]
        %v2289 = vld [vmem:[#allocation18 + $0x10] sm:$0xff]
        %v2290 = vld [vmem:[#allocation18 + $0x18] sm:$0xff]
        %v2291 = vld [vmem:[#allocation18 + $0x20] sm:$0xff]
        %v2292 = vld [vmem:[#allocation18 + $0x28] sm:$0xff]
        %v2293 = vld [vmem:[#allocation18 + $0x30] sm:$0xff]
        %v2294 = vld [vmem:[#allocation18 + $0x38] sm:$0xff]
        %v2331 = vunpack.c.l.b16 %v2251
        %v2332 = vunpack.c.l.b16 %v2252
        %v2333 = vunpack.c.l.b16 %v2253
        %v2334 = vunpack.c.l.b16 %v2254
        %v2335 = vunpack.c.l.b16 %v2255
        %v2336 = vunpack.c.l.b16 %v2256
        %v2337 = vunpack.c.l.b16 %v2257
        %v2338 = vunpack.c.l.b16 %v2258
        %v2339 = vunpack.c.l.b16 %v2259
        %v2340 = vunpack.c.l.b16 %v2260
        %v2341 = vunpack.c.l.b16 %v2261
        %v2342 = vunpack.c.l.b16 %v2262
        %v2343 = vunpack.c.l.b16 %v2263
        %v2344 = vunpack.c.l.b16 %v2264
        %v2345 = vunpack.c.l.b16 %v2265
        %v2346 = vunpack.c.l.b16 %v2266
        %v2347 = vunpack.c.l.b16 %v2267
        %v2348 = vunpack.c.l.b16 %v2268
        %v2349 = vunpack.c.l.b16 %v2269
        %v2350 = vunpack.c.l.b16 %v2270
        %v2351 = vunpack.c.l.b16 %v2271
        %v2352 = vunpack.c.l.b16 %v2272
        %v2353 = vunpack.c.l.b16 %v2273
        %v2354 = vunpack.c.l.b16 %v2274
        %v2355 = vunpack.c.l.b16 %v2275
        %v2356 = vunpack.c.l.b16 %v2276
        %v2357 = vunpack.c.l.b16 %v2277
        %v2358 = vunpack.c.l.b16 %v2278
        %v2359 = vunpack.c.l.b16 %v2279
        %v2360 = vunpack.c.l.b16 %v2280
        %v2361 = vunpack.c.l.b16 %v2281
        %v2362 = vunpack.c.l.b16 %v2282
        %v2363 = vunpack.c.l.b16 %v2283
        %v2364 = vunpack.c.l.b16 %v2284
        %v2365 = vunpack.c.l.b16 %v2285
        %v2366 = vunpack.c.l.b16 %v2286
        %v2367 = vpack.c.b16 %v2332, %v2331
        %v2368 = vpack.c.b16 %v2334, %v2333
        %v2369 = vpack.c.b16 %v2336, %v2335
        %v2370 = vpack.c.b16 %v2338, %v2337
        %v2371 = vpack.c.b16 %v2340, %v2339
        %v2372 = vpack.c.b16 %v2342, %v2341
        %v2373 = vpack.c.b16 %v2344, %v2343
        %v2374 = vpack.c.b16 %v2346, %v2345
        %v2375 = vpack.c.b16 %v2348, %v2347
        %v2376 = vpack.c.b16 %v2350, %v2349
        %v2377 = vpack.c.b16 %v2352, %v2351
        %v2378 = vpack.c.b16 %v2354, %v2353
        %v2379 = vpack.c.b16 %v2356, %v2355
        %v2380 = vpack.c.b16 %v2358, %v2357
        %v2381 = vpack.c.b16 %v2360, %v2359
        %v2382 = vpack.c.b16 %v2362, %v2361
        %v2383 = vpack.c.b16 %v2364, %v2363
        %v2384 = vpack.c.b16 %v2366, %v2365
        %v2393 = vunpack.c.l.b16 %v2287
        %v2394 = vunpack.c.h.b16 %v2287
        %v2395 = vunpack.c.l.b16 %v2288
        %v2396 = vunpack.c.h.b16 %v2288
        %v2397 = vunpack.c.l.b16 %v2289
        %v2398 = vunpack.c.h.b16 %v2289
        %v2399 = vunpack.c.l.b16 %v2290
        %v2400 = vunpack.c.h.b16 %v2290
        %v2401 = vunpack.c.l.b16 %v2291
        %v2402 = vunpack.c.h.b16 %v2291
        %v2403 = vunpack.c.l.b16 %v2292
        %v2404 = vunpack.c.h.b16 %v2292
        %v2405 = vunpack.c.l.b16 %v2293
        %v2406 = vunpack.c.h.b16 %v2293
        %v2407 = vunpack.c.l.b16 %v2294
        %v2408 = vunpack.c.h.b16 %v2294
        %v2409 = vpack.c.b16 %v2395, %v2393
        %v2410 = vpack.c.b16 %v2396, %v2394
        %v2411 = vpack.c.b16 %v2399, %v2397
        %v2412 = vpack.c.b16 %v2400, %v2398
        %v2413 = vpack.c.b16 %v2403, %v2401
        %v2414 = vpack.c.b16 %v2404, %v2402
        %v2415 = vpack.c.b16 %v2407, %v2405
        %v2416 = vpack.c.b16 %v2408, %v2406
        %vm2425 = vcmask 523264
        %v2427 = vsel %vm2425, %v2367, 0
        %v2430 = vsel %vm2425, %v2368, 0
        %v2433 = vsel %vm2425, %v2369, 0
        %v2436 = vsel %vm2425, %v2370, 0
        %v2439 = vsel %vm2425, %v2371, 0
        %v2442 = vsel %vm2425, %v2372, 0
        %v2445 = vsel %vm2425, %v2373, 0
        %v2448 = vsel %vm2425, %v2374, 0
        %v2451 = vsel %vm2425, %v2375, 0
        %v2454 = vsel %vm2425, %v2376, 0
        %v2457 = vsel %vm2425, %v2377, 0
        %v2460 = vsel %vm2425, %v2378, 0
        %v2463 = vsel %vm2425, %v2379, 0
        %v2466 = vsel %vm2425, %v2380, 0
        %v2469 = vsel %vm2425, %v2381, 0
        %v2472 = vsel %vm2425, %v2382, 0
        %v2475 = vsel %vm2425, %v2383, 0
        %v2478 = vsel %vm2425, %v2384, 0
        %2480 = vmatprep.subr.bf16.mxu0 0
        %2481 = vmatpush1.bf16.msra.mxu0 0
        %2482 = vmatprep.subr.bf16.mxu0 0
        %2483 = vmatpush1.bf16.msra.mxu0 0
        %2484 = vmatprep.subr.bf16.mxu0 0
        %2485 = vmatpush1.bf16.msra.mxu0 0
        %2486 = vmatprep.subr.bf16.mxu0 0
        %2487 = vmatpush1.bf16.msra.mxu0 0
        %2488 = vmatprep.subr.bf16.mxu0 %v2416
        %2489 = vmatpush1.bf16.msra.mxu0 %v2415
        %2490 = vmatprep.subr.bf16.mxu0 %v2414
        %2491 = vmatpush1.bf16.msra.mxu0 %v2413
        %2492 = vmatprep.subr.bf16.mxu0 %v2412
        %2493 = vmatpush1.bf16.msra.mxu0 %v2411
        %2494 = vmatprep.subr.bf16.mxu0 %v2410
        %2495 = vmatpush1.bf16.msra.mxu0 %v2409
        %2496 = vmatprep.subr.bf16.mxu0 0
        %2497 = vmatpush2.bf16.msra.mxu0 0
        %2498 = vmatprep.subr.bf16.mxu0 0
        %2499 = vmatpush2.bf16.msra.mxu0 0
        %2500 = vmatprep.subr.bf16.mxu0 0
        %2501 = vmatpush2.bf16.msra.mxu0 0
        %2502 = vmatprep.subr.bf16.mxu0 0
        %2503 = vmatpush2.bf16.msra.mxu0 0
        %2504 = vmatprep.subr.bf16.mxu0 0
        %2505 = vmatpush2.bf16.msra.mxu0 0
        %2506 = vmatprep.subr.bf16.mxu0 0
        %2507 = vmatpush2.bf16.msra.mxu0 0
        %2508 = vmatprep.subr.bf16.mxu0 0
        %2509 = vmatpush2.bf16.msra.mxu0 0
        %2510 = vmatprep.subr.bf16.mxu0 0
        %2511 = vmatpush2.bf16.msra.mxu0 0
        %2512 = vmatprep.mubr.bf16.mxu0 0
        %2513 = vmatmul.mubr.bf16.gmra.mxu0 %v2427
        %v2514 = vpop.f32.mrf.mxu0
        %v2515 = vadd.f32 0.0, %v2514
        %v2516 = vpop.f32.mrf.mxu0
        %v2517 = vpop.f32.mrf.mxu0
        %v2518 = vadd.f32 0.0, %v2517
        %v2519 = vpop.f32.mrf.mxu0
        %2520 = vmatprep.mubr.bf16.mxu0 0
        %2521 = vmatmul.mubr.bf16.gmra.mxu0 %v2430
        %v2522 = vpop.f32.mrf.mxu0
        %v2523 = vadd.f32 0.0, %v2522
        %v2524 = vpop.f32.mrf.mxu0
        %v2525 = vpop.f32.mrf.mxu0
        %v2526 = vadd.f32 0.0, %v2525
        %v2527 = vpop.f32.mrf.mxu0
        %2528 = vmatprep.mubr.bf16.mxu0 0
        %2529 = vmatmul.mubr.bf16.gmra.mxu0 %v2433
        %v2530 = vpop.f32.mrf.mxu0
        %v2531 = vadd.f32 0.0, %v2530
        %v2532 = vpop.f32.mrf.mxu0
        %v2533 = vadd.f32 0.0, %v2532
        %v2534 = vpop.f32.mrf.mxu0
        %v2535 = vadd.f32 0.0, %v2534
        %v2536 = vpop.f32.mrf.mxu0
        %v2537 = vadd.f32 0.0, %v2536
        %2538 = vmatprep.mubr.bf16.mxu0 0
        %2539 = vmatmul.mubr.bf16.gmra.mxu0 %v2436
        %v2540 = vpop.f32.mrf.mxu0
        %v2541 = vadd.f32 0.0, %v2540
        %v2542 = vpop.f32.mrf.mxu0
        %v2543 = vadd.f32 0.0, %v2542
        %v2544 = vpop.f32.mrf.mxu0
        %v2545 = vadd.f32 0.0, %v2544
        %v2546 = vpop.f32.mrf.mxu0
        %v2547 = vadd.f32 0.0, %v2546
        %2548 = vmatprep.mubr.bf16.mxu0 0
        %2549 = vmatmul.mubr.bf16.gmra.mxu0 %v2439
        %v2550 = vpop.f32.mrf.mxu0
        %v2551 = vadd.f32 0.0, %v2550
        %v2552 = vpop.f32.mrf.mxu0
        %v2553 = vadd.f32 0.0, %v2552
        %v2554 = vpop.f32.mrf.mxu0
        %v2555 = vadd.f32 0.0, %v2554
        %v2556 = vpop.f32.mrf.mxu0
        %v2557 = vadd.f32 0.0, %v2556
        %2558 = vmatprep.mubr.bf16.mxu0 0
        %2559 = vmatmul.mubr.bf16.gmra.mxu0 %v2442
        %v2560 = vpop.f32.mrf.mxu0
        %v2561 = vadd.f32 0.0, %v2560
        %v2562 = vpop.f32.mrf.mxu0
        %v2563 = vadd.f32 0.0, %v2562
        %v2564 = vpop.f32.mrf.mxu0
        %v2565 = vadd.f32 0.0, %v2564
        %v2566 = vpop.f32.mrf.mxu0
        %v2567 = vadd.f32 0.0, %v2566
        %2568 = vmatprep.mubr.bf16.mxu0 0
        %2569 = vmatmul.mubr.bf16.gmra.mxu0 %v2445
        %v2570 = vpop.f32.mrf.mxu0
        %v2571 = vadd.f32 0.0, %v2570
        %v2572 = vpop.f32.mrf.mxu0
        %v2573 = vadd.f32 0.0, %v2572
        %v2574 = vpop.f32.mrf.mxu0
        %v2575 = vadd.f32 0.0, %v2574
        %v2576 = vpop.f32.mrf.mxu0
        %v2577 = vadd.f32 0.0, %v2576
        %2578 = vmatprep.mubr.bf16.mxu0 0
        %2579 = vmatmul.mubr.bf16.gmra.mxu0 %v2448
        %v2580 = vpop.f32.mrf.mxu0
        %v2581 = vadd.f32 0.0, %v2580
        %v2582 = vpop.f32.mrf.mxu0
        %v2583 = vadd.f32 0.0, %v2582
        %v2584 = vpop.f32.mrf.mxu0
        %v2585 = vadd.f32 0.0, %v2584
        %v2586 = vpop.f32.mrf.mxu0
        %v2587 = vadd.f32 0.0, %v2586
        %2588 = vmatprep.mubr.bf16.mxu0 0
        %2589 = vmatmul.mubr.bf16.gmra.mxu0 %v2451
        %v2590 = vpop.f32.mrf.mxu0
        %v2591 = vadd.f32 0.0, %v2590
        %v2592 = vpop.f32.mrf.mxu0
        %v2593 = vadd.f32 0.0, %v2592
        %v2594 = vpop.f32.mrf.mxu0
        %v2595 = vadd.f32 0.0, %v2594
        %v2596 = vpop.f32.mrf.mxu0
        %v2597 = vadd.f32 0.0, %v2596
        %2598 = vmatprep.mubr.bf16.mxu0 0
        %2599 = vmatmul.mubr.bf16.gmra.mxu0 %v2454
        %v2600 = vpop.f32.mrf.mxu0
        %v2601 = vadd.f32 0.0, %v2600
        %v2602 = vpop.f32.mrf.mxu0
        %v2603 = vadd.f32 0.0, %v2602
        %v2604 = vpop.f32.mrf.mxu0
        %v2605 = vadd.f32 0.0, %v2604
        %v2606 = vpop.f32.mrf.mxu0
        %v2607 = vadd.f32 0.0, %v2606
        %2608 = vmatprep.mubr.bf16.mxu0 0
        %2609 = vmatmul.mubr.bf16.gmra.mxu0 %v2457
        %v2610 = vpop.f32.mrf.mxu0
        %v2611 = vadd.f32 0.0, %v2610
        %v2612 = vpop.f32.mrf.mxu0
        %v2613 = vadd.f32 0.0, %v2612
        %v2614 = vpop.f32.mrf.mxu0
        %v2615 = vadd.f32 0.0, %v2614
        %v2616 = vpop.f32.mrf.mxu0
        %v2617 = vadd.f32 0.0, %v2616
        %2618 = vmatprep.mubr.bf16.mxu0 0
        %2619 = vmatmul.mubr.bf16.gmra.mxu0 %v2460
        %v2620 = vpop.f32.mrf.mxu0
        %v2621 = vadd.f32 0.0, %v2620
        %v2622 = vpop.f32.mrf.mxu0
        %v2623 = vadd.f32 0.0, %v2622
        %v2624 = vpop.f32.mrf.mxu0
        %v2625 = vadd.f32 0.0, %v2624
        %v2626 = vpop.f32.mrf.mxu0
        %v2627 = vadd.f32 0.0, %v2626
        %2628 = vmatprep.mubr.bf16.mxu0 0
        %2629 = vmatmul.mubr.bf16.gmra.mxu0 %v2463
        %v2630 = vpop.f32.mrf.mxu0
        %v2631 = vadd.f32 0.0, %v2630
        %v2632 = vpop.f32.mrf.mxu0
        %v2633 = vadd.f32 0.0, %v2632
        %v2634 = vpop.f32.mrf.mxu0
        %v2635 = vadd.f32 0.0, %v2634
        %v2636 = vpop.f32.mrf.mxu0
        %v2637 = vadd.f32 0.0, %v2636
        %2638 = vmatprep.mubr.bf16.mxu0 0
        %2639 = vmatmul.mubr.bf16.gmra.mxu0 %v2466
        %v2640 = vpop.f32.mrf.mxu0
        %v2641 = vadd.f32 0.0, %v2640
        %v2642 = vpop.f32.mrf.mxu0
        %v2643 = vadd.f32 0.0, %v2642
        %v2644 = vpop.f32.mrf.mxu0
        %v2645 = vadd.f32 0.0, %v2644
        %v2646 = vpop.f32.mrf.mxu0
        %v2647 = vadd.f32 0.0, %v2646
        %2648 = vmatprep.mubr.bf16.mxu0 0
        %2649 = vmatmul.mubr.bf16.gmra.mxu0 %v2469
        %v2650 = vpop.f32.mrf.mxu0
        %v2651 = vadd.f32 0.0, %v2650
        %v2652 = vpop.f32.mrf.mxu0
        %v2653 = vadd.f32 0.0, %v2652
        %v2654 = vpop.f32.mrf.mxu0
        %v2655 = vadd.f32 0.0, %v2654
        %v2656 = vpop.f32.mrf.mxu0
        %v2657 = vadd.f32 0.0, %v2656
        %2658 = vmatprep.mubr.bf16.mxu0 0
        %2659 = vmatmul.mubr.bf16.gmra.mxu0 %v2472
        %v2660 = vpop.f32.mrf.mxu0
        %v2661 = vadd.f32 0.0, %v2660
        %v2662 = vpop.f32.mrf.mxu0
        %v2663 = vadd.f32 0.0, %v2662
        %v2664 = vpop.f32.mrf.mxu0
        %v2665 = vadd.f32 0.0, %v2664
        %v2666 = vpop.f32.mrf.mxu0
        %v2667 = vadd.f32 0.0, %v2666
        %2668 = vmatprep.mubr.bf16.mxu0 0
        %2669 = vmatmul.mubr.bf16.gmra.mxu0 %v2475
        %v2670 = vpop.f32.mrf.mxu0
        %v2671 = vadd.f32 0.0, %v2670
        %v2672 = vpop.f32.mrf.mxu0
        %v2673 = vadd.f32 0.0, %v2672
        %v2674 = vpop.f32.mrf.mxu0
        %v2675 = vadd.f32 0.0, %v2674
        %v2676 = vpop.f32.mrf.mxu0
        %v2677 = vadd.f32 0.0, %v2676
        %2678 = vmatprep.mubr.bf16.mxu0 0
        %2679 = vmatmul.mubr.bf16.gmra.mxu0 %v2478
        %v2680 = vpop.f32.mrf.mxu0
        %v2681 = vadd.f32 0.0, %v2680
        %v2682 = vpop.f32.mrf.mxu0
        %v2683 = vadd.f32 0.0, %v2682
        %v2684 = vpop.f32.mrf.mxu0
        %v2685 = vadd.f32 0.0, %v2684
        %v2686 = vpop.f32.mrf.mxu0
        %v2687 = vadd.f32 0.0, %v2686
        %2688 = vdwg.mxu0
        %2721 = vrot.lane.b32.xlu0 %v2523, 112
        %v2722 = vpop.permute.xlu0 %2721
        %2723 = vrot.lane.b32.xlu0 %v2526, 112
        %v2724 = vpop.permute.xlu0 %2723
        %2725 = vrot.lane.b32.xlu0 %v2531, 112
        %v2726 = vpop.permute.xlu0 %2725
        %2727 = vrot.lane.b32.xlu0 %v2535, 112
        %v2728 = vpop.permute.xlu0 %2727
        %2729 = vrot.lane.b32.xlu0 %v2541, 112
        %v2730 = vpop.permute.xlu0 %2729
        %2731 = vrot.lane.b32.xlu0 %v2545, 112
        %v2732 = vpop.permute.xlu0 %2731
        %2733 = vrot.lane.b32.xlu0 %v2551, 112
        %v2734 = vpop.permute.xlu0 %2733
        %2735 = vrot.lane.b32.xlu0 %v2555, 112
        %v2736 = vpop.permute.xlu0 %2735
        %2737 = vrot.lane.b32.xlu0 %v2561, 112
        %v2738 = vpop.permute.xlu0 %2737
        %2739 = vrot.lane.b32.xlu0 %v2565, 112
        %v2740 = vpop.permute.xlu0 %2739
        %2741 = vrot.lane.b32.xlu0 %v2571, 112
        %v2742 = vpop.permute.xlu0 %2741
        %2743 = vrot.lane.b32.xlu0 %v2575, 112
        %v2744 = vpop.permute.xlu0 %2743
        %2745 = vrot.lane.b32.xlu0 %v2581, 112
        %v2746 = vpop.permute.xlu0 %2745
        %2747 = vrot.lane.b32.xlu0 %v2585, 112
        %v2748 = vpop.permute.xlu0 %2747
        %2749 = vrot.lane.b32.xlu0 %v2591, 112
        %v2750 = vpop.permute.xlu0 %2749
        %2751 = vrot.lane.b32.xlu0 %v2595, 112
        %v2752 = vpop.permute.xlu0 %2751
        %2753 = vrot.lane.b32.xlu0 %v2601, 112
        %v2754 = vpop.permute.xlu0 %2753
        %2755 = vrot.lane.b32.xlu0 %v2605, 112
        %v2756 = vpop.permute.xlu0 %2755
        %2757 = vrot.lane.b32.xlu0 %v2611, 112
        %v2758 = vpop.permute.xlu0 %2757
        %2759 = vrot.lane.b32.xlu0 %v2615, 112
        %v2760 = vpop.permute.xlu0 %2759
        %2761 = vrot.lane.b32.xlu0 %v2621, 112
        %v2762 = vpop.permute.xlu0 %2761
        %2763 = vrot.lane.b32.xlu0 %v2625, 112
        %v2764 = vpop.permute.xlu0 %2763
        %2765 = vrot.lane.b32.xlu0 %v2631, 112
        %v2766 = vpop.permute.xlu0 %2765
        %2767 = vrot.lane.b32.xlu0 %v2635, 112
        %v2768 = vpop.permute.xlu0 %2767
        %2769 = vrot.lane.b32.xlu0 %v2641, 112
        %v2770 = vpop.permute.xlu0 %2769
        %2771 = vrot.lane.b32.xlu0 %v2645, 112
        %v2772 = vpop.permute.xlu0 %2771
        %2773 = vrot.lane.b32.xlu0 %v2651, 112
        %v2774 = vpop.permute.xlu0 %2773
        %2775 = vrot.lane.b32.xlu0 %v2655, 112
        %v2776 = vpop.permute.xlu0 %2775
        %2777 = vrot.lane.b32.xlu0 %v2661, 112
        %v2778 = vpop.permute.xlu0 %2777
        %2779 = vrot.lane.b32.xlu0 %v2665, 112
        %v2780 = vpop.permute.xlu0 %2779
        %2781 = vrot.lane.b32.xlu0 %v2671, 112
        %v2782 = vpop.permute.xlu0 %2781
        %2783 = vrot.lane.b32.xlu0 %v2675, 112
        %v2784 = vpop.permute.xlu0 %2783
        %v2817 = vadd.f32 %v2515, %v2722
        %v2818 = vadd.f32 %v2518, %v2724
        %v2819 = vadd.f32 %v2523, %v2726
        %v2820 = vadd.f32 %v2526, %v2728
        %v2821 = vadd.f32 %v2531, %v2730
        %v2822 = vadd.f32 %v2535, %v2732
        %v2823 = vadd.f32 %v2541, %v2734
        %v2824 = vadd.f32 %v2545, %v2736
        %v2825 = vadd.f32 %v2551, %v2738
        %v2826 = vadd.f32 %v2555, %v2740
        %v2827 = vadd.f32 %v2561, %v2742
        %v2828 = vadd.f32 %v2565, %v2744
        %v2829 = vadd.f32 %v2571, %v2746
        %v2830 = vadd.f32 %v2575, %v2748
        %v2831 = vadd.f32 %v2581, %v2750
        %v2832 = vadd.f32 %v2585, %v2752
        %v2833 = vadd.f32 %v2591, %v2754
        %v2834 = vadd.f32 %v2595, %v2756
        %v2835 = vadd.f32 %v2601, %v2758
        %v2836 = vadd.f32 %v2605, %v2760
        %v2837 = vadd.f32 %v2611, %v2762
        %v2838 = vadd.f32 %v2615, %v2764
        %v2839 = vadd.f32 %v2621, %v2766
        %v2840 = vadd.f32 %v2625, %v2768
        %v2841 = vadd.f32 %v2631, %v2770
        %v2842 = vadd.f32 %v2635, %v2772
        %v2843 = vadd.f32 %v2641, %v2774
        %v2844 = vadd.f32 %v2645, %v2776
        %v2845 = vadd.f32 %v2651, %v2778
        %v2846 = vadd.f32 %v2655, %v2780
        %v2847 = vadd.f32 %v2661, %v2782
        %v2848 = vadd.f32 %v2665, %v2784
        %2851 = vrot.lane.b32.xlu0 %v2531, 96
        %v2852 = vpop.permute.xlu0 %2851
        %2853 = vrot.lane.b32.xlu0 %v2535, 96
        %v2854 = vpop.permute.xlu0 %2853
        %2855 = vrot.lane.b32.xlu0 %v2541, 96
        %v2856 = vpop.permute.xlu0 %2855
        %2857 = vrot.lane.b32.xlu0 %v2545, 96
        %v2858 = vpop.permute.xlu0 %2857
        %2859 = vrot.lane.b32.xlu0 %v2551, 96
        %v2860 = vpop.permute.xlu0 %2859
        %2861 = vrot.lane.b32.xlu0 %v2555, 96
        %v2862 = vpop.permute.xlu0 %2861
        %2863 = vrot.lane.b32.xlu0 %v2561, 96
        %v2864 = vpop.permute.xlu0 %2863
        %2865 = vrot.lane.b32.xlu0 %v2565, 96
        %v2866 = vpop.permute.xlu0 %2865
        %2867 = vrot.lane.b32.xlu0 %v2571, 96
        %v2868 = vpop.permute.xlu0 %2867
        %2869 = vrot.lane.b32.xlu0 %v2575, 96
        %v2870 = vpop.permute.xlu0 %2869
        %2871 = vrot.lane.b32.xlu0 %v2581, 96
        %v2872 = vpop.permute.xlu0 %2871
        %2873 = vrot.lane.b32.xlu0 %v2585, 96
        %v2874 = vpop.permute.xlu0 %2873
        %2875 = vrot.lane.b32.xlu0 %v2591, 96
        %v2876 = vpop.permute.xlu0 %2875
        %2877 = vrot.lane.b32.xlu0 %v2595, 96
        %v2878 = vpop.permute.xlu0 %2877
        %2879 = vrot.lane.b32.xlu0 %v2601, 96
        %v2880 = vpop.permute.xlu0 %2879
        %2881 = vrot.lane.b32.xlu0 %v2605, 96
        %v2882 = vpop.permute.xlu0 %2881
        %2883 = vrot.lane.b32.xlu0 %v2611, 96
        %v2884 = vpop.permute.xlu0 %2883
        %2885 = vrot.lane.b32.xlu0 %v2615, 96
        %v2886 = vpop.permute.xlu0 %2885
        %2887 = vrot.lane.b32.xlu0 %v2621, 96
        %v2888 = vpop.permute.xlu0 %2887
        %2889 = vrot.lane.b32.xlu0 %v2625, 96
        %v2890 = vpop.permute.xlu0 %2889
        %2891 = vrot.lane.b32.xlu0 %v2631, 96
        %v2892 = vpop.permute.xlu0 %2891
        %2893 = vrot.lane.b32.xlu0 %v2635, 96
        %v2894 = vpop.permute.xlu0 %2893
        %2895 = vrot.lane.b32.xlu0 %v2641, 96
        %v2896 = vpop.permute.xlu0 %2895
        %2897 = vrot.lane.b32.xlu0 %v2645, 96
        %v2898 = vpop.permute.xlu0 %2897
        %2899 = vrot.lane.b32.xlu0 %v2651, 96
        %v2900 = vpop.permute.xlu0 %2899
        %2901 = vrot.lane.b32.xlu0 %v2655, 96
        %v2902 = vpop.permute.xlu0 %2901
        %2903 = vrot.lane.b32.xlu0 %v2661, 96
        %v2904 = vpop.permute.xlu0 %2903
        %2905 = vrot.lane.b32.xlu0 %v2665, 96
        %v2906 = vpop.permute.xlu0 %2905
        %2907 = vrot.lane.b32.xlu0 %v2671, 96
        %v2908 = vpop.permute.xlu0 %2907
        %2909 = vrot.lane.b32.xlu0 %v2675, 96
        %v2910 = vpop.permute.xlu0 %2909
        %2911 = vrot.lane.b32.xlu0 %v2681, 96
        %v2912 = vpop.permute.xlu0 %2911
        %2913 = vrot.lane.b32.xlu0 %v2685, 96
        %v2914 = vpop.permute.xlu0 %2913
        %v2947 = vadd.f32 %v2817, %v2852
        %v2948 = vadd.f32 %v2818, %v2854
        %v2949 = vadd.f32 %v2819, %v2856
        %v2950 = vadd.f32 %v2820, %v2858
        %v2951 = vadd.f32 %v2821, %v2860
        %v2952 = vadd.f32 %v2822, %v2862
        %v2953 = vadd.f32 %v2823, %v2864
        %v2954 = vadd.f32 %v2824, %v2866
        %v2955 = vadd.f32 %v2825, %v2868
        %v2956 = vadd.f32 %v2826, %v2870
        %v2957 = vadd.f32 %v2827, %v2872
        %v2958 = vadd.f32 %v2828, %v2874
        %v2959 = vadd.f32 %v2829, %v2876
        %v2960 = vadd.f32 %v2830, %v2878
        %v2961 = vadd.f32 %v2831, %v2880
        %v2962 = vadd.f32 %v2832, %v2882
        %v2963 = vadd.f32 %v2833, %v2884
        %v2964 = vadd.f32 %v2834, %v2886
        %v2965 = vadd.f32 %v2835, %v2888
        %v2966 = vadd.f32 %v2836, %v2890
        %v2967 = vadd.f32 %v2837, %v2892
        %v2968 = vadd.f32 %v2838, %v2894
        %v2969 = vadd.f32 %v2839, %v2896
        %v2970 = vadd.f32 %v2840, %v2898
        %v2971 = vadd.f32 %v2841, %v2900
        %v2972 = vadd.f32 %v2842, %v2902
        %v2973 = vadd.f32 %v2843, %v2904
        %v2974 = vadd.f32 %v2844, %v2906
        %v2975 = vadd.f32 %v2845, %v2908
        %v2976 = vadd.f32 %v2846, %v2910
        %v2977 = vadd.f32 %v2847, %v2912
        %v2978 = vadd.f32 %v2848, %v2914
        %vm3011 = vcmask 1040384
        %v3012 = vrot.slane %v2947, 7
        %v3013 = vrot.slane %v2948, 7
        %v3014 = vsel %vm3011, %v3012, %v3013
        %v3015 = vrot.slane %v2949, 7
        %v3016 = vrot.slane %v2950, 7
        %v3017 = vsel %vm3011, %v3015, %v3016
        %v3018 = vrot.slane %v2951, 7
        %v3019 = vrot.slane %v2952, 7
        %v3020 = vsel %vm3011, %v3018, %v3019
        %v3021 = vrot.slane %v2953, 7
        %v3022 = vrot.slane %v2954, 7
        %v3023 = vsel %vm3011, %v3021, %v3022
        %v3024 = vrot.slane %v2955, 7
        %v3025 = vrot.slane %v2956, 7
        %v3026 = vsel %vm3011, %v3024, %v3025
        %v3027 = vrot.slane %v2957, 7
        %v3028 = vrot.slane %v2958, 7
        %v3029 = vsel %vm3011, %v3027, %v3028
        %v3030 = vrot.slane %v2959, 7
        %v3031 = vrot.slane %v2960, 7
        %v3032 = vsel %vm3011, %v3030, %v3031
        %v3033 = vrot.slane %v2961, 7
        %v3034 = vrot.slane %v2962, 7
        %v3035 = vsel %vm3011, %v3033, %v3034
        %v3036 = vrot.slane %v2963, 7
        %v3037 = vrot.slane %v2964, 7
        %v3038 = vsel %vm3011, %v3036, %v3037
        %v3039 = vrot.slane %v2965, 7
        %v3040 = vrot.slane %v2966, 7
        %v3041 = vsel %vm3011, %v3039, %v3040
        %v3042 = vrot.slane %v2967, 7
        %v3043 = vrot.slane %v2968, 7
        %v3044 = vsel %vm3011, %v3042, %v3043
        %v3045 = vrot.slane %v2969, 7
        %v3046 = vrot.slane %v2970, 7
        %v3047 = vsel %vm3011, %v3045, %v3046
        %v3048 = vrot.slane %v2971, 7
        %v3049 = vrot.slane %v2972, 7
        %v3050 = vsel %vm3011, %v3048, %v3049
        %v3051 = vrot.slane %v2973, 7
        %v3052 = vrot.slane %v2974, 7
        %v3053 = vsel %vm3011, %v3051, %v3052
        %v3054 = vrot.slane %v2975, 7
        %v3055 = vrot.slane %v2976, 7
        %v3056 = vsel %vm3011, %v3054, %v3055
        %v3057 = vrot.slane %v2977, 7
        %v3058 = vrot.slane %v2978, 7
        %v3059 = vsel %vm3011, %v3057, %v3058
        %v3092 = vsel %vm3011, 0.0, %v3012
        %v3093 = vsel %vm3011, 0.0, %v3015
        %v3094 = vsel %vm3011, 0.0, %v3018
        %v3095 = vsel %vm3011, 0.0, %v3021
        %v3096 = vsel %vm3011, 0.0, %v3024
        %v3097 = vsel %vm3011, 0.0, %v3027
        %v3098 = vsel %vm3011, 0.0, %v3030
        %v3099 = vsel %vm3011, 0.0, %v3033
        %v3100 = vsel %vm3011, 0.0, %v3036
        %v3101 = vsel %vm3011, 0.0, %v3039
        %v3102 = vsel %vm3011, 0.0, %v3042
        %v3103 = vsel %vm3011, 0.0, %v3045
        %v3104 = vsel %vm3011, 0.0, %v3048
        %v3105 = vsel %vm3011, 0.0, %v3051
        %v3106 = vsel %vm3011, 0.0, %v3054
        %v3107 = vsel %vm3011, 0.0, %v3057
        %3108 = vrot.lane.b32.xlu0 %v2947, 80
        %v3109 = vpop.permute.xlu0 %3108
        %3110 = vrot.lane.b32.xlu0 %v2948, 80
        %v3111 = vpop.permute.xlu0 %3110
        %3112 = vrot.lane.b32.xlu0 %v2949, 80
        %v3113 = vpop.permute.xlu0 %3112
        %3114 = vrot.lane.b32.xlu0 %v2950, 80
        %v3115 = vpop.permute.xlu0 %3114
        %3116 = vrot.lane.b32.xlu0 %v2951, 80
        %v3117 = vpop.permute.xlu0 %3116
        %3118 = vrot.lane.b32.xlu0 %v2952, 80
        %v3119 = vpop.permute.xlu0 %3118
        %3120 = vrot.lane.b32.xlu0 %v2953, 80
        %v3121 = vpop.permute.xlu0 %3120
        %3122 = vrot.lane.b32.xlu0 %v2954, 80
        %v3123 = vpop.permute.xlu0 %3122
        %3124 = vrot.lane.b32.xlu0 %v2955, 80
        %v3125 = vpop.permute.xlu0 %3124
        %3126 = vrot.lane.b32.xlu0 %v2956, 80
        %v3127 = vpop.permute.xlu0 %3126
        %3128 = vrot.lane.b32.xlu0 %v2957, 80
        %v3129 = vpop.permute.xlu0 %3128
        %3130 = vrot.lane.b32.xlu0 %v2958, 80
        %v3131 = vpop.permute.xlu0 %3130
        %3132 = vrot.lane.b32.xlu0 %v2959, 80
        %v3133 = vpop.permute.xlu0 %3132
        %3134 = vrot.lane.b32.xlu0 %v2960, 80
        %v3135 = vpop.permute.xlu0 %3134
        %3136 = vrot.lane.b32.xlu0 %v2961, 80
        %v3137 = vpop.permute.xlu0 %3136
        %3138 = vrot.lane.b32.xlu0 %v2962, 80
        %v3139 = vpop.permute.xlu0 %3138
        %3140 = vrot.lane.b32.xlu0 %v2963, 80
        %v3141 = vpop.permute.xlu0 %3140
        %3142 = vrot.lane.b32.xlu0 %v2964, 80
        %v3143 = vpop.permute.xlu0 %3142
        %3144 = vrot.lane.b32.xlu0 %v2965, 80
        %v3145 = vpop.permute.xlu0 %3144
        %3146 = vrot.lane.b32.xlu0 %v2966, 80
        %v3147 = vpop.permute.xlu0 %3146
        %3148 = vrot.lane.b32.xlu0 %v2967, 80
        %v3149 = vpop.permute.xlu0 %3148
        %3150 = vrot.lane.b32.xlu0 %v2968, 80
        %v3151 = vpop.permute.xlu0 %3150
        %3152 = vrot.lane.b32.xlu0 %v2969, 80
        %v3153 = vpop.permute.xlu0 %3152
        %3154 = vrot.lane.b32.xlu0 %v2970, 80
        %v3155 = vpop.permute.xlu0 %3154
        %3156 = vrot.lane.b32.xlu0 %v2971, 80
        %v3157 = vpop.permute.xlu0 %3156
        %3158 = vrot.lane.b32.xlu0 %v2972, 80
        %v3159 = vpop.permute.xlu0 %3158
        %3160 = vrot.lane.b32.xlu0 %v2973, 80
        %v3161 = vpop.permute.xlu0 %3160
        %3162 = vrot.lane.b32.xlu0 %v2974, 80
        %v3163 = vpop.permute.xlu0 %3162
        %3164 = vrot.lane.b32.xlu0 %v2975, 80
        %v3165 = vpop.permute.xlu0 %3164
        %3166 = vrot.lane.b32.xlu0 %v2976, 80
        %v3167 = vpop.permute.xlu0 %3166
        %3168 = vrot.lane.b32.xlu0 %v2977, 80
        %v3169 = vpop.permute.xlu0 %3168
        %3170 = vrot.lane.b32.xlu0 %v2978, 80
        %v3171 = vpop.permute.xlu0 %3170
        %v3204 = vadd.f32 %v3092, %v3109
        %v3205 = vadd.f32 %v3014, %v3111
        %v3206 = vadd.f32 %v3093, %v3113
        %v3207 = vadd.f32 %v3017, %v3115
        %v3208 = vadd.f32 %v3094, %v3117
        %v3209 = vadd.f32 %v3020, %v3119
        %v3210 = vadd.f32 %v3095, %v3121
        %v3211 = vadd.f32 %v3023, %v3123
        %v3212 = vadd.f32 %v3096, %v3125
        %v3213 = vadd.f32 %v3026, %v3127
        %v3214 = vadd.f32 %v3097, %v3129
        %v3215 = vadd.f32 %v3029, %v3131
        %v3216 = vadd.f32 %v3098, %v3133
        %v3217 = vadd.f32 %v3032, %v3135
        %v3218 = vadd.f32 %v3099, %v3137
        %v3219 = vadd.f32 %v3035, %v3139
        %v3220 = vadd.f32 %v3100, %v3141
        %v3221 = vadd.f32 %v3038, %v3143
        %v3222 = vadd.f32 %v3101, %v3145
        %v3223 = vadd.f32 %v3041, %v3147
        %v3224 = vadd.f32 %v3102, %v3149
        %v3225 = vadd.f32 %v3044, %v3151
        %v3226 = vadd.f32 %v3103, %v3153
        %v3227 = vadd.f32 %v3047, %v3155
        %v3228 = vadd.f32 %v3104, %v3157
        %v3229 = vadd.f32 %v3050, %v3159
        %v3230 = vadd.f32 %v3105, %v3161
        %v3231 = vadd.f32 %v3053, %v3163
        %v3232 = vadd.f32 %v3106, %v3165
        %v3233 = vadd.f32 %v3056, %v3167
        %v3234 = vadd.f32 %v3107, %v3169
        %v3235 = vadd.f32 %v3059, %v3171
        %3268 = vrot.lane.b32.xlu0 %v2533, 96
        %v3269 = vpop.permute.xlu0 %3268
        %3270 = vrot.lane.b32.xlu0 %v2537, 96
        %v3271 = vpop.permute.xlu0 %3270
        %3272 = vrot.lane.b32.xlu0 %v2543, 96
        %v3273 = vpop.permute.xlu0 %3272
        %3274 = vrot.lane.b32.xlu0 %v2547, 96
        %v3275 = vpop.permute.xlu0 %3274
        %3276 = vrot.lane.b32.xlu0 %v2553, 96
        %v3277 = vpop.permute.xlu0 %3276
        %3278 = vrot.lane.b32.xlu0 %v2557, 96
        %v3279 = vpop.permute.xlu0 %3278
        %3280 = vrot.lane.b32.xlu0 %v2563, 96
        %v3281 = vpop.permute.xlu0 %3280
        %3282 = vrot.lane.b32.xlu0 %v2567, 96
        %v3283 = vpop.permute.xlu0 %3282
        %3284 = vrot.lane.b32.xlu0 %v2573, 96
        %v3285 = vpop.permute.xlu0 %3284
        %3286 = vrot.lane.b32.xlu0 %v2577, 96
        %v3287 = vpop.permute.xlu0 %3286
        %3288 = vrot.lane.b32.xlu0 %v2583, 96
        %v3289 = vpop.permute.xlu0 %3288
        %3290 = vrot.lane.b32.xlu0 %v2587, 96
        %v3291 = vpop.permute.xlu0 %3290
        %3292 = vrot.lane.b32.xlu0 %v2593, 96
        %v3293 = vpop.permute.xlu0 %3292
        %3294 = vrot.lane.b32.xlu0 %v2597, 96
        %v3295 = vpop.permute.xlu0 %3294
        %3296 = vrot.lane.b32.xlu0 %v2603, 96
        %v3297 = vpop.permute.xlu0 %3296
        %3298 = vrot.lane.b32.xlu0 %v2607, 96
        %v3299 = vpop.permute.xlu0 %3298
        %3300 = vrot.lane.b32.xlu0 %v2613, 96
        %v3301 = vpop.permute.xlu0 %3300
        %3302 = vrot.lane.b32.xlu0 %v2617, 96
        %v3303 = vpop.permute.xlu0 %3302
        %3304 = vrot.lane.b32.xlu0 %v2623, 96
        %v3305 = vpop.permute.xlu0 %3304
        %3306 = vrot.lane.b32.xlu0 %v2627, 96
        %v3307 = vpop.permute.xlu0 %3306
        %3308 = vrot.lane.b32.xlu0 %v2633, 96
        %v3309 = vpop.permute.xlu0 %3308
        %3310 = vrot.lane.b32.xlu0 %v2637, 96
        %v3311 = vpop.permute.xlu0 %3310
        %3312 = vrot.lane.b32.xlu0 %v2643, 96
        %v3313 = vpop.permute.xlu0 %3312
        %3314 = vrot.lane.b32.xlu0 %v2647, 96
        %v3315 = vpop.permute.xlu0 %3314
        %3316 = vrot.lane.b32.xlu0 %v2653, 96
        %v3317 = vpop.permute.xlu0 %3316
        %3318 = vrot.lane.b32.xlu0 %v2657, 96
        %v3319 = vpop.permute.xlu0 %3318
        %3320 = vrot.lane.b32.xlu0 %v2663, 96
        %v3321 = vpop.permute.xlu0 %3320
        %3322 = vrot.lane.b32.xlu0 %v2667, 96
        %v3323 = vpop.permute.xlu0 %3322
        %3324 = vrot.lane.b32.xlu0 %v2673, 96
        %v3325 = vpop.permute.xlu0 %3324
        %3326 = vrot.lane.b32.xlu0 %v2677, 96
        %v3327 = vpop.permute.xlu0 %3326
        %3328 = vrot.lane.b32.xlu0 %v2683, 96
        %v3329 = vpop.permute.xlu0 %3328
        %3330 = vrot.lane.b32.xlu0 %v2687, 96
        %v3331 = vpop.permute.xlu0 %3330
        %v3364 = vadd.f32 %v2817, %v3269
        %v3365 = vadd.f32 %v2818, %v3271
        %v3366 = vadd.f32 %v2819, %v3273
        %v3367 = vadd.f32 %v2820, %v3275
        %v3368 = vadd.f32 %v2821, %v3277
        %v3369 = vadd.f32 %v2822, %v3279
        %v3370 = vadd.f32 %v2823, %v3281
        %v3371 = vadd.f32 %v2824, %v3283
        %v3372 = vadd.f32 %v2825, %v3285
        %v3373 = vadd.f32 %v2826, %v3287
        %v3374 = vadd.f32 %v2827, %v3289
        %v3375 = vadd.f32 %v2828, %v3291
        %v3376 = vadd.f32 %v2829, %v3293
        %v3377 = vadd.f32 %v2830, %v3295
        %v3378 = vadd.f32 %v2831, %v3297
        %v3379 = vadd.f32 %v2832, %v3299
        %v3380 = vadd.f32 %v2833, %v3301
        %v3381 = vadd.f32 %v2834, %v3303
        %v3382 = vadd.f32 %v2835, %v3305
        %v3383 = vadd.f32 %v2836, %v3307
        %v3384 = vadd.f32 %v2837, %v3309
        %v3385 = vadd.f32 %v2838, %v3311
        %v3386 = vadd.f32 %v2839, %v3313
        %v3387 = vadd.f32 %v2840, %v3315
        %v3388 = vadd.f32 %v2841, %v3317
        %v3389 = vadd.f32 %v2842, %v3319
        %v3390 = vadd.f32 %v2843, %v3321
        %v3391 = vadd.f32 %v2844, %v3323
        %v3392 = vadd.f32 %v2845, %v3325
        %v3393 = vadd.f32 %v2846, %v3327
        %v3394 = vadd.f32 %v2847, %v3329
        %v3395 = vadd.f32 %v2848, %v3331
        %vm3428 = vcmask 1046528
        %v3429 = vrot.slane %v3364, 1
        %v3430 = vrot.slane %v3365, 1
        %v3431 = vsel %vm3428, %v3429, %v3430
        %v3432 = vrot.slane %v3366, 1
        %v3433 = vrot.slane %v3367, 1
        %v3434 = vsel %vm3428, %v3432, %v3433
        %v3435 = vrot.slane %v3368, 1
        %v3436 = vrot.slane %v3369, 1
        %v3437 = vsel %vm3428, %v3435, %v3436
        %v3438 = vrot.slane %v3370, 1
        %v3439 = vrot.slane %v3371, 1
        %v3440 = vsel %vm3428, %v3438, %v3439
        %v3441 = vrot.slane %v3372, 1
        %v3442 = vrot.slane %v3373, 1
        %v3443 = vsel %vm3428, %v3441, %v3442
        %v3444 = vrot.slane %v3374, 1
        %v3445 = vrot.slane %v3375, 1
        %v3446 = vsel %vm3428, %v3444, %v3445
        %v3447 = vrot.slane %v3376, 1
        %v3448 = vrot.slane %v3377, 1
        %v3449 = vsel %vm3428, %v3447, %v3448
        %v3450 = vrot.slane %v3378, 1
        %v3451 = vrot.slane %v3379, 1
        %v3452 = vsel %vm3428, %v3450, %v3451
        %v3453 = vrot.slane %v3380, 1
        %v3454 = vrot.slane %v3381, 1
        %v3455 = vsel %vm3428, %v3453, %v3454
        %v3456 = vrot.slane %v3382, 1
        %v3457 = vrot.slane %v3383, 1
        %v3458 = vsel %vm3428, %v3456, %v3457
        %v3459 = vrot.slane %v3384, 1
        %v3460 = vrot.slane %v3385, 1
        %v3461 = vsel %vm3428, %v3459, %v3460
        %v3462 = vrot.slane %v3386, 1
        %v3463 = vrot.slane %v3387, 1
        %v3464 = vsel %vm3428, %v3462, %v3463
        %v3465 = vrot.slane %v3388, 1
        %v3466 = vrot.slane %v3389, 1
        %v3467 = vsel %vm3428, %v3465, %v3466
        %v3468 = vrot.slane %v3390, 1
        %v3469 = vrot.slane %v3391, 1
        %v3470 = vsel %vm3428, %v3468, %v3469
        %v3471 = vrot.slane %v3392, 1
        %v3472 = vrot.slane %v3393, 1
        %v3473 = vsel %vm3428, %v3471, %v3472
        %v3474 = vrot.slane %v3394, 1
        %v3475 = vrot.slane %v3395, 1
        %v3476 = vsel %vm3428, %v3474, %v3475
        %v3493 = vsel %vm3428, %v3430, 0.0
        %v3494 = vsel %vm3428, %v3433, 0.0
        %v3495 = vsel %vm3428, %v3436, 0.0
        %v3496 = vsel %vm3428, %v3439, 0.0
        %v3497 = vsel %vm3428, %v3442, 0.0
        %v3498 = vsel %vm3428, %v3445, 0.0
        %v3499 = vsel %vm3428, %v3448, 0.0
        %v3500 = vsel %vm3428, %v3451, 0.0
        %v3501 = vsel %vm3428, %v3454, 0.0
        %v3502 = vsel %vm3428, %v3457, 0.0
        %v3503 = vsel %vm3428, %v3460, 0.0
        %v3504 = vsel %vm3428, %v3463, 0.0
        %v3505 = vsel %vm3428, %v3466, 0.0
        %v3506 = vsel %vm3428, %v3469, 0.0
        %v3507 = vsel %vm3428, %v3472, 0.0
        %v3508 = vsel %vm3428, %v3475, 0.0
        %3525 = vrot.lane.b32.xlu0 %v3431, 32
        %v3526 = vpop.permute.xlu0 %3525
        %3527 = vrot.lane.b32.xlu0 %v3493, 32
        %v3528 = vpop.permute.xlu0 %3527
        %3529 = vrot.lane.b32.xlu0 %v3434, 32
        %v3530 = vpop.permute.xlu0 %3529
        %3531 = vrot.lane.b32.xlu0 %v3494, 32
        %v3532 = vpop.permute.xlu0 %3531
        %3533 = vrot.lane.b32.xlu0 %v3437, 32
        %v3534 = vpop.permute.xlu0 %3533
        %3535 = vrot.lane.b32.xlu0 %v3495, 32
        %v3536 = vpop.permute.xlu0 %3535
        %3537 = vrot.lane.b32.xlu0 %v3440, 32
        %v3538 = vpop.permute.xlu0 %3537
        %3539 = vrot.lane.b32.xlu0 %v3496, 32
        %v3540 = vpop.permute.xlu0 %3539
        %3541 = vrot.lane.b32.xlu0 %v3443, 32
        %v3542 = vpop.permute.xlu0 %3541
        %3543 = vrot.lane.b32.xlu0 %v3497, 32
        %v3544 = vpop.permute.xlu0 %3543
        %3545 = vrot.lane.b32.xlu0 %v3446, 32
        %v3546 = vpop.permute.xlu0 %3545
        %3547 = vrot.lane.b32.xlu0 %v3498, 32
        %v3548 = vpop.permute.xlu0 %3547
        %3549 = vrot.lane.b32.xlu0 %v3449, 32
        %v3550 = vpop.permute.xlu0 %3549
        %3551 = vrot.lane.b32.xlu0 %v3499, 32
        %v3552 = vpop.permute.xlu0 %3551
        %3553 = vrot.lane.b32.xlu0 %v3452, 32
        %v3554 = vpop.permute.xlu0 %3553
        %3555 = vrot.lane.b32.xlu0 %v3500, 32
        %v3556 = vpop.permute.xlu0 %3555
        %3557 = vrot.lane.b32.xlu0 %v3455, 32
        %v3558 = vpop.permute.xlu0 %3557
        %3559 = vrot.lane.b32.xlu0 %v3501, 32
        %v3560 = vpop.permute.xlu0 %3559
        %3561 = vrot.lane.b32.xlu0 %v3458, 32
        %v3562 = vpop.permute.xlu0 %3561
        %3563 = vrot.lane.b32.xlu0 %v3502, 32
        %v3564 = vpop.permute.xlu0 %3563
        %3565 = vrot.lane.b32.xlu0 %v3461, 32
        %v3566 = vpop.permute.xlu0 %3565
        %3567 = vrot.lane.b32.xlu0 %v3503, 32
        %v3568 = vpop.permute.xlu0 %3567
        %3569 = vrot.lane.b32.xlu0 %v3464, 32
        %v3570 = vpop.permute.xlu0 %3569
        %3571 = vrot.lane.b32.xlu0 %v3504, 32
        %v3572 = vpop.permute.xlu0 %3571
        %3573 = vrot.lane.b32.xlu0 %v3467, 32
        %v3574 = vpop.permute.xlu0 %3573
        %3575 = vrot.lane.b32.xlu0 %v3505, 32
        %v3576 = vpop.permute.xlu0 %3575
        %3577 = vrot.lane.b32.xlu0 %v3470, 32
        %v3578 = vpop.permute.xlu0 %3577
        %3579 = vrot.lane.b32.xlu0 %v3506, 32
        %v3580 = vpop.permute.xlu0 %3579
        %3581 = vrot.lane.b32.xlu0 %v3473, 32
        %v3582 = vpop.permute.xlu0 %3581
        %3583 = vrot.lane.b32.xlu0 %v3507, 32
        %v3584 = vpop.permute.xlu0 %3583
        %3585 = vrot.lane.b32.xlu0 %v3476, 32
        %v3586 = vpop.permute.xlu0 %3585
        %3587 = vrot.lane.b32.xlu0 %v3508, 32
        %v3588 = vpop.permute.xlu0 %3587
        %v3621 = vadd.f32 %v3204, %v3526
        %v3622 = vadd.f32 %v3205, %v3528
        %v3623 = vadd.f32 %v3206, %v3530
        %v3624 = vadd.f32 %v3207, %v3532
        %v3625 = vadd.f32 %v3208, %v3534
        %v3626 = vadd.f32 %v3209, %v3536
        %v3627 = vadd.f32 %v3210, %v3538
        %v3628 = vadd.f32 %v3211, %v3540
        %v3629 = vadd.f32 %v3212, %v3542
        %v3630 = vadd.f32 %v3213, %v3544
        %v3631 = vadd.f32 %v3214, %v3546
        %v3632 = vadd.f32 %v3215, %v3548
        %v3633 = vadd.f32 %v3216, %v3550
        %v3634 = vadd.f32 %v3217, %v3552
        %v3635 = vadd.f32 %v3218, %v3554
        %v3636 = vadd.f32 %v3219, %v3556
        %v3637 = vadd.f32 %v3220, %v3558
        %v3638 = vadd.f32 %v3221, %v3560
        %v3639 = vadd.f32 %v3222, %v3562
        %v3640 = vadd.f32 %v3223, %v3564
        %v3641 = vadd.f32 %v3224, %v3566
        %v3642 = vadd.f32 %v3225, %v3568
        %v3643 = vadd.f32 %v3226, %v3570
        %v3644 = vadd.f32 %v3227, %v3572
        %v3645 = vadd.f32 %v3228, %v3574
        %v3646 = vadd.f32 %v3229, %v3576
        %v3647 = vadd.f32 %v3230, %v3578
        %v3648 = vadd.f32 %v3231, %v3580
        %v3649 = vadd.f32 %v3232, %v3582
        %v3650 = vadd.f32 %v3233, %v3584
        %v3651 = vadd.f32 %v3234, %v3586
        %v3652 = vadd.f32 %v3235, %v3588
        %v3653 = vpack.c.bf16 %v3622, %v3621
        %v3654 = vpack.c.bf16 %v3624, %v3623
        %v3655 = vpack.c.bf16 %v3626, %v3625
        %v3656 = vpack.c.bf16 %v3628, %v3627
        %v3657 = vpack.c.bf16 %v3630, %v3629
        %v3658 = vpack.c.bf16 %v3632, %v3631
        %v3659 = vpack.c.bf16 %v3634, %v3633
        %v3660 = vpack.c.bf16 %v3636, %v3635
        %v3661 = vpack.c.bf16 %v3638, %v3637
        %v3662 = vpack.c.bf16 %v3640, %v3639
        %v3663 = vpack.c.bf16 %v3642, %v3641
        %v3664 = vpack.c.bf16 %v3644, %v3643
        %v3665 = vpack.c.bf16 %v3646, %v3645
        %v3666 = vpack.c.bf16 %v3648, %v3647
        %v3667 = vpack.c.bf16 %v3650, %v3649
        %v3668 = vpack.c.bf16 %v3652, %v3651
        %v3685 = vunpack.c.l.b16 %v3653
        %v3686 = vunpack.c.h.b16 %v3653
        %v3687 = vunpack.c.l.b16 %v3654
        %v3688 = vunpack.c.h.b16 %v3654
        %v3689 = vunpack.c.l.b16 %v3655
        %v3690 = vunpack.c.h.b16 %v3655
        %v3691 = vunpack.c.l.b16 %v3656
        %v3692 = vunpack.c.h.b16 %v3656
        %v3693 = vunpack.c.l.b16 %v3657
        %v3694 = vunpack.c.h.b16 %v3657
        %v3695 = vunpack.c.l.b16 %v3658
        %v3696 = vunpack.c.h.b16 %v3658
        %v3697 = vunpack.c.l.b16 %v3659
        %v3698 = vunpack.c.h.b16 %v3659
        %v3699 = vunpack.c.l.b16 %v3660
        %v3700 = vunpack.c.h.b16 %v3660
        %v3701 = vunpack.c.l.b16 %v3661
        %v3702 = vunpack.c.h.b16 %v3661
        %v3703 = vunpack.c.l.b16 %v3662
        %v3704 = vunpack.c.h.b16 %v3662
        %v3705 = vunpack.c.l.b16 %v3663
        %v3706 = vunpack.c.h.b16 %v3663
        %v3707 = vunpack.c.l.b16 %v3664
        %v3708 = vunpack.c.h.b16 %v3664
        %v3709 = vunpack.c.l.b16 %v3665
        %v3710 = vunpack.c.h.b16 %v3665
        %v3711 = vunpack.c.l.b16 %v3666
        %v3712 = vunpack.c.h.b16 %v3666
        %v3713 = vunpack.c.l.b16 %v3667
        %v3714 = vunpack.c.h.b16 %v3667
        %v3715 = vunpack.c.l.b16 %v3668
        %v3716 = vunpack.c.h.b16 %v3668
        %v3717 = vpack.c.b16 %v3685, %v3685
        %v3718 = vpack.c.b16 %v3686, %v3686
        %v3719 = vpack.c.b16 %v3687, %v3687
        %v3720 = vpack.c.b16 %v3688, %v3688
        %v3721 = vpack.c.b16 %v3689, %v3689
        %v3722 = vpack.c.b16 %v3690, %v3690
        %v3723 = vpack.c.b16 %v3691, %v3691
        %v3724 = vpack.c.b16 %v3692, %v3692
        %v3725 = vpack.c.b16 %v3693, %v3693
        %v3726 = vpack.c.b16 %v3694, %v3694
        %v3727 = vpack.c.b16 %v3695, %v3695
        %v3728 = vpack.c.b16 %v3696, %v3696
        %v3729 = vpack.c.b16 %v3697, %v3697
        %v3730 = vpack.c.b16 %v3698, %v3698
        %v3731 = vpack.c.b16 %v3699, %v3699
        %v3732 = vpack.c.b16 %v3700, %v3700
        %v3733 = vpack.c.b16 %v3701, %v3701
        %v3734 = vpack.c.b16 %v3702, %v3702
        %v3735 = vpack.c.b16 %v3703, %v3703
        %v3736 = vpack.c.b16 %v3704, %v3704
        %v3737 = vpack.c.b16 %v3705, %v3705
        %v3738 = vpack.c.b16 %v3706, %v3706
        %v3739 = vpack.c.b16 %v3707, %v3707
        %v3740 = vpack.c.b16 %v3708, %v3708
        %v3741 = vpack.c.b16 %v3709, %v3709
        %v3742 = vpack.c.b16 %v3710, %v3710
        %v3743 = vpack.c.b16 %v3711, %v3711
        %v3744 = vpack.c.b16 %v3712, %v3712
        %v3745 = vpack.c.b16 %v3713, %v3713
        %v3746 = vpack.c.b16 %v3714, %v3714
        %v3747 = vpack.c.b16 %v3715, %v3715
        %v3748 = vpack.c.b16 %v3716, %v3716
        %vm3781 = vcmask 125952
        %3782 = vst.msk [vmem:[%s819] sm:$0xf] %vm3781, %v3717
        %3783 = vst.msk [vmem:[%s819 + $0x4] sm:$0xf] %vm3781, %v3718
        %3784 = vst.msk [vmem:[%s819 + $0x8] sm:$0xf] %vm3781, %v3719
        %3785 = vst.msk [vmem:[%s819 + $0xc] sm:$0xf] %vm3781, %v3720
        %3786 = vst.msk [vmem:[%s819 + $0x10] sm:$0xf] %vm3781, %v3721
        %3787 = vst.msk [vmem:[%s819 + $0x14] sm:$0xf] %vm3781, %v3722
        %3788 = vst.msk [vmem:[%s819 + $0x18] sm:$0xf] %vm3781, %v3723
        %3789 = vst.msk [vmem:[%s819 + $0x1c] sm:$0xf] %vm3781, %v3724
        %3790 = vst.msk [vmem:[%s819 + $0x20] sm:$0xf] %vm3781, %v3725
        %3791 = vst.msk [vmem:[%s819 + $0x24] sm:$0xf] %vm3781, %v3726
        %3792 = vst.msk [vmem:[%s819 + $0x28] sm:$0xf] %vm3781, %v3727
        %3793 = vst.msk [vmem:[%s819 + $0x2c] sm:$0xf] %vm3781, %v3728
        %3794 = vst.msk [vmem:[%s819 + $0x30] sm:$0xf] %vm3781, %v3729
        %3795 = vst.msk [vmem:[%s819 + $0x34] sm:$0xf] %vm3781, %v3730
        %3796 = vst.msk [vmem:[%s819 + $0x38] sm:$0xf] %vm3781, %v3731
        %3797 = vst.msk [vmem:[%s819 + $0x3c] sm:$0xf] %vm3781, %v3732
        %3798 = vst.msk [vmem:[%s819 + $0x40] sm:$0xf] %vm3781, %v3733
        %3799 = vst.msk [vmem:[%s819 + $0x44] sm:$0xf] %vm3781, %v3734
        %3800 = vst.msk [vmem:[%s819 + $0x48] sm:$0xf] %vm3781, %v3735
        %3801 = vst.msk [vmem:[%s819 + $0x4c] sm:$0xf] %vm3781, %v3736
        %3802 = vst.msk [vmem:[%s819 + $0x50] sm:$0xf] %vm3781, %v3737
        %3803 = vst.msk [vmem:[%s819 + $0x54] sm:$0xf] %vm3781, %v3738
        %3804 = vst.msk [vmem:[%s819 + $0x58] sm:$0xf] %vm3781, %v3739
        %3805 = vst.msk [vmem:[%s819 + $0x5c] sm:$0xf] %vm3781, %v3740
        %3806 = vst.msk [vmem:[%s819 + $0x60] sm:$0xf] %vm3781, %v3741
        %3807 = vst.msk [vmem:[%s819 + $0x64] sm:$0xf] %vm3781, %v3742
        %3808 = vst.msk [vmem:[%s819 + $0x68] sm:$0xf] %vm3781, %v3743
        %3809 = vst.msk [vmem:[%s819 + $0x6c] sm:$0xf] %vm3781, %v3744
        %3810 = vst.msk [vmem:[%s819 + $0x70] sm:$0xf] %vm3781, %v3745
        %3811 = vst.msk [vmem:[%s819 + $0x74] sm:$0xf] %vm3781, %v3746
        %3812 = vst.msk [vmem:[%s819 + $0x78] sm:$0xf] %vm3781, %v3747
        %3813 = vst.msk [vmem:[%s819 + $0x7c] sm:$0xf] %vm3781, %v3748
        %s3814 = sand.u32 %s432, 1
        %s3815 = scalar_lea.sflag [#allocation5], %s3814
        %s3816 = sand.u32 %s432, 1
        %s3817 = smul.addr %s3816, 128
        %s3818 = scalar_lea.vmem [#allocation20], %s3817
        // Predicated region
        $region117: #{tpu_custom_call.1} parent=75 // pred_check
          %p3819 = pneg %p442
        $region118: #{tpu_custom_call.1} parent=75 // pred_check_branch
          %3821 = sbr.rel (%p3819) target = $region120
        $region119: #{tpu_custom_call.1} parent=75 // pred_region
          %s3822 = smul.u32 16, %s47
          %s3824 = ssub.s32 2048, 2048
          %3825 = vsyncadd %s3815, %s3824
          %s3826 = smul.addr %s3822, 2
          %s3827 = smul.addr %s46, 32
          %s3828 = sadd.s32 %s3826, %s3827
          %s3829 = smul.addr %s3828, 64
          %s3830 = scalar_lea.hbm %s14, %s3829
          %s3831 = sshll.u32 %s3818, 4
          %s3832 = int_to_ptr.vmem [resolvable:$true] %s3831
          %3837 = dma.vmem_to_hbm [thread:$0]  %s3832, 2048, %s3830, %s3815, 64, 64, 4
        $region120: #{tpu_custom_call.1} parent=75 // pred_fallthru
          _
      $region76: #{tpu_custom_call.1} parent=5 // pred_fallthru
        _
      %p3838 = scmp.le.s32.totalorder 2, %s37
      // Predicated region
      $region121: #{tpu_custom_call.1} parent=5 // pred_check
        %p3839 = pneg %p3838
      $region122: #{tpu_custom_call.1} parent=5 // pred_check_branch
        %3841 = sbr.rel (%p3839) target = $region124
      $region123: #{tpu_custom_call.1} parent=5 // pred_region
        %s3842 = ssub.s32 %s37, 2
        // Predicated region
        $region125: #{tpu_custom_call.1} parent=123 // pred_check
          %p3843 = pneg %p448
        $region126: #{tpu_custom_call.1} parent=123 // pred_check_branch
          %3845 = sbr.rel (%p3843) target = $region128
        $region127: #{tpu_custom_call.1} parent=123 // pred_region
          %s3846 = sand.u32 %s433, 1
          %s3847 = scalar_lea.sflag [#allocation5], %s3846
          %s3848 = sand.u32 %s433, 1
          %s3849 = smul.addr %s3848, 128
          %s3850 = scalar_lea.vmem [#allocation20], %s3849
          %3851 = dma.done %s3847, 2048
        $region128: #{tpu_custom_call.1} parent=123 // pred_fallthru
          _
      $region124: #{tpu_custom_call.1} parent=5 // pred_fallthru
        _
    $region6: #{tpu_custom_call.1} parent=1 // loop_footer
      %s41 = sadd.s32 1, %s37
    $region7: #{tpu_custom_call.1} parent=1 // loop_footer_branch
      %36 = sbr.rel target = $region3
    $region8: #{tpu_custom_call.1} parent=1 // loop_exit
      _
    %3852 = vsyncpa [#allocation4], 1
    %s3853 = scalar_lea.sflag [#allocation4], 1
    %3854 = vsyncpa %s3853, 1
    %3855 = vsyncpa [#allocation7], 1
    %s3856 = scalar_lea.sflag [#allocation7], 1
    %3857 = vsyncpa %s3856, 1
    %3858 = vsyncpa [#allocation10], 1
    %3859 = vsyncpa [#allocation13], 1
    %s3860 = scalar_lea.sflag [#allocation13], 1
    %3861 = vsyncpa %s3860, 1
    %3862 = vsyncpa [#allocation16], 1
    %s3863 = scalar_lea.sflag [#allocation16], 1
    %3864 = vsyncpa %s3863, 1
    %3865 = vsyncpa [#allocation19], 1
    %3866 = vsyncpa [#allocation5], 1
    %s3867 = scalar_lea.sflag [#allocation5], 1
    %3868 = vsyncpa %s3867, 1

</llo_original>
